<compile_context>
chip_gen: v6e
topology: v6e:2x2x1
jax: 0.10.0
libtpu: 0.0.40
codegen_flags: <defaults>
</compile_context>

<pallas_src>
import functools

import jax
import jax.numpy as jnp
from jax.experimental import pallas as pl
from jax.experimental.pallas import tpu as pltpu


def _aisa_kernel(x_ref, wqkv_ref, w1_ref, w2_ref, wout_ref, bout_ref, o_ref,
                 *, num_heads: int, seqs: int, seq_len: int):
    """One grid step: `seqs` whole sequences of length `seq_len`.

    x_ref    : (seqs*seq_len, E)  bf16
    wqkv_ref : (E, 3E)            bf16   to_qkv.weight.T
    w1_ref   : (H,)               f32    SMEM per-head mixing scalars
    w2_ref   : (H,)               f32    SMEM per-head mixing scalars
    wout_ref : (E, E)             bf16   fc_out[0].weight.T
    bout_ref : (1, E)             f32    fc_out[0].bias
    o_ref    : (seqs*seq_len, E)  f32
    """
    E = x_ref.shape[-1]
    H = num_heads
    D = E // H
    rows = seqs * seq_len
    scale = float(D) ** -0.5

    # Single fused QKV projection for the whole row block (one fat MXU launch).
    qkv = jnp.dot(x_ref[...], wqkv_ref[...],
                  preferred_element_type=jnp.float32)          # (rows, 3E) f32
    qkv = qkv.reshape(seqs, seq_len, 3 * E)                    # leading-dim split only

    q = qkv[:, :, :E] * scale                                  # fold 1/sqrt(D) into Q once
    k = qkv[:, :, E:2 * E]
    v = qkv[:, :, 2 * E:]

    # Fused output-projection accumulator (f32); bias added once at the end.
    y = jnp.zeros((rows, E), dtype=jnp.float32)

    # Per-head attention; H is small and static (unrolled).  Batched over the `seqs`
    # axis via the leading batch dim of the einsums; no K transpose is materialized.
    for h in range(H):
        sl = slice(h * D, (h + 1) * D)
        qh = q[:, :, sl].astype(jnp.bfloat16)                  # (seqs, S, D)
        kh = k[:, :, sl].astype(jnp.bfloat16)
        vh = v[:, :, sl].astype(jnp.bfloat16)

        s = jnp.einsum('bqd,bkd->bqk', qh, kh,
                       preferred_element_type=jnp.float32)     # (seqs, S, S) f32

        # softmax over keys (exact normalization), f32 elementwise math.
        m = jnp.max(s, axis=-1, keepdims=True)
        e = jnp.exp(s - m)
        imp = e / jnp.sum(e, axis=-1, keepdims=True)

        # leaky_relu (PyTorch default negative_slope = 0.01) on the scaled scores.
        red = jnp.where(s >= 0.0, s, 0.01 * s)

        attn = (w1_ref[h] * imp + w2_ref[h] * red).astype(jnp.bfloat16)

        ho = jnp.einsum('bqk,bkd->bqd', attn, vh,
                        preferred_element_type=jnp.float32)    # (seqs, S, D) f32

        # Fused output projection: accumulate this head's slice of fc_out directly,
        # replacing the concat / scratch store / readback of the previous revision.
        y = y + jnp.dot(ho.reshape(rows, D).astype(jnp.bfloat16),
                        wout_ref[sl, :],
                        preferred_element_type=jnp.float32)

    o_ref[...] = (y + bout_ref[...]).astype(o_ref.dtype)


def _pick_seqs_per_block(N, S, E):
    """Whole sequences per grid step; ~512-row blocks, VMEM-capped, (8,128)-legal."""
    target_rows = 512
    # Keep (x bf16 + out f32), both double-buffered, under ~16 MiB per step.
    vmem_row_cap = max(S, (16 << 20) // max(1, E * (2 + 4) * 2))
    rows_per_block = min(max(target_rows, S), vmem_row_cap)
    spb = max(1, min(N, rows_per_block // S))
    while spb > 1 and N % spb != 0:          # grid must cover all sequences exactly
        spb -= 1
    if spb < N and (spb * S) % 8 != 0:       # sublane rule: multiple of 8 or full extent
        spb = N
    return spb


def aisa_forward(x, wqkv, w1, w2, wout, bout, *, num_heads, seqs_per_block=None):
    """AISA forward.  x: (N, S, E); wqkv = to_qkv.weight.T; wout = fc_out[0].weight.T."""
    N, S, E = x.shape
    assert E % num_heads == 0, "embed_size must be divisible by num_heads"
    assert wqkv.shape == (E, 3 * E) and wout.shape == (E, E)

    if seqs_per_block is None:
        seqs_per_block = _pick_seqs_per_block(N, S, E)
    assert N % seqs_per_block == 0, "seqs_per_block must divide the batch exactly"
    assert seqs_per_block == N or (seqs_per_block * S) % 8 == 0, \
        "rows per block must be a multiple of 8 (or cover the full batch)"
    num_blocks = N // seqs_per_block
    rows_per_block = seqs_per_block * S

    # bf16 matmul operands (f32 accumulation happens inside the kernel).
    x2 = x.reshape(N * S, E).astype(jnp.bfloat16)
    wqkv_b = wqkv.astype(jnp.bfloat16)
    wout_b = wout.astype(jnp.bfloat16)
    bout2 = bout.reshape(1, E).astype(jnp.float32)
    w1f = w1.reshape(num_heads).astype(jnp.float32)
    w2f = w2.reshape(num_heads).astype(jnp.float32)

    kernel = functools.partial(_aisa_kernel, num_heads=num_heads,
                               seqs=seqs_per_block, seq_len=S)

    def run(single_buffer_weights):
        if single_buffer_weights:
            def resident(shape):
                # Constant block index -> fetched once and VMEM-resident across steps;
                # single buffer avoids wasting VMEM on an unused second buffer.
                return pl.BlockSpec(shape, lambda i: (0, 0),
                                    pipeline_mode=pl.Buffered(1))
        else:
            def resident(shape):
                return pl.BlockSpec(shape, lambda i: (0, 0))

        return pl.pallas_call(
            kernel,
            out_shape=jax.ShapeDtypeStruct((N * S, E), jnp.float32),
            grid=(num_blocks,),
            in_specs=[
                pl.BlockSpec((rows_per_block, E), lambda i: (i, 0)),   # x rows per step
                resident((E, 3 * E)),                                  # to_qkv weight
                pl.BlockSpec(memory_space=pltpu.MemorySpace.SMEM),     # W1 scalars
                pl.BlockSpec(memory_space=pltpu.MemorySpace.SMEM),     # W2 scalars
                resident((E, E)),                                      # fc_out weight
                resident((1, E)),                                      # fc_out bias
            ],
            out_specs=pl.BlockSpec((rows_per_block, E), lambda i: (i, 0)),
            compiler_params=pltpu.CompilerParams(
                dimension_semantics=("parallel",),
                vmem_limit_bytes=48 * 1024 * 1024),
        )(x2, wqkv_b, w1f, w2f, wout_b, bout2)

    try:
        y = run(single_buffer_weights=True)
    except Exception:
        # pipeline_mode=pl.Buffered(1) unsupported on this jax build -> default buffering.
        y = run(single_buffer_weights=False)

    return y.reshape(N, S, E)


def aisa_reference(x, wqkv, w1, w2, wout, bout, *, num_heads):
    """Pure-JAX f32 reference mirroring the PyTorch forward."""
    N, S, E = x.shape
    H = num_heads
    D = E // H
    qkv = x @ wqkv
    q, k, v = jnp.split(qkv, 3, axis=-1)

    def to_heads(t):   # 'b n (h d) -> b h n d'
        return t.reshape(N, S, H, D).transpose(0, 2, 1, 3)

    q, k, v = to_heads(q), to_heads(k), to_heads(v)
    scores = jnp.einsum("bhqd,bhkd->bhqk", q, k) * (float(D) ** -0.5)
    imp = jax.nn.softmax(scores, axis=-1)
    red = jnp.where(scores >= 0, scores, 0.01 * scores)
    attn = w1.reshape(1, H, 1, 1) * imp + w2.reshape(1, H, 1, 1) * red
    out = jnp.einsum("bhqk,bhkd->bhqd", attn, v)
    out = out.transpose(0, 2, 1, 3).reshape(N, S, E)
    return out @ wout + bout.reshape(1, 1, E)


if __name__ == "__main__":
    # Small shapes consistent with the module: batch=2, seq=8, embed=32, heads=8.
    N, S, E, H = 2, 8, 32, 8

    key = jax.random.PRNGKey(0)
    kx, kqkv, kw1, kw2, kwo, kbo = jax.random.split(key, 6)

    x = jax.random.normal(kx, (N, S, E), dtype=jnp.float32)
    # Deterministic synthetic parameters (shapes from __init__).
    wqkv = jax.random.normal(kqkv, (E, 3 * E), dtype=jnp.float32) * 0.1   # to_qkv.weight.T
    w1 = jax.random.normal(kw1, (H,), dtype=jnp.float32)                   # W1 (h,1,1) -> (h,)
    w2 = jax.random.normal(kw2, (H,), dtype=jnp.float32)                   # W2 (h,1,1) -> (h,)
    wout = jax.random.normal(kwo, (E, E), dtype=jnp.float32) * 0.1         # fc_out[0].weight.T
    bout = jax.random.normal(kbo, (1, E), dtype=jnp.float32) * 0.1         # fc_out[0].bias

    y = aisa_forward(x, wqkv, w1, w2, wout, bout, num_heads=H)
    y = jax.block_until_ready(y)

    y_ref = aisa_reference(x, wqkv, w1, w2, wout, bout, num_heads=H)
    assert y.shape == (N, S, E)
    # Tolerance covers bf16 matmul operands (f32 accumulation; exact softmax recip).
    max_err = float(jnp.max(jnp.abs(y - y_ref)))
    assert jnp.allclose(y, y_ref, rtol=3e-2, atol=3e-2), f"mismatch vs reference (max abs err {max_err})"

    print("KERNEL_OK")
</pallas_src>

<mosaic_0001>
module attributes {stable_mosaic.version = 11 : i64} {
  func.func @_aisa_kernel(%arg0: i32, %arg1: memref<16x32xbf16, #tpu.memory_space<vmem>>, %arg2: memref<32x96xbf16, #tpu.memory_space<vmem>>, %arg3: memref<8xf32, #tpu.memory_space<smem>>, %arg4: memref<8xf32, #tpu.memory_space<smem>>, %arg5: memref<32x32xbf16, #tpu.memory_space<vmem>>, %arg6: memref<1x32xf32, #tpu.memory_space<vmem>>, %arg7: memref<16x32xf32, #tpu.memory_space<vmem>>) attributes {dimension_semantics = [#tpu.dimension_semantics<parallel>], iteration_bounds = array<i64: 1>, scalar_prefetch = 0 : i64, scratch_operands = 0 : i64, tpu.core_type = #tpu.core_type<tc>, window_params = [{transform_indices = @transform_0, window_bounds = array<i64: 16, 32>}, {pipeline_mode = #tpu.pipeline_mode<synchronous>, transform_indices = @transform_1, window_bounds = array<i64: 32, 96>}, {transform_indices = @transform_2, window_bounds = array<i64: 8>}, {transform_indices = @transform_3, window_bounds = array<i64: 8>}, {pipeline_mode = #tpu.pipeline_mode<synchronous>, transform_indices = @transform_4, window_bounds = array<i64: 32, 32>}, {pipeline_mode = #tpu.pipeline_mode<synchronous>, transform_indices = @transform_5, window_bounds = array<i64: 1, 32>}, {transform_indices = @transform_6, window_bounds = array<i64: 16, 32>}]} {
    %c0 = arith.constant 0 : index
    %c0_0 = arith.constant 0 : index
    %0 = vector.load %arg1[%c0, %c0_0] : memref<16x32xbf16, #tpu.memory_space<vmem>>, vector<16x32xbf16>
    %c0_1 = arith.constant 0 : index
    %c0_2 = arith.constant 0 : index
    %1 = vector.load %arg2[%c0_1, %c0_2] : memref<32x96xbf16, #tpu.memory_space<vmem>>, vector<32x96xbf16>
    %cst = arith.constant dense<0.000000e+00> : vector<16x96xf32>
    %2 = tpu.matmul %0, %1, %cst {dimension_numbers = #tpu.dot_dimension_numbers<[1], [0], [0], [1], [0, 0, 1, 1], [], []>} : vector<16x32xbf16>, vector<32x96xbf16>, vector<16x96xf32> -> vector<16x96xf32>
    %3 = vector.shape_cast %2 : vector<16x96xf32> to vector<2x8x96xf32>
    %4 = vector.extract_strided_slice %3 {offsets = [0, 0, 0], sizes = [2, 8, 32], strides = [1, 1, 1]} : vector<2x8x96xf32> to vector<2x8x32xf32>
    %cst_3 = arith.constant 5.000000e-01 : f32
    %5 = vector.broadcast %cst_3 : f32 to vector<2x8x32xf32>
    %6 = arith.mulf %4, %5 : vector<2x8x32xf32>
    %7 = vector.extract_strided_slice %3 {offsets = [0, 0, 32], sizes = [2, 8, 32], strides = [1, 1, 1]} : vector<2x8x96xf32> to vector<2x8x32xf32>
    %8 = vector.extract_strided_slice %3 {offsets = [0, 0, 64], sizes = [2, 8, 32], strides = [1, 1, 1]} : vector<2x8x96xf32> to vector<2x8x32xf32>
    %cst_4 = arith.constant 0.000000e+00 : f32
    %9 = vector.broadcast %cst_4 : f32 to vector<16x32xf32>
    %10 = vector.extract_strided_slice %6 {offsets = [0, 0, 0], sizes = [2, 8, 4], strides = [1, 1, 1]} : vector<2x8x32xf32> to vector<2x8x4xf32>
    %11 = arith.truncf %10 : vector<2x8x4xf32> to vector<2x8x4xbf16>
    %12 = vector.extract_strided_slice %7 {offsets = [0, 0, 0], sizes = [2, 8, 4], strides = [1, 1, 1]} : vector<2x8x32xf32> to vector<2x8x4xf32>
    %13 = arith.truncf %12 : vector<2x8x4xf32> to vector<2x8x4xbf16>
    %14 = vector.extract_strided_slice %8 {offsets = [0, 0, 0], sizes = [2, 8, 4], strides = [1, 1, 1]} : vector<2x8x32xf32> to vector<2x8x4xf32>
    %15 = arith.truncf %14 : vector<2x8x4xf32> to vector<2x8x4xbf16>
    "tpu.trace_start"() <{level = 10 : i32, message = "bqd,bkd->bqk"}> : () -> ()
    %cst_5 = arith.constant dense<0.000000e+00> : vector<2x8x8xf32>
    %16 = tpu.matmul %11, %13, %cst_5 {dimension_numbers = #tpu.dot_dimension_numbers<[2], [2], [1], [1], [0, 0, 0, 1, 1, 1], [0], [0]>} : vector<2x8x4xbf16>, vector<2x8x4xbf16>, vector<2x8x8xf32> -> vector<2x8x8xf32>
    "tpu.trace_stop"() : () -> ()
    %cst_6 = arith.constant dense<0xFF800000> : vector<2x8xf32>
    %17 = vector.multi_reduction <maximumf>, %16, %cst_6 [2] : vector<2x8x8xf32> to vector<2x8xf32>
    %18 = vector.shape_cast %17 : vector<2x8xf32> to vector<2x8x1xf32>
    %19 = vector.broadcast %18 : vector<2x8x1xf32> to vector<2x8x8xf32>
    %20 = arith.subf %16, %19 : vector<2x8x8xf32>
    %21 = math.exp %20 : vector<2x8x8xf32>
    %cst_7 = arith.constant dense<0.000000e+00> : vector<2x8xf32>
    %22 = vector.multi_reduction <add>, %21, %cst_7 [2] : vector<2x8x8xf32> to vector<2x8xf32>
    %23 = vector.shape_cast %22 : vector<2x8xf32> to vector<2x8x1xf32>
    %24 = vector.broadcast %23 : vector<2x8x1xf32> to vector<2x8x8xf32>
    %25 = arith.divf %21, %24 : vector<2x8x8xf32>
    %cst_8 = arith.constant 0.000000e+00 : f32
    %26 = vector.broadcast %cst_8 : f32 to vector<2x8x8xf32>
    %27 = arith.cmpf oge, %16, %26 : vector<2x8x8xf32>
    %cst_9 = arith.constant 0.00999999977 : f32
    %28 = vector.broadcast %cst_9 : f32 to vector<2x8x8xf32>
    %29 = arith.mulf %28, %16 : vector<2x8x8xf32>
    %30 = arith.select %27, %16, %29 : vector<2x8x8xi1>, vector<2x8x8xf32>
    %c0_10 = arith.constant 0 : index
    %31 = memref.load %arg3[%c0_10] : memref<8xf32, #tpu.memory_space<smem>>
    %32 = vector.broadcast %31 : f32 to vector<2x8x8xf32>
    %33 = arith.mulf %32, %25 : vector<2x8x8xf32>
    %c0_11 = arith.constant 0 : index
    %34 = memref.load %arg4[%c0_11] : memref<8xf32, #tpu.memory_space<smem>>
    %35 = vector.broadcast %34 : f32 to vector<2x8x8xf32>
    %36 = arith.mulf %35, %30 : vector<2x8x8xf32>
    %37 = arith.addf %33, %36 : vector<2x8x8xf32>
    %38 = arith.truncf %37 : vector<2x8x8xf32> to vector<2x8x8xbf16>
    "tpu.trace_start"() <{level = 10 : i32, message = "bqk,bkd->bqd"}> : () -> ()
    %cst_12 = arith.constant dense<0.000000e+00> : vector<2x8x4xf32>
    %39 = tpu.matmul %38, %15, %cst_12 {dimension_numbers = #tpu.dot_dimension_numbers<[2], [1], [1], [2], [0, 0, 0, 1, 1, 2], [0], [0]>} : vector<2x8x8xbf16>, vector<2x8x4xbf16>, vector<2x8x4xf32> -> vector<2x8x4xf32>
    "tpu.trace_stop"() : () -> ()
    %40 = vector.shape_cast %39 : vector<2x8x4xf32> to vector<16x4xf32>
    %41 = arith.truncf %40 : vector<16x4xf32> to vector<16x4xbf16>
    %c0_13 = arith.constant 0 : index
    %c0_14 = arith.constant 0 : index
    %42 = vector.load %arg5[%c0_13, %c0_14] : memref<32x32xbf16, #tpu.memory_space<vmem>>, vector<4x32xbf16>
    %cst_15 = arith.constant dense<0.000000e+00> : vector<16x32xf32>
    %43 = tpu.matmul %41, %42, %cst_15 {dimension_numbers = #tpu.dot_dimension_numbers<[1], [0], [0], [1], [0, 0, 1, 1], [], []>} : vector<16x4xbf16>, vector<4x32xbf16>, vector<16x32xf32> -> vector<16x32xf32>
    %44 = arith.addf %9, %43 : vector<16x32xf32>
    %45 = vector.extract_strided_slice %6 {offsets = [0, 0, 4], sizes = [2, 8, 4], strides = [1, 1, 1]} : vector<2x8x32xf32> to vector<2x8x4xf32>
    %46 = arith.truncf %45 : vector<2x8x4xf32> to vector<2x8x4xbf16>
    %47 = vector.extract_strided_slice %7 {offsets = [0, 0, 4], sizes = [2, 8, 4], strides = [1, 1, 1]} : vector<2x8x32xf32> to vector<2x8x4xf32>
    %48 = arith.truncf %47 : vector<2x8x4xf32> to vector<2x8x4xbf16>
    %49 = vector.extract_strided_slice %8 {offsets = [0, 0, 4], sizes = [2, 8, 4], strides = [1, 1, 1]} : vector<2x8x32xf32> to vector<2x8x4xf32>
    %50 = arith.truncf %49 : vector<2x8x4xf32> to vector<2x8x4xbf16>
    "tpu.trace_start"() <{level = 10 : i32, message = "bqd,bkd->bqk"}> : () -> ()
    %cst_16 = arith.constant dense<0.000000e+00> : vector<2x8x8xf32>
    %51 = tpu.matmul %46, %48, %cst_16 {dimension_numbers = #tpu.dot_dimension_numbers<[2], [2], [1], [1], [0, 0, 0, 1, 1, 1], [0], [0]>} : vector<2x8x4xbf16>, vector<2x8x4xbf16>, vector<2x8x8xf32> -> vector<2x8x8xf32>
    "tpu.trace_stop"() : () -> ()
    %cst_17 = arith.constant dense<0xFF800000> : vector<2x8xf32>
    %52 = vector.multi_reduction <maximumf>, %51, %cst_17 [2] : vector<2x8x8xf32> to vector<2x8xf32>
    %53 = vector.shape_cast %52 : vector<2x8xf32> to vector<2x8x1xf32>
    %54 = vector.broadcast %53 : vector<2x8x1xf32> to vector<2x8x8xf32>
    %55 = arith.subf %51, %54 : vector<2x8x8xf32>
    %56 = math.exp %55 : vector<2x8x8xf32>
    %cst_18 = arith.constant dense<0.000000e+00> : vector<2x8xf32>
    %57 = vector.multi_reduction <add>, %56, %cst_18 [2] : vector<2x8x8xf32> to vector<2x8xf32>
    %58 = vector.shape_cast %57 : vector<2x8xf32> to vector<2x8x1xf32>
    %59 = vector.broadcast %58 : vector<2x8x1xf32> to vector<2x8x8xf32>
    %60 = arith.divf %56, %59 : vector<2x8x8xf32>
    %cst_19 = arith.constant 0.000000e+00 : f32
    %61 = vector.broadcast %cst_19 : f32 to vector<2x8x8xf32>
    %62 = arith.cmpf oge, %51, %61 : vector<2x8x8xf32>
    %cst_20 = arith.constant 0.00999999977 : f32
    %63 = vector.broadcast %cst_20 : f32 to vector<2x8x8xf32>
    %64 = arith.mulf %63, %51 : vector<2x8x8xf32>
    %65 = arith.select %62, %51, %64 : vector<2x8x8xi1>, vector<2x8x8xf32>
    %c1 = arith.constant 1 : index
    %66 = memref.load %arg3[%c1] : memref<8xf32, #tpu.memory_space<smem>>
    %67 = vector.broadcast %66 : f32 to vector<2x8x8xf32>
    %68 = arith.mulf %67, %60 : vector<2x8x8xf32>
    %c1_21 = arith.constant 1 : index
    %69 = memref.load %arg4[%c1_21] : memref<8xf32, #tpu.memory_space<smem>>
    %70 = vector.broadcast %69 : f32 to vector<2x8x8xf32>
    %71 = arith.mulf %70, %65 : vector<2x8x8xf32>
    %72 = arith.addf %68, %71 : vector<2x8x8xf32>
    %73 = arith.truncf %72 : vector<2x8x8xf32> to vector<2x8x8xbf16>
    "tpu.trace_start"() <{level = 10 : i32, message = "bqk,bkd->bqd"}> : () -> ()
    %cst_22 = arith.constant dense<0.000000e+00> : vector<2x8x4xf32>
    %74 = tpu.matmul %73, %50, %cst_22 {dimension_numbers = #tpu.dot_dimension_numbers<[2], [1], [1], [2], [0, 0, 0, 1, 1, 2], [0], [0]>} : vector<2x8x8xbf16>, vector<2x8x4xbf16>, vector<2x8x4xf32> -> vector<2x8x4xf32>
    "tpu.trace_stop"() : () -> ()
    %75 = vector.shape_cast %74 : vector<2x8x4xf32> to vector<16x4xf32>
    %76 = arith.truncf %75 : vector<16x4xf32> to vector<16x4xbf16>
    %c4 = arith.constant 4 : index
    %c0_23 = arith.constant 0 : index
    %77 = vector.load %arg5[%c4, %c0_23] : memref<32x32xbf16, #tpu.memory_space<vmem>>, vector<4x32xbf16>
    %cst_24 = arith.constant dense<0.000000e+00> : vector<16x32xf32>
    %78 = tpu.matmul %76, %77, %cst_24 {dimension_numbers = #tpu.dot_dimension_numbers<[1], [0], [0], [1], [0, 0, 1, 1], [], []>} : vector<16x4xbf16>, vector<4x32xbf16>, vector<16x32xf32> -> vector<16x32xf32>
    %79 = arith.addf %44, %78 : vector<16x32xf32>
    %80 = vector.extract_strided_slice %6 {offsets = [0, 0, 8], sizes = [2, 8, 4], strides = [1, 1, 1]} : vector<2x8x32xf32> to vector<2x8x4xf32>
    %81 = arith.truncf %80 : vector<2x8x4xf32> to vector<2x8x4xbf16>
    %82 = vector.extract_strided_slice %7 {offsets = [0, 0, 8], sizes = [2, 8, 4], strides = [1, 1, 1]} : vector<2x8x32xf32> to vector<2x8x4xf32>
    %83 = arith.truncf %82 : vector<2x8x4xf32> to vector<2x8x4xbf16>
    %84 = vector.extract_strided_slice %8 {offsets = [0, 0, 8], sizes = [2, 8, 4], strides = [1, 1, 1]} : vector<2x8x32xf32> to vector<2x8x4xf32>
    %85 = arith.truncf %84 : vector<2x8x4xf32> to vector<2x8x4xbf16>
    "tpu.trace_start"() <{level = 10 : i32, message = "bqd,bkd->bqk"}> : () -> ()
    %cst_25 = arith.constant dense<0.000000e+00> : vector<2x8x8xf32>
    %86 = tpu.matmul %81, %83, %cst_25 {dimension_numbers = #tpu.dot_dimension_numbers<[2], [2], [1], [1], [0, 0, 0, 1, 1, 1], [0], [0]>} : vector<2x8x4xbf16>, vector<2x8x4xbf16>, vector<2x8x8xf32> -> vector<2x8x8xf32>
    "tpu.trace_stop"() : () -> ()
    %cst_26 = arith.constant dense<0xFF800000> : vector<2x8xf32>
    %87 = vector.multi_reduction <maximumf>, %86, %cst_26 [2] : vector<2x8x8xf32> to vector<2x8xf32>
    %88 = vector.shape_cast %87 : vector<2x8xf32> to vector<2x8x1xf32>
    %89 = vector.broadcast %88 : vector<2x8x1xf32> to vector<2x8x8xf32>
    %90 = arith.subf %86, %89 : vector<2x8x8xf32>
    %91 = math.exp %90 : vector<2x8x8xf32>
    %cst_27 = arith.constant dense<0.000000e+00> : vector<2x8xf32>
    %92 = vector.multi_reduction <add>, %91, %cst_27 [2] : vector<2x8x8xf32> to vector<2x8xf32>
    %93 = vector.shape_cast %92 : vector<2x8xf32> to vector<2x8x1xf32>
    %94 = vector.broadcast %93 : vector<2x8x1xf32> to vector<2x8x8xf32>
    %95 = arith.divf %91, %94 : vector<2x8x8xf32>
    %cst_28 = arith.constant 0.000000e+00 : f32
    %96 = vector.broadcast %cst_28 : f32 to vector<2x8x8xf32>
    %97 = arith.cmpf oge, %86, %96 : vector<2x8x8xf32>
    %cst_29 = arith.constant 0.00999999977 : f32
    %98 = vector.broadcast %cst_29 : f32 to vector<2x8x8xf32>
    %99 = arith.mulf %98, %86 : vector<2x8x8xf32>
    %100 = arith.select %97, %86, %99 : vector<2x8x8xi1>, vector<2x8x8xf32>
    %c2 = arith.constant 2 : index
    %101 = memref.load %arg3[%c2] : memref<8xf32, #tpu.memory_space<smem>>
    %102 = vector.broadcast %101 : f32 to vector<2x8x8xf32>
    %103 = arith.mulf %102, %95 : vector<2x8x8xf32>
    %c2_30 = arith.constant 2 : index
    %104 = memref.load %arg4[%c2_30] : memref<8xf32, #tpu.memory_space<smem>>
    %105 = vector.broadcast %104 : f32 to vector<2x8x8xf32>
    %106 = arith.mulf %105, %100 : vector<2x8x8xf32>
    %107 = arith.addf %103, %106 : vector<2x8x8xf32>
    %108 = arith.truncf %107 : vector<2x8x8xf32> to vector<2x8x8xbf16>
    "tpu.trace_start"() <{level = 10 : i32, message = "bqk,bkd->bqd"}> : () -> ()
    %cst_31 = arith.constant dense<0.000000e+00> : vector<2x8x4xf32>
    %109 = tpu.matmul %108, %85, %cst_31 {dimension_numbers = #tpu.dot_dimension_numbers<[2], [1], [1], [2], [0, 0, 0, 1, 1, 2], [0], [0]>} : vector<2x8x8xbf16>, vector<2x8x4xbf16>, vector<2x8x4xf32> -> vector<2x8x4xf32>
    "tpu.trace_stop"() : () -> ()
    %110 = vector.shape_cast %109 : vector<2x8x4xf32> to vector<16x4xf32>
    %111 = arith.truncf %110 : vector<16x4xf32> to vector<16x4xbf16>
    %c8 = arith.constant 8 : index
    %c0_32 = arith.constant 0 : index
    %112 = vector.load %arg5[%c8, %c0_32] : memref<32x32xbf16, #tpu.memory_space<vmem>>, vector<4x32xbf16>
    %cst_33 = arith.constant dense<0.000000e+00> : vector<16x32xf32>
    %113 = tpu.matmul %111, %112, %cst_33 {dimension_numbers = #tpu.dot_dimension_numbers<[1], [0], [0], [1], [0, 0, 1, 1], [], []>} : vector<16x4xbf16>, vector<4x32xbf16>, vector<16x32xf32> -> vector<16x32xf32>
    %114 = arith.addf %79, %113 : vector<16x32xf32>
    %115 = vector.extract_strided_slice %6 {offsets = [0, 0, 12], sizes = [2, 8, 4], strides = [1, 1, 1]} : vector<2x8x32xf32> to vector<2x8x4xf32>
    %116 = arith.truncf %115 : vector<2x8x4xf32> to vector<2x8x4xbf16>
    %117 = vector.extract_strided_slice %7 {offsets = [0, 0, 12], sizes = [2, 8, 4], strides = [1, 1, 1]} : vector<2x8x32xf32> to vector<2x8x4xf32>
    %118 = arith.truncf %117 : vector<2x8x4xf32> to vector<2x8x4xbf16>
    %119 = vector.extract_strided_slice %8 {offsets = [0, 0, 12], sizes = [2, 8, 4], strides = [1, 1, 1]} : vector<2x8x32xf32> to vector<2x8x4xf32>
    %120 = arith.truncf %119 : vector<2x8x4xf32> to vector<2x8x4xbf16>
    "tpu.trace_start"() <{level = 10 : i32, message = "bqd,bkd->bqk"}> : () -> ()
    %cst_34 = arith.constant dense<0.000000e+00> : vector<2x8x8xf32>
    %121 = tpu.matmul %116, %118, %cst_34 {dimension_numbers = #tpu.dot_dimension_numbers<[2], [2], [1], [1], [0, 0, 0, 1, 1, 1], [0], [0]>} : vector<2x8x4xbf16>, vector<2x8x4xbf16>, vector<2x8x8xf32> -> vector<2x8x8xf32>
    "tpu.trace_stop"() : () -> ()
    %cst_35 = arith.constant dense<0xFF800000> : vector<2x8xf32>
    %122 = vector.multi_reduction <maximumf>, %121, %cst_35 [2] : vector<2x8x8xf32> to vector<2x8xf32>
    %123 = vector.shape_cast %122 : vector<2x8xf32> to vector<2x8x1xf32>
    %124 = vector.broadcast %123 : vector<2x8x1xf32> to vector<2x8x8xf32>
    %125 = arith.subf %121, %124 : vector<2x8x8xf32>
    %126 = math.exp %125 : vector<2x8x8xf32>
    %cst_36 = arith.constant dense<0.000000e+00> : vector<2x8xf32>
    %127 = vector.multi_reduction <add>, %126, %cst_36 [2] : vector<2x8x8xf32> to vector<2x8xf32>
    %128 = vector.shape_cast %127 : vector<2x8xf32> to vector<2x8x1xf32>
    %129 = vector.broadcast %128 : vector<2x8x1xf32> to vector<2x8x8xf32>
    %130 = arith.divf %126, %129 : vector<2x8x8xf32>
    %cst_37 = arith.constant 0.000000e+00 : f32
    %131 = vector.broadcast %cst_37 : f32 to vector<2x8x8xf32>
    %132 = arith.cmpf oge, %121, %131 : vector<2x8x8xf32>
    %cst_38 = arith.constant 0.00999999977 : f32
    %133 = vector.broadcast %cst_38 : f32 to vector<2x8x8xf32>
    %134 = arith.mulf %133, %121 : vector<2x8x8xf32>
    %135 = arith.select %132, %121, %134 : vector<2x8x8xi1>, vector<2x8x8xf32>
    %c3 = arith.constant 3 : index
    %136 = memref.load %arg3[%c3] : memref<8xf32, #tpu.memory_space<smem>>
    %137 = vector.broadcast %136 : f32 to vector<2x8x8xf32>
    %138 = arith.mulf %137, %130 : vector<2x8x8xf32>
    %c3_39 = arith.constant 3 : index
    %139 = memref.load %arg4[%c3_39] : memref<8xf32, #tpu.memory_space<smem>>
    %140 = vector.broadcast %139 : f32 to vector<2x8x8xf32>
    %141 = arith.mulf %140, %135 : vector<2x8x8xf32>
    %142 = arith.addf %138, %141 : vector<2x8x8xf32>
    %143 = arith.truncf %142 : vector<2x8x8xf32> to vector<2x8x8xbf16>
    "tpu.trace_start"() <{level = 10 : i32, message = "bqk,bkd->bqd"}> : () -> ()
    %cst_40 = arith.constant dense<0.000000e+00> : vector<2x8x4xf32>
    %144 = tpu.matmul %143, %120, %cst_40 {dimension_numbers = #tpu.dot_dimension_numbers<[2], [1], [1], [2], [0, 0, 0, 1, 1, 2], [0], [0]>} : vector<2x8x8xbf16>, vector<2x8x4xbf16>, vector<2x8x4xf32> -> vector<2x8x4xf32>
    "tpu.trace_stop"() : () -> ()
    %145 = vector.shape_cast %144 : vector<2x8x4xf32> to vector<16x4xf32>
    %146 = arith.truncf %145 : vector<16x4xf32> to vector<16x4xbf16>
    %c12 = arith.constant 12 : index
    %c0_41 = arith.constant 0 : index
    %147 = vector.load %arg5[%c12, %c0_41] : memref<32x32xbf16, #tpu.memory_space<vmem>>, vector<4x32xbf16>
    %cst_42 = arith.constant dense<0.000000e+00> : vector<16x32xf32>
    %148 = tpu.matmul %146, %147, %cst_42 {dimension_numbers = #tpu.dot_dimension_numbers<[1], [0], [0], [1], [0, 0, 1, 1], [], []>} : vector<16x4xbf16>, vector<4x32xbf16>, vector<16x32xf32> -> vector<16x32xf32>
    %149 = arith.addf %114, %148 : vector<16x32xf32>
    %150 = vector.extract_strided_slice %6 {offsets = [0, 0, 16], sizes = [2, 8, 4], strides = [1, 1, 1]} : vector<2x8x32xf32> to vector<2x8x4xf32>
    %151 = arith.truncf %150 : vector<2x8x4xf32> to vector<2x8x4xbf16>
    %152 = vector.extract_strided_slice %7 {offsets = [0, 0, 16], sizes = [2, 8, 4], strides = [1, 1, 1]} : vector<2x8x32xf32> to vector<2x8x4xf32>
    %153 = arith.truncf %152 : vector<2x8x4xf32> to vector<2x8x4xbf16>
    %154 = vector.extract_strided_slice %8 {offsets = [0, 0, 16], sizes = [2, 8, 4], strides = [1, 1, 1]} : vector<2x8x32xf32> to vector<2x8x4xf32>
    %155 = arith.truncf %154 : vector<2x8x4xf32> to vector<2x8x4xbf16>
    "tpu.trace_start"() <{level = 10 : i32, message = "bqd,bkd->bqk"}> : () -> ()
    %cst_43 = arith.constant dense<0.000000e+00> : vector<2x8x8xf32>
    %156 = tpu.matmul %151, %153, %cst_43 {dimension_numbers = #tpu.dot_dimension_numbers<[2], [2], [1], [1], [0, 0, 0, 1, 1, 1], [0], [0]>} : vector<2x8x4xbf16>, vector<2x8x4xbf16>, vector<2x8x8xf32> -> vector<2x8x8xf32>
    "tpu.trace_stop"() : () -> ()
    %cst_44 = arith.constant dense<0xFF800000> : vector<2x8xf32>
    %157 = vector.multi_reduction <maximumf>, %156, %cst_44 [2] : vector<2x8x8xf32> to vector<2x8xf32>
    %158 = vector.shape_cast %157 : vector<2x8xf32> to vector<2x8x1xf32>
    %159 = vector.broadcast %158 : vector<2x8x1xf32> to vector<2x8x8xf32>
    %160 = arith.subf %156, %159 : vector<2x8x8xf32>
    %161 = math.exp %160 : vector<2x8x8xf32>
    %cst_45 = arith.constant dense<0.000000e+00> : vector<2x8xf32>
    %162 = vector.multi_reduction <add>, %161, %cst_45 [2] : vector<2x8x8xf32> to vector<2x8xf32>
    %163 = vector.shape_cast %162 : vector<2x8xf32> to vector<2x8x1xf32>
    %164 = vector.broadcast %163 : vector<2x8x1xf32> to vector<2x8x8xf32>
    %165 = arith.divf %161, %164 : vector<2x8x8xf32>
    %cst_46 = arith.constant 0.000000e+00 : f32
    %166 = vector.broadcast %cst_46 : f32 to vector<2x8x8xf32>
    %167 = arith.cmpf oge, %156, %166 : vector<2x8x8xf32>
    %cst_47 = arith.constant 0.00999999977 : f32
    %168 = vector.broadcast %cst_47 : f32 to vector<2x8x8xf32>
    %169 = arith.mulf %168, %156 : vector<2x8x8xf32>
    %170 = arith.select %167, %156, %169 : vector<2x8x8xi1>, vector<2x8x8xf32>
    %c4_48 = arith.constant 4 : index
    %171 = memref.load %arg3[%c4_48] : memref<8xf32, #tpu.memory_space<smem>>
    %172 = vector.broadcast %171 : f32 to vector<2x8x8xf32>
    %173 = arith.mulf %172, %165 : vector<2x8x8xf32>
    %c4_49 = arith.constant 4 : index
    %174 = memref.load %arg4[%c4_49] : memref<8xf32, #tpu.memory_space<smem>>
    %175 = vector.broadcast %174 : f32 to vector<2x8x8xf32>
    %176 = arith.mulf %175, %170 : vector<2x8x8xf32>
    %177 = arith.addf %173, %176 : vector<2x8x8xf32>
    %178 = arith.truncf %177 : vector<2x8x8xf32> to vector<2x8x8xbf16>
    "tpu.trace_start"() <{level = 10 : i32, message = "bqk,bkd->bqd"}> : () -> ()
    %cst_50 = arith.constant dense<0.000000e+00> : vector<2x8x4xf32>
    %179 = tpu.matmul %178, %155, %cst_50 {dimension_numbers = #tpu.dot_dimension_numbers<[2], [1], [1], [2], [0, 0, 0, 1, 1, 2], [0], [0]>} : vector<2x8x8xbf16>, vector<2x8x4xbf16>, vector<2x8x4xf32> -> vector<2x8x4xf32>
    "tpu.trace_stop"() : () -> ()
    %180 = vector.shape_cast %179 : vector<2x8x4xf32> to vector<16x4xf32>
    %181 = arith.truncf %180 : vector<16x4xf32> to vector<16x4xbf16>
    %c16 = arith.constant 16 : index
    %c0_51 = arith.constant 0 : index
    %182 = vector.load %arg5[%c16, %c0_51] : memref<32x32xbf16, #tpu.memory_space<vmem>>, vector<4x32xbf16>
    %cst_52 = arith.constant dense<0.000000e+00> : vector<16x32xf32>
    %183 = tpu.matmul %181, %182, %cst_52 {dimension_numbers = #tpu.dot_dimension_numbers<[1], [0], [0], [1], [0, 0, 1, 1], [], []>} : vector<16x4xbf16>, vector<4x32xbf16>, vector<16x32xf32> -> vector<16x32xf32>
    %184 = arith.addf %149, %183 : vector<16x32xf32>
    %185 = vector.extract_strided_slice %6 {offsets = [0, 0, 20], sizes = [2, 8, 4], strides = [1, 1, 1]} : vector<2x8x32xf32> to vector<2x8x4xf32>
    %186 = arith.truncf %185 : vector<2x8x4xf32> to vector<2x8x4xbf16>
    %187 = vector.extract_strided_slice %7 {offsets = [0, 0, 20], sizes = [2, 8, 4], strides = [1, 1, 1]} : vector<2x8x32xf32> to vector<2x8x4xf32>
    %188 = arith.truncf %187 : vector<2x8x4xf32> to vector<2x8x4xbf16>
    %189 = vector.extract_strided_slice %8 {offsets = [0, 0, 20], sizes = [2, 8, 4], strides = [1, 1, 1]} : vector<2x8x32xf32> to vector<2x8x4xf32>
    %190 = arith.truncf %189 : vector<2x8x4xf32> to vector<2x8x4xbf16>
    "tpu.trace_start"() <{level = 10 : i32, message = "bqd,bkd->bqk"}> : () -> ()
    %cst_53 = arith.constant dense<0.000000e+00> : vector<2x8x8xf32>
    %191 = tpu.matmul %186, %188, %cst_53 {dimension_numbers = #tpu.dot_dimension_numbers<[2], [2], [1], [1], [0, 0, 0, 1, 1, 1], [0], [0]>} : vector<2x8x4xbf16>, vector<2x8x4xbf16>, vector<2x8x8xf32> -> vector<2x8x8xf32>
    "tpu.trace_stop"() : () -> ()
    %cst_54 = arith.constant dense<0xFF800000> : vector<2x8xf32>
    %192 = vector.multi_reduction <maximumf>, %191, %cst_54 [2] : vector<2x8x8xf32> to vector<2x8xf32>
    %193 = vector.shape_cast %192 : vector<2x8xf32> to vector<2x8x1xf32>
    %194 = vector.broadcast %193 : vector<2x8x1xf32> to vector<2x8x8xf32>
    %195 = arith.subf %191, %194 : vector<2x8x8xf32>
    %196 = math.exp %195 : vector<2x8x8xf32>
    %cst_55 = arith.constant dense<0.000000e+00> : vector<2x8xf32>
    %197 = vector.multi_reduction <add>, %196, %cst_55 [2] : vector<2x8x8xf32> to vector<2x8xf32>
    %198 = vector.shape_cast %197 : vector<2x8xf32> to vector<2x8x1xf32>
    %199 = vector.broadcast %198 : vector<2x8x1xf32> to vector<2x8x8xf32>
    %200 = arith.divf %196, %199 : vector<2x8x8xf32>
    %cst_56 = arith.constant 0.000000e+00 : f32
    %201 = vector.broadcast %cst_56 : f32 to vector<2x8x8xf32>
    %202 = arith.cmpf oge, %191, %201 : vector<2x8x8xf32>
    %cst_57 = arith.constant 0.00999999977 : f32
    %203 = vector.broadcast %cst_57 : f32 to vector<2x8x8xf32>
    %204 = arith.mulf %203, %191 : vector<2x8x8xf32>
    %205 = arith.select %202, %191, %204 : vector<2x8x8xi1>, vector<2x8x8xf32>
    %c5 = arith.constant 5 : index
    %206 = memref.load %arg3[%c5] : memref<8xf32, #tpu.memory_space<smem>>
    %207 = vector.broadcast %206 : f32 to vector<2x8x8xf32>
    %208 = arith.mulf %207, %200 : vector<2x8x8xf32>
    %c5_58 = arith.constant 5 : index
    %209 = memref.load %arg4[%c5_58] : memref<8xf32, #tpu.memory_space<smem>>
    %210 = vector.broadcast %209 : f32 to vector<2x8x8xf32>
    %211 = arith.mulf %210, %205 : vector<2x8x8xf32>
    %212 = arith.addf %208, %211 : vector<2x8x8xf32>
    %213 = arith.truncf %212 : vector<2x8x8xf32> to vector<2x8x8xbf16>
    "tpu.trace_start"() <{level = 10 : i32, message = "bqk,bkd->bqd"}> : () -> ()
    %cst_59 = arith.constant dense<0.000000e+00> : vector<2x8x4xf32>
    %214 = tpu.matmul %213, %190, %cst_59 {dimension_numbers = #tpu.dot_dimension_numbers<[2], [1], [1], [2], [0, 0, 0, 1, 1, 2], [0], [0]>} : vector<2x8x8xbf16>, vector<2x8x4xbf16>, vector<2x8x4xf32> -> vector<2x8x4xf32>
    "tpu.trace_stop"() : () -> ()
    %215 = vector.shape_cast %214 : vector<2x8x4xf32> to vector<16x4xf32>
    %216 = arith.truncf %215 : vector<16x4xf32> to vector<16x4xbf16>
    %c20 = arith.constant 20 : index
    %c0_60 = arith.constant 0 : index
    %217 = vector.load %arg5[%c20, %c0_60] : memref<32x32xbf16, #tpu.memory_space<vmem>>, vector<4x32xbf16>
    %cst_61 = arith.constant dense<0.000000e+00> : vector<16x32xf32>
    %218 = tpu.matmul %216, %217, %cst_61 {dimension_numbers = #tpu.dot_dimension_numbers<[1], [0], [0], [1], [0, 0, 1, 1], [], []>} : vector<16x4xbf16>, vector<4x32xbf16>, vector<16x32xf32> -> vector<16x32xf32>
    %219 = arith.addf %184, %218 : vector<16x32xf32>
    %220 = vector.extract_strided_slice %6 {offsets = [0, 0, 24], sizes = [2, 8, 4], strides = [1, 1, 1]} : vector<2x8x32xf32> to vector<2x8x4xf32>
    %221 = arith.truncf %220 : vector<2x8x4xf32> to vector<2x8x4xbf16>
    %222 = vector.extract_strided_slice %7 {offsets = [0, 0, 24], sizes = [2, 8, 4], strides = [1, 1, 1]} : vector<2x8x32xf32> to vector<2x8x4xf32>
    %223 = arith.truncf %222 : vector<2x8x4xf32> to vector<2x8x4xbf16>
    %224 = vector.extract_strided_slice %8 {offsets = [0, 0, 24], sizes = [2, 8, 4], strides = [1, 1, 1]} : vector<2x8x32xf32> to vector<2x8x4xf32>
    %225 = arith.truncf %224 : vector<2x8x4xf32> to vector<2x8x4xbf16>
    "tpu.trace_start"() <{level = 10 : i32, message = "bqd,bkd->bqk"}> : () -> ()
    %cst_62 = arith.constant dense<0.000000e+00> : vector<2x8x8xf32>
    %226 = tpu.matmul %221, %223, %cst_62 {dimension_numbers = #tpu.dot_dimension_numbers<[2], [2], [1], [1], [0, 0, 0, 1, 1, 1], [0], [0]>} : vector<2x8x4xbf16>, vector<2x8x4xbf16>, vector<2x8x8xf32> -> vector<2x8x8xf32>
    "tpu.trace_stop"() : () -> ()
    %cst_63 = arith.constant dense<0xFF800000> : vector<2x8xf32>
    %227 = vector.multi_reduction <maximumf>, %226, %cst_63 [2] : vector<2x8x8xf32> to vector<2x8xf32>
    %228 = vector.shape_cast %227 : vector<2x8xf32> to vector<2x8x1xf32>
    %229 = vector.broadcast %228 : vector<2x8x1xf32> to vector<2x8x8xf32>
    %230 = arith.subf %226, %229 : vector<2x8x8xf32>
    %231 = math.exp %230 : vector<2x8x8xf32>
    %cst_64 = arith.constant dense<0.000000e+00> : vector<2x8xf32>
    %232 = vector.multi_reduction <add>, %231, %cst_64 [2] : vector<2x8x8xf32> to vector<2x8xf32>
    %233 = vector.shape_cast %232 : vector<2x8xf32> to vector<2x8x1xf32>
    %234 = vector.broadcast %233 : vector<2x8x1xf32> to vector<2x8x8xf32>
    %235 = arith.divf %231, %234 : vector<2x8x8xf32>
    %cst_65 = arith.constant 0.000000e+00 : f32
    %236 = vector.broadcast %cst_65 : f32 to vector<2x8x8xf32>
    %237 = arith.cmpf oge, %226, %236 : vector<2x8x8xf32>
    %cst_66 = arith.constant 0.00999999977 : f32
    %238 = vector.broadcast %cst_66 : f32 to vector<2x8x8xf32>
    %239 = arith.mulf %238, %226 : vector<2x8x8xf32>
    %240 = arith.select %237, %226, %239 : vector<2x8x8xi1>, vector<2x8x8xf32>
    %c6 = arith.constant 6 : index
    %241 = memref.load %arg3[%c6] : memref<8xf32, #tpu.memory_space<smem>>
    %242 = vector.broadcast %241 : f32 to vector<2x8x8xf32>
    %243 = arith.mulf %242, %235 : vector<2x8x8xf32>
    %c6_67 = arith.constant 6 : index
    %244 = memref.load %arg4[%c6_67] : memref<8xf32, #tpu.memory_space<smem>>
    %245 = vector.broadcast %244 : f32 to vector<2x8x8xf32>
    %246 = arith.mulf %245, %240 : vector<2x8x8xf32>
    %247 = arith.addf %243, %246 : vector<2x8x8xf32>
    %248 = arith.truncf %247 : vector<2x8x8xf32> to vector<2x8x8xbf16>
    "tpu.trace_start"() <{level = 10 : i32, message = "bqk,bkd->bqd"}> : () -> ()
    %cst_68 = arith.constant dense<0.000000e+00> : vector<2x8x4xf32>
    %249 = tpu.matmul %248, %225, %cst_68 {dimension_numbers = #tpu.dot_dimension_numbers<[2], [1], [1], [2], [0, 0, 0, 1, 1, 2], [0], [0]>} : vector<2x8x8xbf16>, vector<2x8x4xbf16>, vector<2x8x4xf32> -> vector<2x8x4xf32>
    "tpu.trace_stop"() : () -> ()
    %250 = vector.shape_cast %249 : vector<2x8x4xf32> to vector<16x4xf32>
    %251 = arith.truncf %250 : vector<16x4xf32> to vector<16x4xbf16>
    %c24 = arith.constant 24 : index
    %c0_69 = arith.constant 0 : index
    %252 = vector.load %arg5[%c24, %c0_69] : memref<32x32xbf16, #tpu.memory_space<vmem>>, vector<4x32xbf16>
    %cst_70 = arith.constant dense<0.000000e+00> : vector<16x32xf32>
    %253 = tpu.matmul %251, %252, %cst_70 {dimension_numbers = #tpu.dot_dimension_numbers<[1], [0], [0], [1], [0, 0, 1, 1], [], []>} : vector<16x4xbf16>, vector<4x32xbf16>, vector<16x32xf32> -> vector<16x32xf32>
    %254 = arith.addf %219, %253 : vector<16x32xf32>
    %255 = vector.extract_strided_slice %6 {offsets = [0, 0, 28], sizes = [2, 8, 4], strides = [1, 1, 1]} : vector<2x8x32xf32> to vector<2x8x4xf32>
    %256 = arith.truncf %255 : vector<2x8x4xf32> to vector<2x8x4xbf16>
    %257 = vector.extract_strided_slice %7 {offsets = [0, 0, 28], sizes = [2, 8, 4], strides = [1, 1, 1]} : vector<2x8x32xf32> to vector<2x8x4xf32>
    %258 = arith.truncf %257 : vector<2x8x4xf32> to vector<2x8x4xbf16>
    %259 = vector.extract_strided_slice %8 {offsets = [0, 0, 28], sizes = [2, 8, 4], strides = [1, 1, 1]} : vector<2x8x32xf32> to vector<2x8x4xf32>
    %260 = arith.truncf %259 : vector<2x8x4xf32> to vector<2x8x4xbf16>
    "tpu.trace_start"() <{level = 10 : i32, message = "bqd,bkd->bqk"}> : () -> ()
    %cst_71 = arith.constant dense<0.000000e+00> : vector<2x8x8xf32>
    %261 = tpu.matmul %256, %258, %cst_71 {dimension_numbers = #tpu.dot_dimension_numbers<[2], [2], [1], [1], [0, 0, 0, 1, 1, 1], [0], [0]>} : vector<2x8x4xbf16>, vector<2x8x4xbf16>, vector<2x8x8xf32> -> vector<2x8x8xf32>
    "tpu.trace_stop"() : () -> ()
    %cst_72 = arith.constant dense<0xFF800000> : vector<2x8xf32>
    %262 = vector.multi_reduction <maximumf>, %261, %cst_72 [2] : vector<2x8x8xf32> to vector<2x8xf32>
    %263 = vector.shape_cast %262 : vector<2x8xf32> to vector<2x8x1xf32>
    %264 = vector.broadcast %263 : vector<2x8x1xf32> to vector<2x8x8xf32>
    %265 = arith.subf %261, %264 : vector<2x8x8xf32>
    %266 = math.exp %265 : vector<2x8x8xf32>
    %cst_73 = arith.constant dense<0.000000e+00> : vector<2x8xf32>
    %267 = vector.multi_reduction <add>, %266, %cst_73 [2] : vector<2x8x8xf32> to vector<2x8xf32>
    %268 = vector.shape_cast %267 : vector<2x8xf32> to vector<2x8x1xf32>
    %269 = vector.broadcast %268 : vector<2x8x1xf32> to vector<2x8x8xf32>
    %270 = arith.divf %266, %269 : vector<2x8x8xf32>
    %cst_74 = arith.constant 0.000000e+00 : f32
    %271 = vector.broadcast %cst_74 : f32 to vector<2x8x8xf32>
    %272 = arith.cmpf oge, %261, %271 : vector<2x8x8xf32>
    %cst_75 = arith.constant 0.00999999977 : f32
    %273 = vector.broadcast %cst_75 : f32 to vector<2x8x8xf32>
    %274 = arith.mulf %273, %261 : vector<2x8x8xf32>
    %275 = arith.select %272, %261, %274 : vector<2x8x8xi1>, vector<2x8x8xf32>
    %c7 = arith.constant 7 : index
    %276 = memref.load %arg3[%c7] : memref<8xf32, #tpu.memory_space<smem>>
    %277 = vector.broadcast %276 : f32 to vector<2x8x8xf32>
    %278 = arith.mulf %277, %270 : vector<2x8x8xf32>
    %c7_76 = arith.constant 7 : index
    %279 = memref.load %arg4[%c7_76] : memref<8xf32, #tpu.memory_space<smem>>
    %280 = vector.broadcast %279 : f32 to vector<2x8x8xf32>
    %281 = arith.mulf %280, %275 : vector<2x8x8xf32>
    %282 = arith.addf %278, %281 : vector<2x8x8xf32>
    %283 = arith.truncf %282 : vector<2x8x8xf32> to vector<2x8x8xbf16>
    "tpu.trace_start"() <{level = 10 : i32, message = "bqk,bkd->bqd"}> : () -> ()
    %cst_77 = arith.constant dense<0.000000e+00> : vector<2x8x4xf32>
    %284 = tpu.matmul %283, %260, %cst_77 {dimension_numbers = #tpu.dot_dimension_numbers<[2], [1], [1], [2], [0, 0, 0, 1, 1, 2], [0], [0]>} : vector<2x8x8xbf16>, vector<2x8x4xbf16>, vector<2x8x4xf32> -> vector<2x8x4xf32>
    "tpu.trace_stop"() : () -> ()
    %285 = vector.shape_cast %284 : vector<2x8x4xf32> to vector<16x4xf32>
    %286 = arith.truncf %285 : vector<16x4xf32> to vector<16x4xbf16>
    %c28 = arith.constant 28 : index
    %c0_78 = arith.constant 0 : index
    %287 = vector.load %arg5[%c28, %c0_78] : memref<32x32xbf16, #tpu.memory_space<vmem>>, vector<4x32xbf16>
    %cst_79 = arith.constant dense<0.000000e+00> : vector<16x32xf32>
    %288 = tpu.matmul %286, %287, %cst_79 {dimension_numbers = #tpu.dot_dimension_numbers<[1], [0], [0], [1], [0, 0, 1, 1], [], []>} : vector<16x4xbf16>, vector<4x32xbf16>, vector<16x32xf32> -> vector<16x32xf32>
    %289 = arith.addf %254, %288 : vector<16x32xf32>
    %c0_80 = arith.constant 0 : index
    %c0_81 = arith.constant 0 : index
    %290 = vector.load %arg6[%c0_80, %c0_81] : memref<1x32xf32, #tpu.memory_space<vmem>>, vector<1x32xf32>
    %291 = vector.broadcast %290 : vector<1x32xf32> to vector<16x32xf32>
    %292 = arith.addf %289, %291 : vector<16x32xf32>
    %c0_82 = arith.constant 0 : index
    %c0_83 = arith.constant 0 : index
    %293 = vector.load %arg7[%c0_82, %c0_83] : memref<16x32xf32, #tpu.memory_space<vmem>>, vector<16x32xf32>
    tpu.vector_store %arg7[%c0_82, %c0_83], %292 {strides = array<i32>} : memref<16x32xf32, #tpu.memory_space<vmem>>, vector<16x32xf32>,
    return
  }
  func.func @transform_0(%arg0: i32) -> (i32, i32) {
    %c0_i32 = arith.constant 0 : i32
    %c0_i32_0 = arith.constant 0 : i32
    return %arg0, %c0_i32 : i32, i32
  }
  func.func @transform_1(%arg0: i32) -> (i32, i32) {
    %c0_i32 = arith.constant 0 : i32
    %c0_i32_0 = arith.constant 0 : i32
    %c0_i32_1 = arith.constant 0 : i32
    return %c0_i32, %c0_i32_0 : i32, i32
  }
  func.func @transform_2(%arg0: i32) -> i32 {
    %c0_i32 = arith.constant 0 : i32
    %c0_i32_0 = arith.constant 0 : i32
    return %c0_i32 : i32
  }
  func.func @transform_3(%arg0: i32) -> i32 {
    %c0_i32 = arith.constant 0 : i32
    %c0_i32_0 = arith.constant 0 : i32
    return %c0_i32 : i32
  }
  func.func @transform_4(%arg0: i32) -> (i32, i32) {
    %c0_i32 = arith.constant 0 : i32
    %c0_i32_0 = arith.constant 0 : i32
    %c0_i32_1 = arith.constant 0 : i32
    return %c0_i32, %c0_i32_0 : i32, i32
  }
  func.func @transform_5(%arg0: i32) -> (i32, i32) {
    %c0_i32 = arith.constant 0 : i32
    %c0_i32_0 = arith.constant 0 : i32
    %c0_i32_1 = arith.constant 0 : i32
    return %c0_i32, %c0_i32_0 : i32, i32
  }
  func.func @transform_6(%arg0: i32) -> (i32, i32) {
    %c0_i32 = arith.constant 0 : i32
    %c0_i32_0 = arith.constant 0 : i32
    return %arg0, %c0_i32 : i32, i32
  }
}

module attributes {stable_mosaic.version = 11 : i64} {
  func.func @_aisa_kernel(%arg0: i32, %arg1: memref<16x32xbf16, #tpu.memory_space<vmem>>, %arg2: memref<32x96xbf16, #tpu.memory_space<vmem>>, %arg3: memref<8xf32, #tpu.memory_space<smem>>, %arg4: memref<8xf32, #tpu.memory_space<smem>>, %arg5: memref<32x32xbf16, #tpu.memory_space<vmem>>, %arg6: memref<1x32xf32, #tpu.memory_space<vmem>>, %arg7: memref<16x32xf32, #tpu.memory_space<vmem>>) attributes {dimension_semantics = [#tpu.dimension_semantics<parallel>], iteration_bounds = array<i64: 1>, scalar_prefetch = 0 : i64, scratch_operands = 0 : i64, tpu.core_type = #tpu.core_type<tc>, window_params = [{transform_indices = @transform_0, window_bounds = array<i64: 16, 32>}, {pipeline_mode = #tpu.pipeline_mode<synchronous>, transform_indices = @transform_1, window_bounds = array<i64: 32, 96>}, {transform_indices = @transform_2, window_bounds = array<i64: 8>}, {transform_indices = @transform_3, window_bounds = array<i64: 8>}, {pipeline_mode = #tpu.pipeline_mode<synchronous>, transform_indices = @transform_4, window_bounds = array<i64: 32, 32>}, {pipeline_mode = #tpu.pipeline_mode<synchronous>, transform_indices = @transform_5, window_bounds = array<i64: 1, 32>}, {transform_indices = @transform_6, window_bounds = array<i64: 16, 32>}]} {
    %c0 = arith.constant 0 : index
    %c0_0 = arith.constant 0 : index
    %0 = vector.load %arg1[%c0, %c0_0] : memref<16x32xbf16, #tpu.memory_space<vmem>>, vector<16x32xbf16>
    %c0_1 = arith.constant 0 : index
    %c0_2 = arith.constant 0 : index
    %1 = vector.load %arg2[%c0_1, %c0_2] : memref<32x96xbf16, #tpu.memory_space<vmem>>, vector<32x96xbf16>
    %cst = arith.constant dense<0.000000e+00> : vector<16x96xf32>
    %2 = tpu.matmul %0, %1, %cst {dimension_numbers = #tpu.dot_dimension_numbers<[1], [0], [0], [1], [0, 0, 1, 1], [], []>} : vector<16x32xbf16>, vector<32x96xbf16>, vector<16x96xf32> -> vector<16x96xf32>
    %3 = vector.shape_cast %2 : vector<16x96xf32> to vector<2x8x96xf32>
    %4 = vector.extract_strided_slice %3 {offsets = [0, 0, 0], sizes = [2, 8, 32], strides = [1, 1, 1]} : vector<2x8x96xf32> to vector<2x8x32xf32>
    %cst_3 = arith.constant 5.000000e-01 : f32
    %5 = vector.broadcast %cst_3 : f32 to vector<2x8x32xf32>
    %6 = arith.mulf %4, %5 : vector<2x8x32xf32>
    %7 = vector.extract_strided_slice %3 {offsets = [0, 0, 32], sizes = [2, 8, 32], strides = [1, 1, 1]} : vector<2x8x96xf32> to vector<2x8x32xf32>
    %8 = vector.extract_strided_slice %3 {offsets = [0, 0, 64], sizes = [2, 8, 32], strides = [1, 1, 1]} : vector<2x8x96xf32> to vector<2x8x32xf32>
    %cst_4 = arith.constant 0.000000e+00 : f32
    %9 = vector.broadcast %cst_4 : f32 to vector<16x32xf32>
    %10 = vector.extract_strided_slice %6 {offsets = [0, 0, 0], sizes = [2, 8, 4], strides = [1, 1, 1]} : vector<2x8x32xf32> to vector<2x8x4xf32>
    %11 = arith.truncf %10 : vector<2x8x4xf32> to vector<2x8x4xbf16>
    %12 = vector.extract_strided_slice %7 {offsets = [0, 0, 0], sizes = [2, 8, 4], strides = [1, 1, 1]} : vector<2x8x32xf32> to vector<2x8x4xf32>
    %13 = arith.truncf %12 : vector<2x8x4xf32> to vector<2x8x4xbf16>
    %14 = vector.extract_strided_slice %8 {offsets = [0, 0, 0], sizes = [2, 8, 4], strides = [1, 1, 1]} : vector<2x8x32xf32> to vector<2x8x4xf32>
    %15 = arith.truncf %14 : vector<2x8x4xf32> to vector<2x8x4xbf16>
    "tpu.trace_start"() <{level = 10 : i32, message = "bqd,bkd->bqk"}> : () -> ()
    %cst_5 = arith.constant dense<0.000000e+00> : vector<2x8x8xf32>
    %16 = tpu.matmul %11, %13, %cst_5 {dimension_numbers = #tpu.dot_dimension_numbers<[2], [2], [1], [1], [0, 0, 0, 1, 1, 1], [0], [0]>} : vector<2x8x4xbf16>, vector<2x8x4xbf16>, vector<2x8x8xf32> -> vector<2x8x8xf32>
    "tpu.trace_stop"() : () -> ()
    %cst_6 = arith.constant dense<0xFF800000> : vector<2x8xf32>
    %17 = vector.multi_reduction <maximumf>, %16, %cst_6 [2] : vector<2x8x8xf32> to vector<2x8xf32>
    %18 = vector.shape_cast %17 : vector<2x8xf32> to vector<2x8x1xf32>
    %19 = vector.broadcast %18 : vector<2x8x1xf32> to vector<2x8x8xf32>
    %20 = arith.subf %16, %19 : vector<2x8x8xf32>
    %21 = math.exp %20 : vector<2x8x8xf32>
    %cst_7 = arith.constant dense<0.000000e+00> : vector<2x8xf32>
    %22 = vector.multi_reduction <add>, %21, %cst_7 [2] : vector<2x8x8xf32> to vector<2x8xf32>
    %23 = vector.shape_cast %22 : vector<2x8xf32> to vector<2x8x1xf32>
    %24 = vector.broadcast %23 : vector<2x8x1xf32> to vector<2x8x8xf32>
    %25 = arith.divf %21, %24 : vector<2x8x8xf32>
    %cst_8 = arith.constant 0.000000e+00 : f32
    %26 = vector.broadcast %cst_8 : f32 to vector<2x8x8xf32>
    %27 = arith.cmpf oge, %16, %26 : vector<2x8x8xf32>
    %cst_9 = arith.constant 0.00999999977 : f32
    %28 = vector.broadcast %cst_9 : f32 to vector<2x8x8xf32>
    %29 = arith.mulf %28, %16 : vector<2x8x8xf32>
    %30 = arith.select %27, %16, %29 : vector<2x8x8xi1>, vector<2x8x8xf32>
    %c0_10 = arith.constant 0 : index
    %31 = memref.load %arg3[%c0_10] : memref<8xf32, #tpu.memory_space<smem>>
    %32 = vector.broadcast %31 : f32 to vector<2x8x8xf32>
    %33 = arith.mulf %32, %25 : vector<2x8x8xf32>
    %c0_11 = arith.constant 0 : index
    %34 = memref.load %arg4[%c0_11] : memref<8xf32, #tpu.memory_space<smem>>
    %35 = vector.broadcast %34 : f32 to vector<2x8x8xf32>
    %36 = arith.mulf %35, %30 : vector<2x8x8xf32>
    %37 = arith.addf %33, %36 : vector<2x8x8xf32>
    %38 = arith.truncf %37 : vector<2x8x8xf32> to vector<2x8x8xbf16>
    "tpu.trace_start"() <{level = 10 : i32, message = "bqk,bkd->bqd"}> : () -> ()
    %cst_12 = arith.constant dense<0.000000e+00> : vector<2x8x4xf32>
    %39 = tpu.matmul %38, %15, %cst_12 {dimension_numbers = #tpu.dot_dimension_numbers<[2], [1], [1], [2], [0, 0, 0, 1, 1, 2], [0], [0]>} : vector<2x8x8xbf16>, vector<2x8x4xbf16>, vector<2x8x4xf32> -> vector<2x8x4xf32>
    "tpu.trace_stop"() : () -> ()
    %40 = vector.shape_cast %39 : vector<2x8x4xf32> to vector<16x4xf32>
    %41 = arith.truncf %40 : vector<16x4xf32> to vector<16x4xbf16>
    %c0_13 = arith.constant 0 : index
    %c0_14 = arith.constant 0 : index
    %42 = vector.load %arg5[%c0_13, %c0_14] : memref<32x32xbf16, #tpu.memory_space<vmem>>, vector<4x32xbf16>
    %cst_15 = arith.constant dense<0.000000e+00> : vector<16x32xf32>
    %43 = tpu.matmul %41, %42, %cst_15 {dimension_numbers = #tpu.dot_dimension_numbers<[1], [0], [0], [1], [0, 0, 1, 1], [], []>} : vector<16x4xbf16>, vector<4x32xbf16>, vector<16x32xf32> -> vector<16x32xf32>
    %44 = arith.addf %9, %43 : vector<16x32xf32>
    %45 = vector.extract_strided_slice %6 {offsets = [0, 0, 4], sizes = [2, 8, 4], strides = [1, 1, 1]} : vector<2x8x32xf32> to vector<2x8x4xf32>
    %46 = arith.truncf %45 : vector<2x8x4xf32> to vector<2x8x4xbf16>
    %47 = vector.extract_strided_slice %7 {offsets = [0, 0, 4], sizes = [2, 8, 4], strides = [1, 1, 1]} : vector<2x8x32xf32> to vector<2x8x4xf32>
    %48 = arith.truncf %47 : vector<2x8x4xf32> to vector<2x8x4xbf16>
    %49 = vector.extract_strided_slice %8 {offsets = [0, 0, 4], sizes = [2, 8, 4], strides = [1, 1, 1]} : vector<2x8x32xf32> to vector<2x8x4xf32>
    %50 = arith.truncf %49 : vector<2x8x4xf32> to vector<2x8x4xbf16>
    "tpu.trace_start"() <{level = 10 : i32, message = "bqd,bkd->bqk"}> : () -> ()
    %cst_16 = arith.constant dense<0.000000e+00> : vector<2x8x8xf32>
    %51 = tpu.matmul %46, %48, %cst_16 {dimension_numbers = #tpu.dot_dimension_numbers<[2], [2], [1], [1], [0, 0, 0, 1, 1, 1], [0], [0]>} : vector<2x8x4xbf16>, vector<2x8x4xbf16>, vector<2x8x8xf32> -> vector<2x8x8xf32>
    "tpu.trace_stop"() : () -> ()
    %cst_17 = arith.constant dense<0xFF800000> : vector<2x8xf32>
    %52 = vector.multi_reduction <maximumf>, %51, %cst_17 [2] : vector<2x8x8xf32> to vector<2x8xf32>
    %53 = vector.shape_cast %52 : vector<2x8xf32> to vector<2x8x1xf32>
    %54 = vector.broadcast %53 : vector<2x8x1xf32> to vector<2x8x8xf32>
    %55 = arith.subf %51, %54 : vector<2x8x8xf32>
    %56 = math.exp %55 : vector<2x8x8xf32>
    %cst_18 = arith.constant dense<0.000000e+00> : vector<2x8xf32>
    %57 = vector.multi_reduction <add>, %56, %cst_18 [2] : vector<2x8x8xf32> to vector<2x8xf32>
    %58 = vector.shape_cast %57 : vector<2x8xf32> to vector<2x8x1xf32>
    %59 = vector.broadcast %58 : vector<2x8x1xf32> to vector<2x8x8xf32>
    %60 = arith.divf %56, %59 : vector<2x8x8xf32>
    %cst_19 = arith.constant 0.000000e+00 : f32
    %61 = vector.broadcast %cst_19 : f32 to vector<2x8x8xf32>
    %62 = arith.cmpf oge, %51, %61 : vector<2x8x8xf32>
    %cst_20 = arith.constant 0.00999999977 : f32
    %63 = vector.broadcast %cst_20 : f32 to vector<2x8x8xf32>
    %64 = arith.mulf %63, %51 : vector<2x8x8xf32>
    %65 = arith.select %62, %51, %64 : vector<2x8x8xi1>, vector<2x8x8xf32>
    %c1 = arith.constant 1 : index
    %66 = memref.load %arg3[%c1] : memref<8xf32, #tpu.memory_space<smem>>
    %67 = vector.broadcast %66 : f32 to vector<2x8x8xf32>
    %68 = arith.mulf %67, %60 : vector<2x8x8xf32>
    %c1_21 = arith.constant 1 : index
    %69 = memref.load %arg4[%c1_21] : memref<8xf32, #tpu.memory_space<smem>>
    %70 = vector.broadcast %69 : f32 to vector<2x8x8xf32>
    %71 = arith.mulf %70, %65 : vector<2x8x8xf32>
    %72 = arith.addf %68, %71 : vector<2x8x8xf32>
    %73 = arith.truncf %72 : vector<2x8x8xf32> to vector<2x8x8xbf16>
    "tpu.trace_start"() <{level = 10 : i32, message = "bqk,bkd->bqd"}> : () -> ()
    %cst_22 = arith.constant dense<0.000000e+00> : vector<2x8x4xf32>
    %74 = tpu.matmul %73, %50, %cst_22 {dimension_numbers = #tpu.dot_dimension_numbers<[2], [1], [1], [2], [0, 0, 0, 1, 1, 2], [0], [0]>} : vector<2x8x8xbf16>, vector<2x8x4xbf16>, vector<2x8x4xf32> -> vector<2x8x4xf32>
    "tpu.trace_stop"() : () -> ()
    %75 = vector.shape_cast %74 : vector<2x8x4xf32> to vector<16x4xf32>
    %76 = arith.truncf %75 : vector<16x4xf32> to vector<16x4xbf16>
    %c4 = arith.constant 4 : index
    %c0_23 = arith.constant 0 : index
    %77 = vector.load %arg5[%c4, %c0_23] : memref<32x32xbf16, #tpu.memory_space<vmem>>, vector<4x32xbf16>
    %cst_24 = arith.constant dense<0.000000e+00> : vector<16x32xf32>
    %78 = tpu.matmul %76, %77, %cst_24 {dimension_numbers = #tpu.dot_dimension_numbers<[1], [0], [0], [1], [0, 0, 1, 1], [], []>} : vector<16x4xbf16>, vector<4x32xbf16>, vector<16x32xf32> -> vector<16x32xf32>
    %79 = arith.addf %44, %78 : vector<16x32xf32>
    %80 = vector.extract_strided_slice %6 {offsets = [0, 0, 8], sizes = [2, 8, 4], strides = [1, 1, 1]} : vector<2x8x32xf32> to vector<2x8x4xf32>
    %81 = arith.truncf %80 : vector<2x8x4xf32> to vector<2x8x4xbf16>
    %82 = vector.extract_strided_slice %7 {offsets = [0, 0, 8], sizes = [2, 8, 4], strides = [1, 1, 1]} : vector<2x8x32xf32> to vector<2x8x4xf32>
    %83 = arith.truncf %82 : vector<2x8x4xf32> to vector<2x8x4xbf16>
    %84 = vector.extract_strided_slice %8 {offsets = [0, 0, 8], sizes = [2, 8, 4], strides = [1, 1, 1]} : vector<2x8x32xf32> to vector<2x8x4xf32>
    %85 = arith.truncf %84 : vector<2x8x4xf32> to vector<2x8x4xbf16>
    "tpu.trace_start"() <{level = 10 : i32, message = "bqd,bkd->bqk"}> : () -> ()
    %cst_25 = arith.constant dense<0.000000e+00> : vector<2x8x8xf32>
    %86 = tpu.matmul %81, %83, %cst_25 {dimension_numbers = #tpu.dot_dimension_numbers<[2], [2], [1], [1], [0, 0, 0, 1, 1, 1], [0], [0]>} : vector<2x8x4xbf16>, vector<2x8x4xbf16>, vector<2x8x8xf32> -> vector<2x8x8xf32>
    "tpu.trace_stop"() : () -> ()
    %cst_26 = arith.constant dense<0xFF800000> : vector<2x8xf32>
    %87 = vector.multi_reduction <maximumf>, %86, %cst_26 [2] : vector<2x8x8xf32> to vector<2x8xf32>
    %88 = vector.shape_cast %87 : vector<2x8xf32> to vector<2x8x1xf32>
    %89 = vector.broadcast %88 : vector<2x8x1xf32> to vector<2x8x8xf32>
    %90 = arith.subf %86, %89 : vector<2x8x8xf32>
    %91 = math.exp %90 : vector<2x8x8xf32>
    %cst_27 = arith.constant dense<0.000000e+00> : vector<2x8xf32>
    %92 = vector.multi_reduction <add>, %91, %cst_27 [2] : vector<2x8x8xf32> to vector<2x8xf32>
    %93 = vector.shape_cast %92 : vector<2x8xf32> to vector<2x8x1xf32>
    %94 = vector.broadcast %93 : vector<2x8x1xf32> to vector<2x8x8xf32>
    %95 = arith.divf %91, %94 : vector<2x8x8xf32>
    %cst_28 = arith.constant 0.000000e+00 : f32
    %96 = vector.broadcast %cst_28 : f32 to vector<2x8x8xf32>
    %97 = arith.cmpf oge, %86, %96 : vector<2x8x8xf32>
    %cst_29 = arith.constant 0.00999999977 : f32
    %98 = vector.broadcast %cst_29 : f32 to vector<2x8x8xf32>
    %99 = arith.mulf %98, %86 : vector<2x8x8xf32>
    %100 = arith.select %97, %86, %99 : vector<2x8x8xi1>, vector<2x8x8xf32>
    %c2 = arith.constant 2 : index
    %101 = memref.load %arg3[%c2] : memref<8xf32, #tpu.memory_space<smem>>
    %102 = vector.broadcast %101 : f32 to vector<2x8x8xf32>
    %103 = arith.mulf %102, %95 : vector<2x8x8xf32>
    %c2_30 = arith.constant 2 : index
    %104 = memref.load %arg4[%c2_30] : memref<8xf32, #tpu.memory_space<smem>>
    %105 = vector.broadcast %104 : f32 to vector<2x8x8xf32>
    %106 = arith.mulf %105, %100 : vector<2x8x8xf32>
    %107 = arith.addf %103, %106 : vector<2x8x8xf32>
    %108 = arith.truncf %107 : vector<2x8x8xf32> to vector<2x8x8xbf16>
    "tpu.trace_start"() <{level = 10 : i32, message = "bqk,bkd->bqd"}> : () -> ()
    %cst_31 = arith.constant dense<0.000000e+00> : vector<2x8x4xf32>
    %109 = tpu.matmul %108, %85, %cst_31 {dimension_numbers = #tpu.dot_dimension_numbers<[2], [1], [1], [2], [0, 0, 0, 1, 1, 2], [0], [0]>} : vector<2x8x8xbf16>, vector<2x8x4xbf16>, vector<2x8x4xf32> -> vector<2x8x4xf32>
    "tpu.trace_stop"() : () -> ()
    %110 = vector.shape_cast %109 : vector<2x8x4xf32> to vector<16x4xf32>
    %111 = arith.truncf %110 : vector<16x4xf32> to vector<16x4xbf16>
    %c8 = arith.constant 8 : index
    %c0_32 = arith.constant 0 : index
    %112 = vector.load %arg5[%c8, %c0_32] : memref<32x32xbf16, #tpu.memory_space<vmem>>, vector<4x32xbf16>
    %cst_33 = arith.constant dense<0.000000e+00> : vector<16x32xf32>
    %113 = tpu.matmul %111, %112, %cst_33 {dimension_numbers = #tpu.dot_dimension_numbers<[1], [0], [0], [1], [0, 0, 1, 1], [], []>} : vector<16x4xbf16>, vector<4x32xbf16>, vector<16x32xf32> -> vector<16x32xf32>
    %114 = arith.addf %79, %113 : vector<16x32xf32>
    %115 = vector.extract_strided_slice %6 {offsets = [0, 0, 12], sizes = [2, 8, 4], strides = [1, 1, 1]} : vector<2x8x32xf32> to vector<2x8x4xf32>
    %116 = arith.truncf %115 : vector<2x8x4xf32> to vector<2x8x4xbf16>
    %117 = vector.extract_strided_slice %7 {offsets = [0, 0, 12], sizes = [2, 8, 4], strides = [1, 1, 1]} : vector<2x8x32xf32> to vector<2x8x4xf32>
    %118 = arith.truncf %117 : vector<2x8x4xf32> to vector<2x8x4xbf16>
    %119 = vector.extract_strided_slice %8 {offsets = [0, 0, 12], sizes = [2, 8, 4], strides = [1, 1, 1]} : vector<2x8x32xf32> to vector<2x8x4xf32>
    %120 = arith.truncf %119 : vector<2x8x4xf32> to vector<2x8x4xbf16>
    "tpu.trace_start"() <{level = 10 : i32, message = "bqd,bkd->bqk"}> : () -> ()
    %cst_34 = arith.constant dense<0.000000e+00> : vector<2x8x8xf32>
    %121 = tpu.matmul %116, %118, %cst_34 {dimension_numbers = #tpu.dot_dimension_numbers<[2], [2], [1], [1], [0, 0, 0, 1, 1, 1], [0], [0]>} : vector<2x8x4xbf16>, vector<2x8x4xbf16>, vector<2x8x8xf32> -> vector<2x8x8xf32>
    "tpu.trace_stop"() : () -> ()
    %cst_35 = arith.constant dense<0xFF800000> : vector<2x8xf32>
    %122 = vector.multi_reduction <maximumf>, %121, %cst_35 [2] : vector<2x8x8xf32> to vector<2x8xf32>
    %123 = vector.shape_cast %122 : vector<2x8xf32> to vector<2x8x1xf32>
    %124 = vector.broadcast %123 : vector<2x8x1xf32> to vector<2x8x8xf32>
    %125 = arith.subf %121, %124 : vector<2x8x8xf32>
    %126 = math.exp %125 : vector<2x8x8xf32>
    %cst_36 = arith.constant dense<0.000000e+00> : vector<2x8xf32>
    %127 = vector.multi_reduction <add>, %126, %cst_36 [2] : vector<2x8x8xf32> to vector<2x8xf32>
    %128 = vector.shape_cast %127 : vector<2x8xf32> to vector<2x8x1xf32>
    %129 = vector.broadcast %128 : vector<2x8x1xf32> to vector<2x8x8xf32>
    %130 = arith.divf %126, %129 : vector<2x8x8xf32>
    %cst_37 = arith.constant 0.000000e+00 : f32
    %131 = vector.broadcast %cst_37 : f32 to vector<2x8x8xf32>
    %132 = arith.cmpf oge, %121, %131 : vector<2x8x8xf32>
    %cst_38 = arith.constant 0.00999999977 : f32
    %133 = vector.broadcast %cst_38 : f32 to vector<2x8x8xf32>
    %134 = arith.mulf %133, %121 : vector<2x8x8xf32>
    %135 = arith.select %132, %121, %134 : vector<2x8x8xi1>, vector<2x8x8xf32>
    %c3 = arith.constant 3 : index
    %136 = memref.load %arg3[%c3] : memref<8xf32, #tpu.memory_space<smem>>
    %137 = vector.broadcast %136 : f32 to vector<2x8x8xf32>
    %138 = arith.mulf %137, %130 : vector<2x8x8xf32>
    %c3_39 = arith.constant 3 : index
    %139 = memref.load %arg4[%c3_39] : memref<8xf32, #tpu.memory_space<smem>>
    %140 = vector.broadcast %139 : f32 to vector<2x8x8xf32>
    %141 = arith.mulf %140, %135 : vector<2x8x8xf32>
    %142 = arith.addf %138, %141 : vector<2x8x8xf32>
    %143 = arith.truncf %142 : vector<2x8x8xf32> to vector<2x8x8xbf16>
    "tpu.trace_start"() <{level = 10 : i32, message = "bqk,bkd->bqd"}> : () -> ()
    %cst_40 = arith.constant dense<0.000000e+00> : vector<2x8x4xf32>
    %144 = tpu.matmul %143, %120, %cst_40 {dimension_numbers = #tpu.dot_dimension_numbers<[2], [1], [1], [2], [0, 0, 0, 1, 1, 2], [0], [0]>} : vector<2x8x8xbf16>, vector<2x8x4xbf16>, vector<2x8x4xf32> -> vector<2x8x4xf32>
    "tpu.trace_stop"() : () -> ()
    %145 = vector.shape_cast %144 : vector<2x8x4xf32> to vector<16x4xf32>
    %146 = arith.truncf %145 : vector<16x4xf32> to vector<16x4xbf16>
    %c12 = arith.constant 12 : index
    %c0_41 = arith.constant 0 : index
    %147 = vector.load %arg5[%c12, %c0_41] : memref<32x32xbf16, #tpu.memory_space<vmem>>, vector<4x32xbf16>
    %cst_42 = arith.constant dense<0.000000e+00> : vector<16x32xf32>
    %148 = tpu.matmul %146, %147, %cst_42 {dimension_numbers = #tpu.dot_dimension_numbers<[1], [0], [0], [1], [0, 0, 1, 1], [], []>} : vector<16x4xbf16>, vector<4x32xbf16>, vector<16x32xf32> -> vector<16x32xf32>
    %149 = arith.addf %114, %148 : vector<16x32xf32>
    %150 = vector.extract_strided_slice %6 {offsets = [0, 0, 16], sizes = [2, 8, 4], strides = [1, 1, 1]} : vector<2x8x32xf32> to vector<2x8x4xf32>
    %151 = arith.truncf %150 : vector<2x8x4xf32> to vector<2x8x4xbf16>
    %152 = vector.extract_strided_slice %7 {offsets = [0, 0, 16], sizes = [2, 8, 4], strides = [1, 1, 1]} : vector<2x8x32xf32> to vector<2x8x4xf32>
    %153 = arith.truncf %152 : vector<2x8x4xf32> to vector<2x8x4xbf16>
    %154 = vector.extract_strided_slice %8 {offsets = [0, 0, 16], sizes = [2, 8, 4], strides = [1, 1, 1]} : vector<2x8x32xf32> to vector<2x8x4xf32>
    %155 = arith.truncf %154 : vector<2x8x4xf32> to vector<2x8x4xbf16>
    "tpu.trace_start"() <{level = 10 : i32, message = "bqd,bkd->bqk"}> : () -> ()
    %cst_43 = arith.constant dense<0.000000e+00> : vector<2x8x8xf32>
    %156 = tpu.matmul %151, %153, %cst_43 {dimension_numbers = #tpu.dot_dimension_numbers<[2], [2], [1], [1], [0, 0, 0, 1, 1, 1], [0], [0]>} : vector<2x8x4xbf16>, vector<2x8x4xbf16>, vector<2x8x8xf32> -> vector<2x8x8xf32>
    "tpu.trace_stop"() : () -> ()
    %cst_44 = arith.constant dense<0xFF800000> : vector<2x8xf32>
    %157 = vector.multi_reduction <maximumf>, %156, %cst_44 [2] : vector<2x8x8xf32> to vector<2x8xf32>
    %158 = vector.shape_cast %157 : vector<2x8xf32> to vector<2x8x1xf32>
    %159 = vector.broadcast %158 : vector<2x8x1xf32> to vector<2x8x8xf32>
    %160 = arith.subf %156, %159 : vector<2x8x8xf32>
    %161 = math.exp %160 : vector<2x8x8xf32>
    %cst_45 = arith.constant dense<0.000000e+00> : vector<2x8xf32>
    %162 = vector.multi_reduction <add>, %161, %cst_45 [2] : vector<2x8x8xf32> to vector<2x8xf32>
    %163 = vector.shape_cast %162 : vector<2x8xf32> to vector<2x8x1xf32>
    %164 = vector.broadcast %163 : vector<2x8x1xf32> to vector<2x8x8xf32>
    %165 = arith.divf %161, %164 : vector<2x8x8xf32>
    %cst_46 = arith.constant 0.000000e+00 : f32
    %166 = vector.broadcast %cst_46 : f32 to vector<2x8x8xf32>
    %167 = arith.cmpf oge, %156, %166 : vector<2x8x8xf32>
    %cst_47 = arith.constant 0.00999999977 : f32
    %168 = vector.broadcast %cst_47 : f32 to vector<2x8x8xf32>
    %169 = arith.mulf %168, %156 : vector<2x8x8xf32>
    %170 = arith.select %167, %156, %169 : vector<2x8x8xi1>, vector<2x8x8xf32>
    %c4_48 = arith.constant 4 : index
    %171 = memref.load %arg3[%c4_48] : memref<8xf32, #tpu.memory_space<smem>>
    %172 = vector.broadcast %171 : f32 to vector<2x8x8xf32>
    %173 = arith.mulf %172, %165 : vector<2x8x8xf32>
    %c4_49 = arith.constant 4 : index
    %174 = memref.load %arg4[%c4_49] : memref<8xf32, #tpu.memory_space<smem>>
    %175 = vector.broadcast %174 : f32 to vector<2x8x8xf32>
    %176 = arith.mulf %175, %170 : vector<2x8x8xf32>
    %177 = arith.addf %173, %176 : vector<2x8x8xf32>
    %178 = arith.truncf %177 : vector<2x8x8xf32> to vector<2x8x8xbf16>
    "tpu.trace_start"() <{level = 10 : i32, message = "bqk,bkd->bqd"}> : () -> ()
    %cst_50 = arith.constant dense<0.000000e+00> : vector<2x8x4xf32>
    %179 = tpu.matmul %178, %155, %cst_50 {dimension_numbers = #tpu.dot_dimension_numbers<[2], [1], [1], [2], [0, 0, 0, 1, 1, 2], [0], [0]>} : vector<2x8x8xbf16>, vector<2x8x4xbf16>, vector<2x8x4xf32> -> vector<2x8x4xf32>
    "tpu.trace_stop"() : () -> ()
    %180 = vector.shape_cast %179 : vector<2x8x4xf32> to vector<16x4xf32>
    %181 = arith.truncf %180 : vector<16x4xf32> to vector<16x4xbf16>
    %c16 = arith.constant 16 : index
    %c0_51 = arith.constant 0 : index
    %182 = vector.load %arg5[%c16, %c0_51] : memref<32x32xbf16, #tpu.memory_space<vmem>>, vector<4x32xbf16>
    %cst_52 = arith.constant dense<0.000000e+00> : vector<16x32xf32>
    %183 = tpu.matmul %181, %182, %cst_52 {dimension_numbers = #tpu.dot_dimension_numbers<[1], [0], [0], [1], [0, 0, 1, 1], [], []>} : vector<16x4xbf16>, vector<4x32xbf16>, vector<16x32xf32> -> vector<16x32xf32>
    %184 = arith.addf %149, %183 : vector<16x32xf32>
    %185 = vector.extract_strided_slice %6 {offsets = [0, 0, 20], sizes = [2, 8, 4], strides = [1, 1, 1]} : vector<2x8x32xf32> to vector<2x8x4xf32>
    %186 = arith.truncf %185 : vector<2x8x4xf32> to vector<2x8x4xbf16>
    %187 = vector.extract_strided_slice %7 {offsets = [0, 0, 20], sizes = [2, 8, 4], strides = [1, 1, 1]} : vector<2x8x32xf32> to vector<2x8x4xf32>
    %188 = arith.truncf %187 : vector<2x8x4xf32> to vector<2x8x4xbf16>
    %189 = vector.extract_strided_slice %8 {offsets = [0, 0, 20], sizes = [2, 8, 4], strides = [1, 1, 1]} : vector<2x8x32xf32> to vector<2x8x4xf32>
    %190 = arith.truncf %189 : vector<2x8x4xf32> to vector<2x8x4xbf16>
    "tpu.trace_start"() <{level = 10 : i32, message = "bqd,bkd->bqk"}> : () -> ()
    %cst_53 = arith.constant dense<0.000000e+00> : vector<2x8x8xf32>
    %191 = tpu.matmul %186, %188, %cst_53 {dimension_numbers = #tpu.dot_dimension_numbers<[2], [2], [1], [1], [0, 0, 0, 1, 1, 1], [0], [0]>} : vector<2x8x4xbf16>, vector<2x8x4xbf16>, vector<2x8x8xf32> -> vector<2x8x8xf32>
    "tpu.trace_stop"() : () -> ()
    %cst_54 = arith.constant dense<0xFF800000> : vector<2x8xf32>
    %192 = vector.multi_reduction <maximumf>, %191, %cst_54 [2] : vector<2x8x8xf32> to vector<2x8xf32>
    %193 = vector.shape_cast %192 : vector<2x8xf32> to vector<2x8x1xf32>
    %194 = vector.broadcast %193 : vector<2x8x1xf32> to vector<2x8x8xf32>
    %195 = arith.subf %191, %194 : vector<2x8x8xf32>
    %196 = math.exp %195 : vector<2x8x8xf32>
    %cst_55 = arith.constant dense<0.000000e+00> : vector<2x8xf32>
    %197 = vector.multi_reduction <add>, %196, %cst_55 [2] : vector<2x8x8xf32> to vector<2x8xf32>
    %198 = vector.shape_cast %197 : vector<2x8xf32> to vector<2x8x1xf32>
    %199 = vector.broadcast %198 : vector<2x8x1xf32> to vector<2x8x8xf32>
    %200 = arith.divf %196, %199 : vector<2x8x8xf32>
    %cst_56 = arith.constant 0.000000e+00 : f32
    %201 = vector.broadcast %cst_56 : f32 to vector<2x8x8xf32>
    %202 = arith.cmpf oge, %191, %201 : vector<2x8x8xf32>
    %cst_57 = arith.constant 0.00999999977 : f32
    %203 = vector.broadcast %cst_57 : f32 to vector<2x8x8xf32>
    %204 = arith.mulf %203, %191 : vector<2x8x8xf32>
    %205 = arith.select %202, %191, %204 : vector<2x8x8xi1>, vector<2x8x8xf32>
    %c5 = arith.constant 5 : index
    %206 = memref.load %arg3[%c5] : memref<8xf32, #tpu.memory_space<smem>>
    %207 = vector.broadcast %206 : f32 to vector<2x8x8xf32>
    %208 = arith.mulf %207, %200 : vector<2x8x8xf32>
    %c5_58 = arith.constant 5 : index
    %209 = memref.load %arg4[%c5_58] : memref<8xf32, #tpu.memory_space<smem>>
    %210 = vector.broadcast %209 : f32 to vector<2x8x8xf32>
    %211 = arith.mulf %210, %205 : vector<2x8x8xf32>
    %212 = arith.addf %208, %211 : vector<2x8x8xf32>
    %213 = arith.truncf %212 : vector<2x8x8xf32> to vector<2x8x8xbf16>
    "tpu.trace_start"() <{level = 10 : i32, message = "bqk,bkd->bqd"}> : () -> ()
    %cst_59 = arith.constant dense<0.000000e+00> : vector<2x8x4xf32>
    %214 = tpu.matmul %213, %190, %cst_59 {dimension_numbers = #tpu.dot_dimension_numbers<[2], [1], [1], [2], [0, 0, 0, 1, 1, 2], [0], [0]>} : vector<2x8x8xbf16>, vector<2x8x4xbf16>, vector<2x8x4xf32> -> vector<2x8x4xf32>
    "tpu.trace_stop"() : () -> ()
    %215 = vector.shape_cast %214 : vector<2x8x4xf32> to vector<16x4xf32>
    %216 = arith.truncf %215 : vector<16x4xf32> to vector<16x4xbf16>
    %c20 = arith.constant 20 : index
    %c0_60 = arith.constant 0 : index
    %217 = vector.load %arg5[%c20, %c0_60] : memref<32x32xbf16, #tpu.memory_space<vmem>>, vector<4x32xbf16>
    %cst_61 = arith.constant dense<0.000000e+00> : vector<16x32xf32>
    %218 = tpu.matmul %216, %217, %cst_61 {dimension_numbers = #tpu.dot_dimension_numbers<[1], [0], [0], [1], [0, 0, 1, 1], [], []>} : vector<16x4xbf16>, vector<4x32xbf16>, vector<16x32xf32> -> vector<16x32xf32>
    %219 = arith.addf %184, %218 : vector<16x32xf32>
    %220 = vector.extract_strided_slice %6 {offsets = [0, 0, 24], sizes = [2, 8, 4], strides = [1, 1, 1]} : vector<2x8x32xf32> to vector<2x8x4xf32>
    %221 = arith.truncf %220 : vector<2x8x4xf32> to vector<2x8x4xbf16>
    %222 = vector.extract_strided_slice %7 {offsets = [0, 0, 24], sizes = [2, 8, 4], strides = [1, 1, 1]} : vector<2x8x32xf32> to vector<2x8x4xf32>
    %223 = arith.truncf %222 : vector<2x8x4xf32> to vector<2x8x4xbf16>
    %224 = vector.extract_strided_slice %8 {offsets = [0, 0, 24], sizes = [2, 8, 4], strides = [1, 1, 1]} : vector<2x8x32xf32> to vector<2x8x4xf32>
    %225 = arith.truncf %224 : vector<2x8x4xf32> to vector<2x8x4xbf16>
    "tpu.trace_start"() <{level = 10 : i32, message = "bqd,bkd->bqk"}> : () -> ()
    %cst_62 = arith.constant dense<0.000000e+00> : vector<2x8x8xf32>
    %226 = tpu.matmul %221, %223, %cst_62 {dimension_numbers = #tpu.dot_dimension_numbers<[2], [2], [1], [1], [0, 0, 0, 1, 1, 1], [0], [0]>} : vector<2x8x4xbf16>, vector<2x8x4xbf16>, vector<2x8x8xf32> -> vector<2x8x8xf32>
    "tpu.trace_stop"() : () -> ()
    %cst_63 = arith.constant dense<0xFF800000> : vector<2x8xf32>
    %227 = vector.multi_reduction <maximumf>, %226, %cst_63 [2] : vector<2x8x8xf32> to vector<2x8xf32>
    %228 = vector.shape_cast %227 : vector<2x8xf32> to vector<2x8x1xf32>
    %229 = vector.broadcast %228 : vector<2x8x1xf32> to vector<2x8x8xf32>
    %230 = arith.subf %226, %229 : vector<2x8x8xf32>
    %231 = math.exp %230 : vector<2x8x8xf32>
    %cst_64 = arith.constant dense<0.000000e+00> : vector<2x8xf32>
    %232 = vector.multi_reduction <add>, %231, %cst_64 [2] : vector<2x8x8xf32> to vector<2x8xf32>
    %233 = vector.shape_cast %232 : vector<2x8xf32> to vector<2x8x1xf32>
    %234 = vector.broadcast %233 : vector<2x8x1xf32> to vector<2x8x8xf32>
    %235 = arith.divf %231, %234 : vector<2x8x8xf32>
    %cst_65 = arith.constant 0.000000e+00 : f32
    %236 = vector.broadcast %cst_65 : f32 to vector<2x8x8xf32>
    %237 = arith.cmpf oge, %226, %236 : vector<2x8x8xf32>
    %cst_66 = arith.constant 0.00999999977 : f32
    %238 = vector.broadcast %cst_66 : f32 to vector<2x8x8xf32>
    %239 = arith.mulf %238, %226 : vector<2x8x8xf32>
    %240 = arith.select %237, %226, %239 : vector<2x8x8xi1>, vector<2x8x8xf32>
    %c6 = arith.constant 6 : index
    %241 = memref.load %arg3[%c6] : memref<8xf32, #tpu.memory_space<smem>>
    %242 = vector.broadcast %241 : f32 to vector<2x8x8xf32>
    %243 = arith.mulf %242, %235 : vector<2x8x8xf32>
    %c6_67 = arith.constant 6 : index
    %244 = memref.load %arg4[%c6_67] : memref<8xf32, #tpu.memory_space<smem>>
    %245 = vector.broadcast %244 : f32 to vector<2x8x8xf32>
    %246 = arith.mulf %245, %240 : vector<2x8x8xf32>
    %247 = arith.addf %243, %246 : vector<2x8x8xf32>
    %248 = arith.truncf %247 : vector<2x8x8xf32> to vector<2x8x8xbf16>
    "tpu.trace_start"() <{level = 10 : i32, message = "bqk,bkd->bqd"}> : () -> ()
    %cst_68 = arith.constant dense<0.000000e+00> : vector<2x8x4xf32>
    %249 = tpu.matmul %248, %225, %cst_68 {dimension_numbers = #tpu.dot_dimension_numbers<[2], [1], [1], [2], [0, 0, 0, 1, 1, 2], [0], [0]>} : vector<2x8x8xbf16>, vector<2x8x4xbf16>, vector<2x8x4xf32> -> vector<2x8x4xf32>
    "tpu.trace_stop"() : () -> ()
    %250 = vector.shape_cast %249 : vector<2x8x4xf32> to vector<16x4xf32>
    %251 = arith.truncf %250 : vector<16x4xf32> to vector<16x4xbf16>
    %c24 = arith.constant 24 : index
    %c0_69 = arith.constant 0 : index
    %252 = vector.load %arg5[%c24, %c0_69] : memref<32x32xbf16, #tpu.memory_space<vmem>>, vector<4x32xbf16>
    %cst_70 = arith.constant dense<0.000000e+00> : vector<16x32xf32>
    %253 = tpu.matmul %251, %252, %cst_70 {dimension_numbers = #tpu.dot_dimension_numbers<[1], [0], [0], [1], [0, 0, 1, 1], [], []>} : vector<16x4xbf16>, vector<4x32xbf16>, vector<16x32xf32> -> vector<16x32xf32>
    %254 = arith.addf %219, %253 : vector<16x32xf32>
    %255 = vector.extract_strided_slice %6 {offsets = [0, 0, 28], sizes = [2, 8, 4], strides = [1, 1, 1]} : vector<2x8x32xf32> to vector<2x8x4xf32>
    %256 = arith.truncf %255 : vector<2x8x4xf32> to vector<2x8x4xbf16>
    %257 = vector.extract_strided_slice %7 {offsets = [0, 0, 28], sizes = [2, 8, 4], strides = [1, 1, 1]} : vector<2x8x32xf32> to vector<2x8x4xf32>
    %258 = arith.truncf %257 : vector<2x8x4xf32> to vector<2x8x4xbf16>
    %259 = vector.extract_strided_slice %8 {offsets = [0, 0, 28], sizes = [2, 8, 4], strides = [1, 1, 1]} : vector<2x8x32xf32> to vector<2x8x4xf32>
    %260 = arith.truncf %259 : vector<2x8x4xf32> to vector<2x8x4xbf16>
    "tpu.trace_start"() <{level = 10 : i32, message = "bqd,bkd->bqk"}> : () -> ()
    %cst_71 = arith.constant dense<0.000000e+00> : vector<2x8x8xf32>
    %261 = tpu.matmul %256, %258, %cst_71 {dimension_numbers = #tpu.dot_dimension_numbers<[2], [2], [1], [1], [0, 0, 0, 1, 1, 1], [0], [0]>} : vector<2x8x4xbf16>, vector<2x8x4xbf16>, vector<2x8x8xf32> -> vector<2x8x8xf32>
    "tpu.trace_stop"() : () -> ()
    %cst_72 = arith.constant dense<0xFF800000> : vector<2x8xf32>
    %262 = vector.multi_reduction <maximumf>, %261, %cst_72 [2] : vector<2x8x8xf32> to vector<2x8xf32>
    %263 = vector.shape_cast %262 : vector<2x8xf32> to vector<2x8x1xf32>
    %264 = vector.broadcast %263 : vector<2x8x1xf32> to vector<2x8x8xf32>
    %265 = arith.subf %261, %264 : vector<2x8x8xf32>
    %266 = math.exp %265 : vector<2x8x8xf32>
    %cst_73 = arith.constant dense<0.000000e+00> : vector<2x8xf32>
    %267 = vector.multi_reduction <add>, %266, %cst_73 [2] : vector<2x8x8xf32> to vector<2x8xf32>
    %268 = vector.shape_cast %267 : vector<2x8xf32> to vector<2x8x1xf32>
    %269 = vector.broadcast %268 : vector<2x8x1xf32> to vector<2x8x8xf32>
    %270 = arith.divf %266, %269 : vector<2x8x8xf32>
    %cst_74 = arith.constant 0.000000e+00 : f32
    %271 = vector.broadcast %cst_74 : f32 to vector<2x8x8xf32>
    %272 = arith.cmpf oge, %261, %271 : vector<2x8x8xf32>
    %cst_75 = arith.constant 0.00999999977 : f32
    %273 = vector.broadcast %cst_75 : f32 to vector<2x8x8xf32>
    %274 = arith.mulf %273, %261 : vector<2x8x8xf32>
    %275 = arith.select %272, %261, %274 : vector<2x8x8xi1>, vector<2x8x8xf32>
    %c7 = arith.constant 7 : index
    %276 = memref.load %arg3[%c7] : memref<8xf32, #tpu.memory_space<smem>>
    %277 = vector.broadcast %276 : f32 to vector<2x8x8xf32>
    %278 = arith.mulf %277, %270 : vector<2x8x8xf32>
    %c7_76 = arith.constant 7 : index
    %279 = memref.load %arg4[%c7_76] : memref<8xf32, #tpu.memory_space<smem>>
    %280 = vector.broadcast %279 : f32 to vector<2x8x8xf32>
    %281 = arith.mulf %280, %275 : vector<2x8x8xf32>
    %282 = arith.addf %278, %281 : vector<2x8x8xf32>
    %283 = arith.truncf %282 : vector<2x8x8xf32> to vector<2x8x8xbf16>
    "tpu.trace_start"() <{level = 10 : i32, message = "bqk,bkd->bqd"}> : () -> ()
    %cst_77 = arith.constant dense<0.000000e+00> : vector<2x8x4xf32>
    %284 = tpu.matmul %283, %260, %cst_77 {dimension_numbers = #tpu.dot_dimension_numbers<[2], [1], [1], [2], [0, 0, 0, 1, 1, 2], [0], [0]>} : vector<2x8x8xbf16>, vector<2x8x4xbf16>, vector<2x8x4xf32> -> vector<2x8x4xf32>
    "tpu.trace_stop"() : () -> ()
    %285 = vector.shape_cast %284 : vector<2x8x4xf32> to vector<16x4xf32>
    %286 = arith.truncf %285 : vector<16x4xf32> to vector<16x4xbf16>
    %c28 = arith.constant 28 : index
    %c0_78 = arith.constant 0 : index
    %287 = vector.load %arg5[%c28, %c0_78] : memref<32x32xbf16, #tpu.memory_space<vmem>>, vector<4x32xbf16>
    %cst_79 = arith.constant dense<0.000000e+00> : vector<16x32xf32>
    %288 = tpu.matmul %286, %287, %cst_79 {dimension_numbers = #tpu.dot_dimension_numbers<[1], [0], [0], [1], [0, 0, 1, 1], [], []>} : vector<16x4xbf16>, vector<4x32xbf16>, vector<16x32xf32> -> vector<16x32xf32>
    %289 = arith.addf %254, %288 : vector<16x32xf32>
    %c0_80 = arith.constant 0 : index
    %c0_81 = arith.constant 0 : index
    %290 = vector.load %arg6[%c0_80, %c0_81] : memref<1x32xf32, #tpu.memory_space<vmem>>, vector<1x32xf32>
    %291 = vector.broadcast %290 : vector<1x32xf32> to vector<16x32xf32>
    %292 = arith.addf %289, %291 : vector<16x32xf32>
    %c0_82 = arith.constant 0 : index
    %c0_83 = arith.constant 0 : index
    %293 = vector.load %arg7[%c0_82, %c0_83] : memref<16x32xf32, #tpu.memory_space<vmem>>, vector<16x32xf32>
    tpu.vector_store %arg7[%c0_82, %c0_83], %292 {strides = array<i32>} : memref<16x32xf32, #tpu.memory_space<vmem>>, vector<16x32xf32>,
    return
  }
  func.func @transform_0(%arg0: i32) -> (i32, i32) {
    %c0_i32 = arith.constant 0 : i32
    %c0_i32_0 = arith.constant 0 : i32
    return %arg0, %c0_i32 : i32, i32
  }
  func.func @transform_1(%arg0: i32) -> (i32, i32) {
    %c0_i32 = arith.constant 0 : i32
    %c0_i32_0 = arith.constant 0 : i32
    %c0_i32_1 = arith.constant 0 : i32
    return %c0_i32, %c0_i32_0 : i32, i32
  }
  func.func @transform_2(%arg0: i32) -> i32 {
    %c0_i32 = arith.constant 0 : i32
    %c0_i32_0 = arith.constant 0 : i32
    return %c0_i32 : i32
  }
  func.func @transform_3(%arg0: i32) -> i32 {
    %c0_i32 = arith.constant 0 : i32
    %c0_i32_0 = arith.constant 0 : i32
    return %c0_i32 : i32
  }
  func.func @transform_4(%arg0: i32) -> (i32, i32) {
    %c0_i32 = arith.constant 0 : i32
    %c0_i32_0 = arith.constant 0 : i32
    %c0_i32_1 = arith.constant 0 : i32
    return %c0_i32, %c0_i32_0 : i32, i32
  }
  func.func @transform_5(%arg0: i32) -> (i32, i32) {
    %c0_i32 = arith.constant 0 : i32
    %c0_i32_0 = arith.constant 0 : i32
    %c0_i32_1 = arith.constant 0 : i32
    return %c0_i32, %c0_i32_0 : i32, i32
  }
  func.func @transform_6(%arg0: i32) -> (i32, i32) {
    %c0_i32 = arith.constant 0 : i32
    %c0_i32_0 = arith.constant 0 : i32
    return %arg0, %c0_i32 : i32, i32
  }
}

</mosaic_0001>

<llo_original>
// kernel: tpu_custom_call.1
$region0: #{tpu_custom_call.1}
  #allocation0 [shape = 'u32[]', space=smem, size = 0x4, offset = 0x4, fixed_abs, tag = 'smem constant byte address 0x4 - core index']
  #allocation1 [shape = 'u32[144,128]{1,0:T(1,128)}', space=vmem, size = 0x12000, scoped, tag = 'internal scratch']
  %s0 = inlined_call_operand.hbm [shape: bf16[16,32], index: 0, kind: input, shape index: {}]
  %s1 = inlined_call_operand.hbm [shape: bf16[32,96], index: 1, kind: input, shape index: {}]
  %s2 = inlined_call_operand.vmem [shape: f32[8], index: 2, kind: input, shape index: {}]
  %s3 = inlined_call_operand.vmem [shape: f32[8], index: 3, kind: input, shape index: {}]
  %s4 = inlined_call_operand.hbm [shape: bf16[32,32], index: 4, kind: input, shape index: {}]
  %s5 = inlined_call_operand.vmem [shape: f32[1,32], index: 5, kind: input, shape index: {}]
  %s6 = inlined_call_operand.hbm [shape: f32[16,32], index: 6, kind: output, shape index: {}]
  %s7 = sld [smem:[#allocation0]]
  $region54: #{tpu_custom_call.1} parent=0
    _
  %s9 = ssub.s32 1, %s7
  %s10 = scalar_select 0, %s9, %s7
  $region1: #{tpu_custom_call.1} parent=0
    #allocation2 [shape = 'u8[4096]{0}', space=vmem, size = 0x1000, scoped, tag = 'input window, operand 0, single buffered']
    #allocation3 [shape = 's32[1]{0}', space=sflag, size = 0x4, scoped, tag = 'scoped memory for tpu_custom_call.1']
    #allocation4 [shape = 's32[1]{0}', space=sflag, size = 0x4, scoped, tag = 'scoped memory for tpu_custom_call.1']
    #allocation5 [shape = 's32[1]{0}', space=sflag, size = 0x4, scoped, tag = 'scoped memory for tpu_custom_call.1']
    #allocation6 [shape = 'u8[8192]{0}', space=vmem, size = 0x2000, scoped, tag = 'input window, operand 1, single buffered']
    #allocation7 [shape = 's32[1]{0}', space=sflag, size = 0x4, scoped, tag = 'scoped memory for tpu_custom_call.1']
    #allocation8 [shape = 'u8[512]{0}', space=smem, size = 0x200, scoped, tag = 'input window, operand 2, single buffered']
    #allocation9 [shape = 'u8[512]{0}', space=smem, size = 0x200, scoped, tag = 'input window, operand 3, single buffered']
    #allocation10 [shape = 's32[1]{0}', space=sflag, size = 0x4, scoped, tag = 'scoped memory for tpu_custom_call.1']
    #allocation11 [shape = 'u8[8192]{0}', space=vmem, size = 0x2000, scoped, tag = 'input window, operand 4, single buffered']
    #allocation12 [shape = 'u8[8192]{0}', space=vmem, size = 0x2000, scoped, tag = 'output window, operand 0, single buffered']
    %11 = vsyncpa [#allocation3], 0
    %12 = vsyncpa [#allocation7], 0
    %13 = vsyncpa [#allocation5], 0
    %14 = vsyncpa [#allocation10], 0
    %15 = vsyncpa [#allocation4], 0
    // Predicated region
    $region2: #{tpu_custom_call.1} parent=1 // pred_check
      _
    $region3: #{tpu_custom_call.1} parent=1 // pred_check_branch
      %17 = sbr.rel (0) target = $region5
    $region4: #{tpu_custom_call.1} parent=1 // pred_region
      %s19 = ssub.s32 128, 128
      %20 = vsyncadd [#allocation3], %s19
      %s21 = sshll.u32 [#allocation2], 4
      %s22 = int_to_ptr.vmem [resolvable:$true] %s21
      %27 = dma.hbm_to_vmem [thread:$0]  %s0, 128, %s22, [#allocation3], 64, 64, 4
    $region5: #{tpu_custom_call.1} parent=1 // pred_fallthru
      _
    // Predicated region
    $region6: #{tpu_custom_call.1} parent=1 // pred_check
      _
    $region7: #{tpu_custom_call.1} parent=1 // pred_check_branch
      %29 = sbr.rel (0) target = $region9
    $region8: #{tpu_custom_call.1} parent=1 // pred_region
      %s31 = ssub.s32 256, 256
      %32 = vsyncadd [#allocation7], %s31
      %s33 = sshll.u32 [#allocation6], 4
      %s34 = int_to_ptr.vmem [resolvable:$true] %s33
      %39 = dma.hbm_to_vmem [thread:$0]  %s1, 256, %s34, [#allocation7], 64, 64, 4
    $region9: #{tpu_custom_call.1} parent=1 // pred_fallthru
      _
    // Predicated region
    $region10: #{tpu_custom_call.1} parent=1 // pred_check
      _
    $region11: #{tpu_custom_call.1} parent=1 // pred_check_branch
      %41 = sbr.rel (0) target = $region13
    $region12: #{tpu_custom_call.1} parent=1 // pred_region
      %s43 = ssub.s32 16, 16
      %44 = vsyncadd [#allocation5], %s43
      %s46 = sshll.u32 %s2, 4
      %s47 = int_to_ptr.vmem [resolvable:$true] %s46
      %49 = dma.vmem_to_smem %s47, 16, [#allocation8], [#allocation5]
    $region13: #{tpu_custom_call.1} parent=1 // pred_fallthru
      _
    // Predicated region
    $region14: #{tpu_custom_call.1} parent=1 // pred_check
      _
    $region15: #{tpu_custom_call.1} parent=1 // pred_check_branch
      %51 = sbr.rel (0) target = $region17
    $region16: #{tpu_custom_call.1} parent=1 // pred_region
      %s53 = ssub.s32 16, 16
      %54 = vsyncadd [#allocation10], %s53
      %s56 = sshll.u32 %s3, 4
      %s57 = int_to_ptr.vmem [resolvable:$true] %s56
      %59 = dma.vmem_to_smem %s57, 16, [#allocation9], [#allocation10]
    $region17: #{tpu_custom_call.1} parent=1 // pred_fallthru
      _
    // Predicated region
    $region18: #{tpu_custom_call.1} parent=1 // pred_check
      _
    $region19: #{tpu_custom_call.1} parent=1 // pred_check_branch
      %61 = sbr.rel (0) target = $region21
    $region20: #{tpu_custom_call.1} parent=1 // pred_region
      %s63 = ssub.s32 256, 256
      %64 = vsyncadd [#allocation7], %s63
      %s65 = sshll.u32 [#allocation11], 4
      %s66 = int_to_ptr.vmem [resolvable:$true] %s65
      %71 = dma.hbm_to_vmem [thread:$0]  %s4, 256, %s66, [#allocation7], 64, 64, 4
    $region21: #{tpu_custom_call.1} parent=1 // pred_fallthru
      _
    // Predicated region
    $region22: #{tpu_custom_call.1} parent=1 // pred_check
      _
    $region23: #{tpu_custom_call.1} parent=1 // pred_check_branch
      %73 = sbr.rel (0) target = $region25
    $region24: #{tpu_custom_call.1} parent=1 // pred_region
      _
    $region25: #{tpu_custom_call.1} parent=1 // pred_fallthru
      _
    // Predicated region
    $region26: #{tpu_custom_call.1} parent=1 // pred_check
      _
    $region27: #{tpu_custom_call.1} parent=1 // pred_check_branch
      %75 = sbr.rel (0) target = $region29
    $region28: #{tpu_custom_call.1} parent=1 // pred_region
      %76 = dma.done [#allocation3], 128
    $region29: #{tpu_custom_call.1} parent=1 // pred_fallthru
      _
    // Predicated region
    $region30: #{tpu_custom_call.1} parent=1 // pred_check
      _
    $region31: #{tpu_custom_call.1} parent=1 // pred_check_branch
      %78 = sbr.rel (0) target = $region33
    $region32: #{tpu_custom_call.1} parent=1 // pred_region
      %79 = dma.done [#allocation7], 256
    $region33: #{tpu_custom_call.1} parent=1 // pred_fallthru
      _
    // Predicated region
    $region34: #{tpu_custom_call.1} parent=1 // pred_check
      _
    $region35: #{tpu_custom_call.1} parent=1 // pred_check_branch
      %81 = sbr.rel (0) target = $region37
    $region36: #{tpu_custom_call.1} parent=1 // pred_region
      %82 = dma.done [#allocation5], 16
    $region37: #{tpu_custom_call.1} parent=1 // pred_fallthru
      _
    // Predicated region
    $region38: #{tpu_custom_call.1} parent=1 // pred_check
      _
    $region39: #{tpu_custom_call.1} parent=1 // pred_check_branch
      %84 = sbr.rel (0) target = $region41
    $region40: #{tpu_custom_call.1} parent=1 // pred_region
      %85 = dma.done [#allocation10], 16
    $region41: #{tpu_custom_call.1} parent=1 // pred_fallthru
      _
    // Predicated region
    $region42: #{tpu_custom_call.1} parent=1 // pred_check
      _
    $region43: #{tpu_custom_call.1} parent=1 // pred_check_branch
      %87 = sbr.rel (0) target = $region45
    $region44: #{tpu_custom_call.1} parent=1 // pred_region
      %88 = dma.done [#allocation7], 256
    $region45: #{tpu_custom_call.1} parent=1 // pred_fallthru
      _
    %89 = sfence
    %v91 = vld [vmem:[#allocation2] sm:$0xf]
    %v92 = vld [vmem:[#allocation2 + $0x4] sm:$0xf]
    %v93 = vld [vmem:[#allocation6] sm:$0xf]
    %v94 = vld [vmem:[#allocation6 + $0x4] sm:$0xf]
    %v95 = vld [vmem:[#allocation6 + $0x8] sm:$0xf]
    %v96 = vld [vmem:[#allocation6 + $0xc] sm:$0xf]
    %v99 = vunpack.c.l.b16 %v91
    %v100 = vunpack.c.l.b16 %v92
    %v101 = vpack.c.b16 %v100, %v99
    %v106 = vunpack.c.l.b16 %v93
    %v107 = vunpack.c.l.b16 %v94
    %v108 = vunpack.c.l.b16 %v95
    %v109 = vunpack.c.l.b16 %v96
    %v110 = vpack.c.b16 %v107, %v106
    %v111 = vpack.c.b16 %v109, %v108
    %vm114 = vcmask 261120
    %v116 = vsel %vm114, %v101, 0
    %118 = vmatprep.subr.bf16.mxu0 0
    %119 = vmatpush1.bf16.msra.mxu0 0
    %120 = vmatprep.subr.bf16.mxu0 0
    %121 = vmatpush1.bf16.msra.mxu0 0
    %122 = vmatprep.subr.bf16.mxu0 0
    %123 = vmatpush1.bf16.msra.mxu0 0
    %124 = vmatprep.subr.bf16.mxu0 0
    %125 = vmatpush1.bf16.msra.mxu0 0
    %126 = vmatprep.subr.bf16.mxu0 0
    %127 = vmatpush1.bf16.msra.mxu0 0
    %128 = vmatprep.subr.bf16.mxu0 0
    %129 = vmatpush1.bf16.msra.mxu0 0
    %130 = vmatprep.subr.bf16.mxu0 0
    %131 = vmatpush1.bf16.msra.mxu0 %v111
    %132 = vmatprep.subr.bf16.mxu0 0
    %133 = vmatpush1.bf16.msra.mxu0 %v110
    %134 = vmatprep.subr.bf16.mxu0 0
    %135 = vmatpush2.bf16.msra.mxu0 0
    %136 = vmatprep.subr.bf16.mxu0 0
    %137 = vmatpush2.bf16.msra.mxu0 0
    %138 = vmatprep.subr.bf16.mxu0 0
    %139 = vmatpush2.bf16.msra.mxu0 0
    %140 = vmatprep.subr.bf16.mxu0 0
    %141 = vmatpush2.bf16.msra.mxu0 0
    %142 = vmatprep.subr.bf16.mxu0 0
    %143 = vmatpush2.bf16.msra.mxu0 0
    %144 = vmatprep.subr.bf16.mxu0 0
    %145 = vmatpush2.bf16.msra.mxu0 0
    %146 = vmatprep.subr.bf16.mxu0 0
    %147 = vmatpush2.bf16.msra.mxu0 0
    %148 = vmatprep.subr.bf16.mxu0 0
    %149 = vmatpush2.bf16.msra.mxu0 0
    %150 = vmatprep.mubr.bf16.mxu0 0
    %151 = vmatmul.mubr.bf16.gmra.mxu0 %v116
    %v152 = vpop.f32.mrf.mxu0
    %v153 = vadd.f32 0.0, %v152
    %v154 = vpop.f32.mrf.mxu0
    %v155 = vpop.f32.mrf.mxu0
    %v156 = vadd.f32 0.0, %v155
    %v157 = vpop.f32.mrf.mxu0
    %158 = vdwg.mxu0
    %v159 = vmul.f32 %v153, 0.5
    %v160 = vmul.f32 %v156, 0.5
    %v161 = vpack.c.bf16 %v159, %v159
    %v162 = vpack.c.bf16 %v160, %v160
    %v163 = vpack.c.bf16 %v153, %v153
    %v164 = vpack.c.bf16 %v156, %v156
    %166 = vrot.lane.b32.xlu0 %v163, 96
    %v167 = vpop.permute.xlu0 %166
    %vm168 = vcmask 31744
    %v170 = vsel %vm168, %v161, 0
    %v173 = vsel %vm168, %v167, 0
    %175 = vmatprep.subr.bf16.mxu0 0
    %176 = vmatpush1.bf16.xpose.msra.mxu0 0
    %177 = vmatprep.subr.bf16.mxu0 0
    %178 = vmatpush1.bf16.xpose.msra.mxu0 0
    %179 = vmatprep.subr.bf16.mxu0 0
    %180 = vmatpush1.bf16.xpose.msra.mxu0 0
    %181 = vmatprep.subr.bf16.mxu0 0
    %182 = vmatpush1.bf16.xpose.msra.mxu0 0
    %183 = vmatprep.subr.bf16.mxu0 0
    %184 = vmatpush1.bf16.xpose.msra.mxu0 0
    %185 = vmatprep.subr.bf16.mxu0 0
    %186 = vmatpush1.bf16.xpose.msra.mxu0 0
    %187 = vmatprep.subr.bf16.mxu0 0
    %188 = vmatpush1.bf16.xpose.msra.mxu0 0
    %189 = vmatprep.subr.bf16.mxu0 0
    %190 = vmatpush1.bf16.xpose.msra.mxu0 %v173
    %191 = vmatprep.subr.bf16.mxu0 0
    %192 = vmatpush2.bf16.xpose.msra.mxu0 0
    %193 = vmatprep.subr.bf16.mxu0 0
    %194 = vmatpush2.bf16.xpose.msra.mxu0 0
    %195 = vmatprep.subr.bf16.mxu0 0
    %196 = vmatpush2.bf16.xpose.msra.mxu0 0
    %197 = vmatprep.subr.bf16.mxu0 0
    %198 = vmatpush2.bf16.xpose.msra.mxu0 0
    %199 = vmatprep.subr.bf16.mxu0 0
    %200 = vmatpush2.bf16.xpose.msra.mxu0 0
    %201 = vmatprep.subr.bf16.mxu0 0
    %202 = vmatpush2.bf16.xpose.msra.mxu0 0
    %203 = vmatprep.subr.bf16.mxu0 0
    %204 = vmatpush2.bf16.xpose.msra.mxu0 0
    %205 = vmatprep.subr.bf16.mxu0 0
    %206 = vmatpush2.bf16.xpose.msra.mxu0 0
    %207 = vmatprep.mubr.bf16.mxu0 0
    %208 = vmatmul.mubr.bf16.gmra.mxu0 %v170
    %v209 = vpop.f32.mrf.mxu0
    %v210 = vadd.f32 0.0, %v209
    %v211 = vpop.f32.mrf.mxu0
    %v212 = vpop.f32.mrf.mxu0
    %v213 = vpop.f32.mrf.mxu0
    %214 = vdwg.mxu0
    %216 = vrot.lane.b32.xlu0 %v164, 96
    %v217 = vpop.permute.xlu0 %216
    %v219 = vsel %vm168, %v162, 0
    %v222 = vsel %vm168, %v217, 0
    %224 = vmatprep.subr.bf16.mxu0 0
    %225 = vmatpush1.bf16.xpose.msra.mxu0 0
    %226 = vmatprep.subr.bf16.mxu0 0
    %227 = vmatpush1.bf16.xpose.msra.mxu0 0
    %228 = vmatprep.subr.bf16.mxu0 0
    %229 = vmatpush1.bf16.xpose.msra.mxu0 0
    %230 = vmatprep.subr.bf16.mxu0 0
    %231 = vmatpush1.bf16.xpose.msra.mxu0 0
    %232 = vmatprep.subr.bf16.mxu0 0
    %233 = vmatpush1.bf16.xpose.msra.mxu0 0
    %234 = vmatprep.subr.bf16.mxu0 0
    %235 = vmatpush1.bf16.xpose.msra.mxu0 0
    %236 = vmatprep.subr.bf16.mxu0 0
    %237 = vmatpush1.bf16.xpose.msra.mxu0 0
    %238 = vmatprep.subr.bf16.mxu0 0
    %239 = vmatpush1.bf16.xpose.msra.mxu0 %v222
    %240 = vmatprep.subr.bf16.mxu0 0
    %241 = vmatpush2.bf16.xpose.msra.mxu0 0
    %242 = vmatprep.subr.bf16.mxu0 0
    %243 = vmatpush2.bf16.xpose.msra.mxu0 0
    %244 = vmatprep.subr.bf16.mxu0 0
    %245 = vmatpush2.bf16.xpose.msra.mxu0 0
    %246 = vmatprep.subr.bf16.mxu0 0
    %247 = vmatpush2.bf16.xpose.msra.mxu0 0
    %248 = vmatprep.subr.bf16.mxu0 0
    %249 = vmatpush2.bf16.xpose.msra.mxu0 0
    %250 = vmatprep.subr.bf16.mxu0 0
    %251 = vmatpush2.bf16.xpose.msra.mxu0 0
    %252 = vmatprep.subr.bf16.mxu0 0
    %253 = vmatpush2.bf16.xpose.msra.mxu0 0
    %254 = vmatprep.subr.bf16.mxu0 0
    %255 = vmatpush2.bf16.xpose.msra.mxu0 0
    %256 = vmatprep.mubr.bf16.mxu0 0
    %257 = vmatmul.mubr.bf16.gmra.mxu0 %v219
    %v258 = vpop.f32.mrf.mxu0
    %v259 = vadd.f32 0.0, %v258
    %v260 = vpop.f32.mrf.mxu0
    %v261 = vpop.f32.mrf.mxu0
    %v262 = vpop.f32.mrf.mxu0
    %263 = vdwg.mxu0
    %vm264 = vcmask 64512
    %v265 = vsel %vm264, %v210, -inf
    %266 = vmax.xlane.f32.xlu0 %v265
    %v267 = vpop.xlane.xlu0 %266
    %v268 = vsel %vm264, %v259, -inf
    %269 = vmax.xlane.f32.xlu0 %v268
    %v270 = vpop.xlane.xlu0 %269
    %v271 = vsub.f32 %v210, %v267
    %v272 = vsub.f32 %v259, %v270
    %v273 = vmul.f32 %v271, 1.442695
    %v274 = vpow.pop %v273
    %v275 = vmul.f32 %v272, 1.442695
    %v276 = vpow.pop %v275
    %v277 = vsel %vm264, %v274, 0.0
    %278 = vadd.xlane.f32.xlu0 %v277
    %v279 = vpop.xlane.xlu0 %278
    %v280 = vsel %vm264, %v276, 0.0
    %281 = vadd.xlane.f32.xlu0 %v280
    %v282 = vpop.xlane.xlu0 %281
    %v283 = vrcp.pop %v279
    %v284 = vmul.f32 %v274, %v283
    %v285 = vrcp.pop %v282
    %v286 = vmul.f32 %v276, %v285
    %vm287 = vcmp.ge.f32.partialorder %v210, 0.0
    %vm288 = vcmp.ge.f32.partialorder %v259, 0.0
    %v289 = vmul.f32 %v210, 0.01
    %v290 = vmul.f32 %v259, 0.01
    %v291 = vsel %vm287, %v210, %v289
    %v292 = vsel %vm288, %v259, %v290
    %s293 = sld [smem:[#allocation8]]
    %v294 = vstv %s293
    %v295 = vmul.f32 %v294, %v284
    %v296 = vmul.f32 %v294, %v286
    %s297 = sld [smem:[#allocation9]]
    %v298 = vstv %s297
    %v299 = vmul.f32 %v298, %v291
    %v300 = vmul.f32 %v298, %v292
    %v301 = vadd.f32 %v295, %v299
    %v302 = vadd.f32 %v296, %v300
    %v303 = vpack.c.bf16 %v301, %v301
    %v304 = vpack.c.bf16 %v302, %v302
    %305 = vrot.lane.b32.xlu0 %v163, 64
    %v306 = vpop.permute.xlu0 %305
    %v308 = vsel %vm264, %v303, 0
    %vm310 = vcmask 1043456
    %v312 = vsel %vm310, %v306, 0
    %314 = vmatprep.subr.bf16.mxu0 0
    %315 = vmatpush1.bf16.msra.mxu0 0
    %316 = vmatprep.subr.bf16.mxu0 0
    %317 = vmatpush1.bf16.msra.mxu0 0
    %318 = vmatprep.subr.bf16.mxu0 0
    %319 = vmatpush1.bf16.msra.mxu0 0
    %320 = vmatprep.subr.bf16.mxu0 0
    %321 = vmatpush1.bf16.msra.mxu0 0
    %322 = vmatprep.subr.bf16.mxu0 0
    %323 = vmatpush1.bf16.msra.mxu0 0
    %324 = vmatprep.subr.bf16.mxu0 0
    %325 = vmatpush1.bf16.msra.mxu0 0
    %326 = vmatprep.subr.bf16.mxu0 0
    %327 = vmatpush1.bf16.msra.mxu0 0
    %328 = vmatprep.subr.bf16.mxu0 0
    %329 = vmatpush1.bf16.msra.mxu0 %v312
    %330 = vmatprep.subr.bf16.mxu0 0
    %331 = vmatpush2.bf16.msra.mxu0 0
    %332 = vmatprep.subr.bf16.mxu0 0
    %333 = vmatpush2.bf16.msra.mxu0 0
    %334 = vmatprep.subr.bf16.mxu0 0
    %335 = vmatpush2.bf16.msra.mxu0 0
    %336 = vmatprep.subr.bf16.mxu0 0
    %337 = vmatpush2.bf16.msra.mxu0 0
    %338 = vmatprep.subr.bf16.mxu0 0
    %339 = vmatpush2.bf16.msra.mxu0 0
    %340 = vmatprep.subr.bf16.mxu0 0
    %341 = vmatpush2.bf16.msra.mxu0 0
    %342 = vmatprep.subr.bf16.mxu0 0
    %343 = vmatpush2.bf16.msra.mxu0 0
    %344 = vmatprep.subr.bf16.mxu0 0
    %345 = vmatpush2.bf16.msra.mxu0 0
    %346 = vmatprep.mubr.bf16.mxu0 0
    %347 = vmatmul.mubr.bf16.gmra.mxu0 %v308
    %v348 = vpop.f32.mrf.mxu0
    %v349 = vadd.f32 0.0, %v348
    %v350 = vpop.f32.mrf.mxu0
    %v351 = vpop.f32.mrf.mxu0
    %v352 = vpop.f32.mrf.mxu0
    %353 = vdwg.mxu0
    %354 = vrot.lane.b32.xlu0 %v164, 64
    %v355 = vpop.permute.xlu0 %354
    %v357 = vsel %vm264, %v304, 0
    %v360 = vsel %vm310, %v355, 0
    %362 = vmatprep.subr.bf16.mxu0 0
    %363 = vmatpush1.bf16.msra.mxu0 0
    %364 = vmatprep.subr.bf16.mxu0 0
    %365 = vmatpush1.bf16.msra.mxu0 0
    %366 = vmatprep.subr.bf16.mxu0 0
    %367 = vmatpush1.bf16.msra.mxu0 0
    %368 = vmatprep.subr.bf16.mxu0 0
    %369 = vmatpush1.bf16.msra.mxu0 0
    %370 = vmatprep.subr.bf16.mxu0 0
    %371 = vmatpush1.bf16.msra.mxu0 0
    %372 = vmatprep.subr.bf16.mxu0 0
    %373 = vmatpush1.bf16.msra.mxu0 0
    %374 = vmatprep.subr.bf16.mxu0 0
    %375 = vmatpush1.bf16.msra.mxu0 0
    %376 = vmatprep.subr.bf16.mxu0 0
    %377 = vmatpush1.bf16.msra.mxu0 %v360
    %378 = vmatprep.subr.bf16.mxu0 0
    %379 = vmatpush2.bf16.msra.mxu0 0
    %380 = vmatprep.subr.bf16.mxu0 0
    %381 = vmatpush2.bf16.msra.mxu0 0
    %382 = vmatprep.subr.bf16.mxu0 0
    %383 = vmatpush2.bf16.msra.mxu0 0
    %384 = vmatprep.subr.bf16.mxu0 0
    %385 = vmatpush2.bf16.msra.mxu0 0
    %386 = vmatprep.subr.bf16.mxu0 0
    %387 = vmatpush2.bf16.msra.mxu0 0
    %388 = vmatprep.subr.bf16.mxu0 0
    %389 = vmatpush2.bf16.msra.mxu0 0
    %390 = vmatprep.subr.bf16.mxu0 0
    %391 = vmatpush2.bf16.msra.mxu0 0
    %392 = vmatprep.subr.bf16.mxu0 0
    %393 = vmatpush2.bf16.msra.mxu0 0
    %394 = vmatprep.mubr.bf16.mxu0 0
    %395 = vmatmul.mubr.bf16.gmra.mxu0 %v357
    %v396 = vpop.f32.mrf.mxu0
    %v397 = vadd.f32 0.0, %v396
    %v398 = vpop.f32.mrf.mxu0
    %v399 = vpop.f32.mrf.mxu0
    %v400 = vpop.f32.mrf.mxu0
    %401 = vdwg.mxu0
    %v402 = vpack.c.bf16 %v397, %v349
    %v403 = vld [vmem:[#allocation11] sm:$0x3]
    %405 = vrot.lane.b32.xlu0 %v161, 124
    %v406 = vpop.permute.xlu0 %405
    %407 = vrot.lane.b32.xlu0 %v163, 92
    %v408 = vpop.permute.xlu0 %407
    %v410 = vsel %vm168, %v406, 0
    %v413 = vsel %vm168, %v408, 0
    %415 = vmatprep.subr.bf16.mxu0 0
    %416 = vmatpush1.bf16.xpose.msra.mxu0 0
    %417 = vmatprep.subr.bf16.mxu0 0
    %418 = vmatpush1.bf16.xpose.msra.mxu0 0
    %419 = vmatprep.subr.bf16.mxu0 0
    %420 = vmatpush1.bf16.xpose.msra.mxu0 0
    %421 = vmatprep.subr.bf16.mxu0 0
    %422 = vmatpush1.bf16.xpose.msra.mxu0 0
    %423 = vmatprep.subr.bf16.mxu0 0
    %424 = vmatpush1.bf16.xpose.msra.mxu0 0
    %425 = vmatprep.subr.bf16.mxu0 0
    %426 = vmatpush1.bf16.xpose.msra.mxu0 0
    %427 = vmatprep.subr.bf16.mxu0 0
    %428 = vmatpush1.bf16.xpose.msra.mxu0 0
    %429 = vmatprep.subr.bf16.mxu0 0
    %430 = vmatpush1.bf16.xpose.msra.mxu0 %v413
    %431 = vmatprep.subr.bf16.mxu0 0
    %432 = vmatpush2.bf16.xpose.msra.mxu0 0
    %433 = vmatprep.subr.bf16.mxu0 0
    %434 = vmatpush2.bf16.xpose.msra.mxu0 0
    %435 = vmatprep.subr.bf16.mxu0 0
    %436 = vmatpush2.bf16.xpose.msra.mxu0 0
    %437 = vmatprep.subr.bf16.mxu0 0
    %438 = vmatpush2.bf16.xpose.msra.mxu0 0
    %439 = vmatprep.subr.bf16.mxu0 0
    %440 = vmatpush2.bf16.xpose.msra.mxu0 0
    %441 = vmatprep.subr.bf16.mxu0 0
    %442 = vmatpush2.bf16.xpose.msra.mxu0 0
    %443 = vmatprep.subr.bf16.mxu0 0
    %444 = vmatpush2.bf16.xpose.msra.mxu0 0
    %445 = vmatprep.subr.bf16.mxu0 0
    %446 = vmatpush2.bf16.xpose.msra.mxu0 0
    %447 = vmatprep.mubr.bf16.mxu0 0
    %448 = vmatmul.mubr.bf16.gmra.mxu0 %v410
    %v449 = vpop.f32.mrf.mxu0
    %v450 = vadd.f32 0.0, %v449
    %v451 = vpop.f32.mrf.mxu0
    %v452 = vpop.f32.mrf.mxu0
    %v453 = vpop.f32.mrf.mxu0
    %454 = vdwg.mxu0
    %456 = vrot.lane.b32.xlu0 %v162, 124
    %v457 = vpop.permute.xlu0 %456
    %458 = vrot.lane.b32.xlu0 %v164, 92
    %v459 = vpop.permute.xlu0 %458
    %v461 = vsel %vm168, %v457, 0
    %v464 = vsel %vm168, %v459, 0
    %466 = vmatprep.subr.bf16.mxu0 0
    %467 = vmatpush1.bf16.xpose.msra.mxu0 0
    %468 = vmatprep.subr.bf16.mxu0 0
    %469 = vmatpush1.bf16.xpose.msra.mxu0 0
    %470 = vmatprep.subr.bf16.mxu0 0
    %471 = vmatpush1.bf16.xpose.msra.mxu0 0
    %472 = vmatprep.subr.bf16.mxu0 0
    %473 = vmatpush1.bf16.xpose.msra.mxu0 0
    %474 = vmatprep.subr.bf16.mxu0 0
    %475 = vmatpush1.bf16.xpose.msra.mxu0 0
    %476 = vmatprep.subr.bf16.mxu0 0
    %477 = vmatpush1.bf16.xpose.msra.mxu0 0
    %478 = vmatprep.subr.bf16.mxu0 0
    %479 = vmatpush1.bf16.xpose.msra.mxu0 0
    %480 = vmatprep.subr.bf16.mxu0 0
    %481 = vmatpush1.bf16.xpose.msra.mxu0 %v464
    %482 = vmatprep.subr.bf16.mxu0 0
    %483 = vmatpush2.bf16.xpose.msra.mxu0 0
    %484 = vmatprep.subr.bf16.mxu0 0
    %485 = vmatpush2.bf16.xpose.msra.mxu0 0
    %486 = vmatprep.subr.bf16.mxu0 0
    %487 = vmatpush2.bf16.xpose.msra.mxu0 0
    %488 = vmatprep.subr.bf16.mxu0 0
    %489 = vmatpush2.bf16.xpose.msra.mxu0 0
    %490 = vmatprep.subr.bf16.mxu0 0
    %491 = vmatpush2.bf16.xpose.msra.mxu0 0
    %492 = vmatprep.subr.bf16.mxu0 0
    %493 = vmatpush2.bf16.xpose.msra.mxu0 0
    %494 = vmatprep.subr.bf16.mxu0 0
    %495 = vmatpush2.bf16.xpose.msra.mxu0 0
    %496 = vmatprep.subr.bf16.mxu0 0
    %497 = vmatpush2.bf16.xpose.msra.mxu0 0
    %498 = vmatprep.mubr.bf16.mxu0 0
    %499 = vmatmul.mubr.bf16.gmra.mxu0 %v461
    %v500 = vpop.f32.mrf.mxu0
    %v501 = vadd.f32 0.0, %v500
    %v502 = vpop.f32.mrf.mxu0
    %v503 = vpop.f32.mrf.mxu0
    %v504 = vpop.f32.mrf.mxu0
    %505 = vdwg.mxu0
    %v506 = vsel %vm264, %v450, -inf
    %507 = vmax.xlane.f32.xlu0 %v506
    %v508 = vpop.xlane.xlu0 %507
    %v509 = vsel %vm264, %v501, -inf
    %510 = vmax.xlane.f32.xlu0 %v509
    %v511 = vpop.xlane.xlu0 %510
    %v512 = vsub.f32 %v450, %v508
    %v513 = vsub.f32 %v501, %v511
    %v514 = vmul.f32 %v512, 1.442695
    %v515 = vpow.pop %v514
    %v516 = vmul.f32 %v513, 1.442695
    %v517 = vpow.pop %v516
    %v518 = vsel %vm264, %v515, 0.0
    %519 = vadd.xlane.f32.xlu0 %v518
    %v520 = vpop.xlane.xlu0 %519
    %v521 = vsel %vm264, %v517, 0.0
    %522 = vadd.xlane.f32.xlu0 %v521
    %v523 = vpop.xlane.xlu0 %522
    %v524 = vrcp.pop %v520
    %v525 = vmul.f32 %v515, %v524
    %v526 = vrcp.pop %v523
    %v527 = vmul.f32 %v517, %v526
    %vm528 = vcmp.ge.f32.partialorder %v450, 0.0
    %vm529 = vcmp.ge.f32.partialorder %v501, 0.0
    %v530 = vmul.f32 %v450, 0.01
    %v531 = vmul.f32 %v501, 0.01
    %v532 = vsel %vm528, %v450, %v530
    %v533 = vsel %vm529, %v501, %v531
    %s534 = sld [smem:[#allocation8 + $0x1]]
    %v535 = vstv %s534
    %v536 = vmul.f32 %v535, %v525
    %v537 = vmul.f32 %v535, %v527
    %s538 = sld [smem:[#allocation9 + $0x1]]
    %v539 = vstv %s538
    %v540 = vmul.f32 %v539, %v532
    %v541 = vmul.f32 %v539, %v533
    %v542 = vadd.f32 %v536, %v540
    %v543 = vadd.f32 %v537, %v541
    %v544 = vpack.c.bf16 %v542, %v542
    %v545 = vpack.c.bf16 %v543, %v543
    %546 = vrot.lane.b32.xlu0 %v163, 60
    %v547 = vpop.permute.xlu0 %546
    %v549 = vsel %vm264, %v544, 0
    %v552 = vsel %vm310, %v547, 0
    %554 = vmatprep.subr.bf16.mxu0 0
    %555 = vmatpush1.bf16.msra.mxu0 0
    %556 = vmatprep.subr.bf16.mxu0 0
    %557 = vmatpush1.bf16.msra.mxu0 0
    %558 = vmatprep.subr.bf16.mxu0 0
    %559 = vmatpush1.bf16.msra.mxu0 0
    %560 = vmatprep.subr.bf16.mxu0 0
    %561 = vmatpush1.bf16.msra.mxu0 0
    %562 = vmatprep.subr.bf16.mxu0 0
    %563 = vmatpush1.bf16.msra.mxu0 0
    %564 = vmatprep.subr.bf16.mxu0 0
    %565 = vmatpush1.bf16.msra.mxu0 0
    %566 = vmatprep.subr.bf16.mxu0 0
    %567 = vmatpush1.bf16.msra.mxu0 0
    %568 = vmatprep.subr.bf16.mxu0 0
    %569 = vmatpush1.bf16.msra.mxu0 %v552
    %570 = vmatprep.subr.bf16.mxu0 0
    %571 = vmatpush2.bf16.msra.mxu0 0
    %572 = vmatprep.subr.bf16.mxu0 0
    %573 = vmatpush2.bf16.msra.mxu0 0
    %574 = vmatprep.subr.bf16.mxu0 0
    %575 = vmatpush2.bf16.msra.mxu0 0
    %576 = vmatprep.subr.bf16.mxu0 0
    %577 = vmatpush2.bf16.msra.mxu0 0
    %578 = vmatprep.subr.bf16.mxu0 0
    %579 = vmatpush2.bf16.msra.mxu0 0
    %580 = vmatprep.subr.bf16.mxu0 0
    %581 = vmatpush2.bf16.msra.mxu0 0
    %582 = vmatprep.subr.bf16.mxu0 0
    %583 = vmatpush2.bf16.msra.mxu0 0
    %584 = vmatprep.subr.bf16.mxu0 0
    %585 = vmatpush2.bf16.msra.mxu0 0
    %586 = vmatprep.mubr.bf16.mxu0 0
    %587 = vmatmul.mubr.bf16.gmra.mxu0 %v549
    %v588 = vpop.f32.mrf.mxu0
    %v589 = vadd.f32 0.0, %v588
    %v590 = vpop.f32.mrf.mxu0
    %v591 = vpop.f32.mrf.mxu0
    %v592 = vpop.f32.mrf.mxu0
    %593 = vdwg.mxu0
    %594 = vrot.lane.b32.xlu0 %v164, 60
    %v595 = vpop.permute.xlu0 %594
    %v597 = vsel %vm264, %v545, 0
    %v600 = vsel %vm310, %v595, 0
    %602 = vmatprep.subr.bf16.mxu0 0
    %603 = vmatpush1.bf16.msra.mxu0 0
    %604 = vmatprep.subr.bf16.mxu0 0
    %605 = vmatpush1.bf16.msra.mxu0 0
    %606 = vmatprep.subr.bf16.mxu0 0
    %607 = vmatpush1.bf16.msra.mxu0 0
    %608 = vmatprep.subr.bf16.mxu0 0
    %609 = vmatpush1.bf16.msra.mxu0 0
    %610 = vmatprep.subr.bf16.mxu0 0
    %611 = vmatpush1.bf16.msra.mxu0 0
    %612 = vmatprep.subr.bf16.mxu0 0
    %613 = vmatpush1.bf16.msra.mxu0 0
    %614 = vmatprep.subr.bf16.mxu0 0
    %615 = vmatpush1.bf16.msra.mxu0 0
    %616 = vmatprep.subr.bf16.mxu0 0
    %617 = vmatpush1.bf16.msra.mxu0 %v600
    %618 = vmatprep.subr.bf16.mxu0 0
    %619 = vmatpush2.bf16.msra.mxu0 0
    %620 = vmatprep.subr.bf16.mxu0 0
    %621 = vmatpush2.bf16.msra.mxu0 0
    %622 = vmatprep.subr.bf16.mxu0 0
    %623 = vmatpush2.bf16.msra.mxu0 0
    %624 = vmatprep.subr.bf16.mxu0 0
    %625 = vmatpush2.bf16.msra.mxu0 0
    %626 = vmatprep.subr.bf16.mxu0 0
    %627 = vmatpush2.bf16.msra.mxu0 0
    %628 = vmatprep.subr.bf16.mxu0 0
    %629 = vmatpush2.bf16.msra.mxu0 0
    %630 = vmatprep.subr.bf16.mxu0 0
    %631 = vmatpush2.bf16.msra.mxu0 0
    %632 = vmatprep.subr.bf16.mxu0 0
    %633 = vmatpush2.bf16.msra.mxu0 0
    %634 = vmatprep.mubr.bf16.mxu0 0
    %635 = vmatmul.mubr.bf16.gmra.mxu0 %v597
    %v636 = vpop.f32.mrf.mxu0
    %v637 = vadd.f32 0.0, %v636
    %v638 = vpop.f32.mrf.mxu0
    %v639 = vpop.f32.mrf.mxu0
    %v640 = vpop.f32.mrf.mxu0
    %641 = vdwg.mxu0
    %v642 = vpack.c.bf16 %v637, %v589
    %v643 = vld [vmem:[#allocation11] sm:$0xc]
    %v645 = vunpack.c.l.b16 %v643
    %v646 = vpack.c.b16 %v645, %v645
    %v647 = vrot.slane %v646, 2
    %v649 = vsel %vm168, %v642, 0
    %vm651 = vcmask 1041408
    %v653 = vsel %vm651, %v647, 0
    %655 = vmatprep.subr.bf16.mxu0 0
    %656 = vmatpush1.bf16.msra.mxu0 0
    %657 = vmatprep.subr.bf16.mxu0 0
    %658 = vmatpush1.bf16.msra.mxu0 0
    %659 = vmatprep.subr.bf16.mxu0 0
    %660 = vmatpush1.bf16.msra.mxu0 0
    %661 = vmatprep.subr.bf16.mxu0 0
    %662 = vmatpush1.bf16.msra.mxu0 0
    %663 = vmatprep.subr.bf16.mxu0 0
    %664 = vmatpush1.bf16.msra.mxu0 0
    %665 = vmatprep.subr.bf16.mxu0 0
    %666 = vmatpush1.bf16.msra.mxu0 0
    %667 = vmatprep.subr.bf16.mxu0 0
    %668 = vmatpush1.bf16.msra.mxu0 0
    %669 = vmatprep.subr.bf16.mxu0 0
    %670 = vmatpush1.bf16.msra.mxu0 %v653
    %671 = vmatprep.subr.bf16.mxu0 0
    %672 = vmatpush2.bf16.msra.mxu0 0
    %673 = vmatprep.subr.bf16.mxu0 0
    %674 = vmatpush2.bf16.msra.mxu0 0
    %675 = vmatprep.subr.bf16.mxu0 0
    %676 = vmatpush2.bf16.msra.mxu0 0
    %677 = vmatprep.subr.bf16.mxu0 0
    %678 = vmatpush2.bf16.msra.mxu0 0
    %679 = vmatprep.subr.bf16.mxu0 0
    %680 = vmatpush2.bf16.msra.mxu0 0
    %681 = vmatprep.subr.bf16.mxu0 0
    %682 = vmatpush2.bf16.msra.mxu0 0
    %683 = vmatprep.subr.bf16.mxu0 0
    %684 = vmatpush2.bf16.msra.mxu0 0
    %685 = vmatprep.subr.bf16.mxu0 0
    %686 = vmatpush2.bf16.msra.mxu0 0
    %687 = vmatprep.mubr.bf16.mxu0 0
    %688 = vmatmul.mubr.bf16.gmra.mxu0 %v649
    %v689 = vpop.f32.mrf.mxu0
    %v690 = vadd.f32 0.0, %v689
    %v691 = vpop.f32.mrf.mxu0
    %v692 = vpop.f32.mrf.mxu0
    %v693 = vadd.f32 0.0, %v692
    %v694 = vpop.f32.mrf.mxu0
    %695 = vdwg.mxu0
    %v697 = vsel %vm168, %v402, 0
    %v700 = vsel %vm651, %v403, 0
    %702 = vmatprep.subr.bf16.mxu0 0
    %703 = vmatpush1.bf16.msra.mxu0 0
    %704 = vmatprep.subr.bf16.mxu0 0
    %705 = vmatpush1.bf16.msra.mxu0 0
    %706 = vmatprep.subr.bf16.mxu0 0
    %707 = vmatpush1.bf16.msra.mxu0 0
    %708 = vmatprep.subr.bf16.mxu0 0
    %709 = vmatpush1.bf16.msra.mxu0 0
    %710 = vmatprep.subr.bf16.mxu0 0
    %711 = vmatpush1.bf16.msra.mxu0 0
    %712 = vmatprep.subr.bf16.mxu0 0
    %713 = vmatpush1.bf16.msra.mxu0 0
    %714 = vmatprep.subr.bf16.mxu0 0
    %715 = vmatpush1.bf16.msra.mxu0 0
    %716 = vmatprep.subr.bf16.mxu0 0
    %717 = vmatpush1.bf16.msra.mxu0 %v700
    %718 = vmatprep.subr.bf16.mxu0 0
    %719 = vmatpush2.bf16.msra.mxu0 0
    %720 = vmatprep.subr.bf16.mxu0 0
    %721 = vmatpush2.bf16.msra.mxu0 0
    %722 = vmatprep.subr.bf16.mxu0 0
    %723 = vmatpush2.bf16.msra.mxu0 0
    %724 = vmatprep.subr.bf16.mxu0 0
    %725 = vmatpush2.bf16.msra.mxu0 0
    %726 = vmatprep.subr.bf16.mxu0 0
    %727 = vmatpush2.bf16.msra.mxu0 0
    %728 = vmatprep.subr.bf16.mxu0 0
    %729 = vmatpush2.bf16.msra.mxu0 0
    %730 = vmatprep.subr.bf16.mxu0 0
    %731 = vmatpush2.bf16.msra.mxu0 0
    %732 = vmatprep.subr.bf16.mxu0 0
    %733 = vmatpush2.bf16.msra.mxu0 0
    %734 = vmatprep.mubr.bf16.mxu0 0
    %735 = vmatmul.mubr.bf16.gmra.mxu0 %v697
    %v736 = vpop.f32.mrf.mxu0
    %v737 = vadd.f32 %v690, %v736
    %v738 = vpop.f32.mrf.mxu0
    %v739 = vpop.f32.mrf.mxu0
    %v740 = vadd.f32 %v693, %v739
    %v741 = vpop.f32.mrf.mxu0
    %742 = vdwg.mxu0
    %743 = vrot.lane.b32.xlu0 %v161, 120
    %v744 = vpop.permute.xlu0 %743
    %745 = vrot.lane.b32.xlu0 %v163, 88
    %v746 = vpop.permute.xlu0 %745
    %v748 = vsel %vm168, %v744, 0
    %v751 = vsel %vm168, %v746, 0
    %753 = vmatprep.subr.bf16.mxu0 0
    %754 = vmatpush1.bf16.xpose.msra.mxu0 0
    %755 = vmatprep.subr.bf16.mxu0 0
    %756 = vmatpush1.bf16.xpose.msra.mxu0 0
    %757 = vmatprep.subr.bf16.mxu0 0
    %758 = vmatpush1.bf16.xpose.msra.mxu0 0
    %759 = vmatprep.subr.bf16.mxu0 0
    %760 = vmatpush1.bf16.xpose.msra.mxu0 0
    %761 = vmatprep.subr.bf16.mxu0 0
    %762 = vmatpush1.bf16.xpose.msra.mxu0 0
    %763 = vmatprep.subr.bf16.mxu0 0
    %764 = vmatpush1.bf16.xpose.msra.mxu0 0
    %765 = vmatprep.subr.bf16.mxu0 0
    %766 = vmatpush1.bf16.xpose.msra.mxu0 0
    %767 = vmatprep.subr.bf16.mxu0 0
    %768 = vmatpush1.bf16.xpose.msra.mxu0 %v751
    %769 = vmatprep.subr.bf16.mxu0 0
    %770 = vmatpush2.bf16.xpose.msra.mxu0 0
    %771 = vmatprep.subr.bf16.mxu0 0
    %772 = vmatpush2.bf16.xpose.msra.mxu0 0
    %773 = vmatprep.subr.bf16.mxu0 0
    %774 = vmatpush2.bf16.xpose.msra.mxu0 0
    %775 = vmatprep.subr.bf16.mxu0 0
    %776 = vmatpush2.bf16.xpose.msra.mxu0 0
    %777 = vmatprep.subr.bf16.mxu0 0
    %778 = vmatpush2.bf16.xpose.msra.mxu0 0
    %779 = vmatprep.subr.bf16.mxu0 0
    %780 = vmatpush2.bf16.xpose.msra.mxu0 0
    %781 = vmatprep.subr.bf16.mxu0 0
    %782 = vmatpush2.bf16.xpose.msra.mxu0 0
    %783 = vmatprep.subr.bf16.mxu0 0
    %784 = vmatpush2.bf16.xpose.msra.mxu0 0
    %785 = vmatprep.mubr.bf16.mxu0 0
    %786 = vmatmul.mubr.bf16.gmra.mxu0 %v748
    %v787 = vpop.f32.mrf.mxu0
    %v788 = vadd.f32 0.0, %v787
    %v789 = vpop.f32.mrf.mxu0
    %v790 = vpop.f32.mrf.mxu0
    %v791 = vpop.f32.mrf.mxu0
    %792 = vdwg.mxu0
    %793 = vrot.lane.b32.xlu0 %v162, 120
    %v794 = vpop.permute.xlu0 %793
    %795 = vrot.lane.b32.xlu0 %v164, 88
    %v796 = vpop.permute.xlu0 %795
    %v798 = vsel %vm168, %v794, 0
    %v801 = vsel %vm168, %v796, 0
    %803 = vmatprep.subr.bf16.mxu0 0
    %804 = vmatpush1.bf16.xpose.msra.mxu0 0
    %805 = vmatprep.subr.bf16.mxu0 0
    %806 = vmatpush1.bf16.xpose.msra.mxu0 0
    %807 = vmatprep.subr.bf16.mxu0 0
    %808 = vmatpush1.bf16.xpose.msra.mxu0 0
    %809 = vmatprep.subr.bf16.mxu0 0
    %810 = vmatpush1.bf16.xpose.msra.mxu0 0
    %811 = vmatprep.subr.bf16.mxu0 0
    %812 = vmatpush1.bf16.xpose.msra.mxu0 0
    %813 = vmatprep.subr.bf16.mxu0 0
    %814 = vmatpush1.bf16.xpose.msra.mxu0 0
    %815 = vmatprep.subr.bf16.mxu0 0
    %816 = vmatpush1.bf16.xpose.msra.mxu0 0
    %817 = vmatprep.subr.bf16.mxu0 0
    %818 = vmatpush1.bf16.xpose.msra.mxu0 %v801
    %819 = vmatprep.subr.bf16.mxu0 0
    %820 = vmatpush2.bf16.xpose.msra.mxu0 0
    %821 = vmatprep.subr.bf16.mxu0 0
    %822 = vmatpush2.bf16.xpose.msra.mxu0 0
    %823 = vmatprep.subr.bf16.mxu0 0
    %824 = vmatpush2.bf16.xpose.msra.mxu0 0
    %825 = vmatprep.subr.bf16.mxu0 0
    %826 = vmatpush2.bf16.xpose.msra.mxu0 0
    %827 = vmatprep.subr.bf16.mxu0 0
    %828 = vmatpush2.bf16.xpose.msra.mxu0 0
    %829 = vmatprep.subr.bf16.mxu0 0
    %830 = vmatpush2.bf16.xpose.msra.mxu0 0
    %831 = vmatprep.subr.bf16.mxu0 0
    %832 = vmatpush2.bf16.xpose.msra.mxu0 0
    %833 = vmatprep.subr.bf16.mxu0 0
    %834 = vmatpush2.bf16.xpose.msra.mxu0 0
    %835 = vmatprep.mubr.bf16.mxu0 0
    %836 = vmatmul.mubr.bf16.gmra.mxu0 %v798
    %v837 = vpop.f32.mrf.mxu0
    %v838 = vadd.f32 0.0, %v837
    %v839 = vpop.f32.mrf.mxu0
    %v840 = vpop.f32.mrf.mxu0
    %v841 = vpop.f32.mrf.mxu0
    %842 = vdwg.mxu0
    %v843 = vsel %vm264, %v788, -inf
    %844 = vmax.xlane.f32.xlu0 %v843
    %v845 = vpop.xlane.xlu0 %844
    %v846 = vsel %vm264, %v838, -inf
    %847 = vmax.xlane.f32.xlu0 %v846
    %v848 = vpop.xlane.xlu0 %847
    %v849 = vsub.f32 %v788, %v845
    %v850 = vsub.f32 %v838, %v848
    %v851 = vmul.f32 %v849, 1.442695
    %v852 = vpow.pop %v851
    %v853 = vmul.f32 %v850, 1.442695
    %v854 = vpow.pop %v853
    %v855 = vsel %vm264, %v852, 0.0
    %856 = vadd.xlane.f32.xlu0 %v855
    %v857 = vpop.xlane.xlu0 %856
    %v858 = vsel %vm264, %v854, 0.0
    %859 = vadd.xlane.f32.xlu0 %v858
    %v860 = vpop.xlane.xlu0 %859
    %v861 = vrcp.pop %v857
    %v862 = vmul.f32 %v852, %v861
    %v863 = vrcp.pop %v860
    %v864 = vmul.f32 %v854, %v863
    %vm865 = vcmp.ge.f32.partialorder %v788, 0.0
    %vm866 = vcmp.ge.f32.partialorder %v838, 0.0
    %v867 = vmul.f32 %v788, 0.01
    %v868 = vmul.f32 %v838, 0.01
    %v869 = vsel %vm865, %v788, %v867
    %v870 = vsel %vm866, %v838, %v868
    %s871 = sld [smem:[#allocation8 + $0x2]]
    %v872 = vstv %s871
    %v873 = vmul.f32 %v872, %v862
    %v874 = vmul.f32 %v872, %v864
    %s875 = sld [smem:[#allocation9 + $0x2]]
    %v876 = vstv %s875
    %v877 = vmul.f32 %v876, %v869
    %v878 = vmul.f32 %v876, %v870
    %v879 = vadd.f32 %v873, %v877
    %v880 = vadd.f32 %v874, %v878
    %v881 = vpack.c.bf16 %v879, %v879
    %v882 = vpack.c.bf16 %v880, %v880
    %883 = vrot.lane.b32.xlu0 %v163, 56
    %v884 = vpop.permute.xlu0 %883
    %v886 = vsel %vm264, %v881, 0
    %v889 = vsel %vm310, %v884, 0
    %891 = vmatprep.subr.bf16.mxu0 0
    %892 = vmatpush1.bf16.msra.mxu0 0
    %893 = vmatprep.subr.bf16.mxu0 0
    %894 = vmatpush1.bf16.msra.mxu0 0
    %895 = vmatprep.subr.bf16.mxu0 0
    %896 = vmatpush1.bf16.msra.mxu0 0
    %897 = vmatprep.subr.bf16.mxu0 0
    %898 = vmatpush1.bf16.msra.mxu0 0
    %899 = vmatprep.subr.bf16.mxu0 0
    %900 = vmatpush1.bf16.msra.mxu0 0
    %901 = vmatprep.subr.bf16.mxu0 0
    %902 = vmatpush1.bf16.msra.mxu0 0
    %903 = vmatprep.subr.bf16.mxu0 0
    %904 = vmatpush1.bf16.msra.mxu0 0
    %905 = vmatprep.subr.bf16.mxu0 0
    %906 = vmatpush1.bf16.msra.mxu0 %v889
    %907 = vmatprep.subr.bf16.mxu0 0
    %908 = vmatpush2.bf16.msra.mxu0 0
    %909 = vmatprep.subr.bf16.mxu0 0
    %910 = vmatpush2.bf16.msra.mxu0 0
    %911 = vmatprep.subr.bf16.mxu0 0
    %912 = vmatpush2.bf16.msra.mxu0 0
    %913 = vmatprep.subr.bf16.mxu0 0
    %914 = vmatpush2.bf16.msra.mxu0 0
    %915 = vmatprep.subr.bf16.mxu0 0
    %916 = vmatpush2.bf16.msra.mxu0 0
    %917 = vmatprep.subr.bf16.mxu0 0
    %918 = vmatpush2.bf16.msra.mxu0 0
    %919 = vmatprep.subr.bf16.mxu0 0
    %920 = vmatpush2.bf16.msra.mxu0 0
    %921 = vmatprep.subr.bf16.mxu0 0
    %922 = vmatpush2.bf16.msra.mxu0 0
    %923 = vmatprep.mubr.bf16.mxu0 0
    %924 = vmatmul.mubr.bf16.gmra.mxu0 %v886
    %v925 = vpop.f32.mrf.mxu0
    %v926 = vadd.f32 0.0, %v925
    %v927 = vpop.f32.mrf.mxu0
    %v928 = vpop.f32.mrf.mxu0
    %v929 = vpop.f32.mrf.mxu0
    %930 = vdwg.mxu0
    %931 = vrot.lane.b32.xlu0 %v164, 56
    %v932 = vpop.permute.xlu0 %931
    %v934 = vsel %vm264, %v882, 0
    %v937 = vsel %vm310, %v932, 0
    %939 = vmatprep.subr.bf16.mxu0 0
    %940 = vmatpush1.bf16.msra.mxu0 0
    %941 = vmatprep.subr.bf16.mxu0 0
    %942 = vmatpush1.bf16.msra.mxu0 0
    %943 = vmatprep.subr.bf16.mxu0 0
    %944 = vmatpush1.bf16.msra.mxu0 0
    %945 = vmatprep.subr.bf16.mxu0 0
    %946 = vmatpush1.bf16.msra.mxu0 0
    %947 = vmatprep.subr.bf16.mxu0 0
    %948 = vmatpush1.bf16.msra.mxu0 0
    %949 = vmatprep.subr.bf16.mxu0 0
    %950 = vmatpush1.bf16.msra.mxu0 0
    %951 = vmatprep.subr.bf16.mxu0 0
    %952 = vmatpush1.bf16.msra.mxu0 0
    %953 = vmatprep.subr.bf16.mxu0 0
    %954 = vmatpush1.bf16.msra.mxu0 %v937
    %955 = vmatprep.subr.bf16.mxu0 0
    %956 = vmatpush2.bf16.msra.mxu0 0
    %957 = vmatprep.subr.bf16.mxu0 0
    %958 = vmatpush2.bf16.msra.mxu0 0
    %959 = vmatprep.subr.bf16.mxu0 0
    %960 = vmatpush2.bf16.msra.mxu0 0
    %961 = vmatprep.subr.bf16.mxu0 0
    %962 = vmatpush2.bf16.msra.mxu0 0
    %963 = vmatprep.subr.bf16.mxu0 0
    %964 = vmatpush2.bf16.msra.mxu0 0
    %965 = vmatprep.subr.bf16.mxu0 0
    %966 = vmatpush2.bf16.msra.mxu0 0
    %967 = vmatprep.subr.bf16.mxu0 0
    %968 = vmatpush2.bf16.msra.mxu0 0
    %969 = vmatprep.subr.bf16.mxu0 0
    %970 = vmatpush2.bf16.msra.mxu0 0
    %971 = vmatprep.mubr.bf16.mxu0 0
    %972 = vmatmul.mubr.bf16.gmra.mxu0 %v934
    %v973 = vpop.f32.mrf.mxu0
    %v974 = vadd.f32 0.0, %v973
    %v975 = vpop.f32.mrf.mxu0
    %v976 = vpop.f32.mrf.mxu0
    %v977 = vpop.f32.mrf.mxu0
    %978 = vdwg.mxu0
    %v979 = vpack.c.bf16 %v974, %v926
    %v980 = vld [vmem:[#allocation11 + $0x4] sm:$0x3]
    %v982 = vsel %vm168, %v979, 0
    %v985 = vsel %vm651, %v980, 0
    %987 = vmatprep.subr.bf16.mxu0 0
    %988 = vmatpush1.bf16.msra.mxu0 0
    %989 = vmatprep.subr.bf16.mxu0 0
    %990 = vmatpush1.bf16.msra.mxu0 0
    %991 = vmatprep.subr.bf16.mxu0 0
    %992 = vmatpush1.bf16.msra.mxu0 0
    %993 = vmatprep.subr.bf16.mxu0 0
    %994 = vmatpush1.bf16.msra.mxu0 0
    %995 = vmatprep.subr.bf16.mxu0 0
    %996 = vmatpush1.bf16.msra.mxu0 0
    %997 = vmatprep.subr.bf16.mxu0 0
    %998 = vmatpush1.bf16.msra.mxu0 0
    %999 = vmatprep.subr.bf16.mxu0 0
    %1000 = vmatpush1.bf16.msra.mxu0 0
    %1001 = vmatprep.subr.bf16.mxu0 0
    %1002 = vmatpush1.bf16.msra.mxu0 %v985
    %1003 = vmatprep.subr.bf16.mxu0 0
    %1004 = vmatpush2.bf16.msra.mxu0 0
    %1005 = vmatprep.subr.bf16.mxu0 0
    %1006 = vmatpush2.bf16.msra.mxu0 0
    %1007 = vmatprep.subr.bf16.mxu0 0
    %1008 = vmatpush2.bf16.msra.mxu0 0
    %1009 = vmatprep.subr.bf16.mxu0 0
    %1010 = vmatpush2.bf16.msra.mxu0 0
    %1011 = vmatprep.subr.bf16.mxu0 0
    %1012 = vmatpush2.bf16.msra.mxu0 0
    %1013 = vmatprep.subr.bf16.mxu0 0
    %1014 = vmatpush2.bf16.msra.mxu0 0
    %1015 = vmatprep.subr.bf16.mxu0 0
    %1016 = vmatpush2.bf16.msra.mxu0 0
    %1017 = vmatprep.subr.bf16.mxu0 0
    %1018 = vmatpush2.bf16.msra.mxu0 0
    %1019 = vmatprep.mubr.bf16.mxu0 0
    %1020 = vmatmul.mubr.bf16.gmra.mxu0 %v982
    %v1021 = vpop.f32.mrf.mxu0
    %v1022 = vadd.f32 0.0, %v1021
    %v1023 = vpop.f32.mrf.mxu0
    %v1024 = vpop.f32.mrf.mxu0
    %v1025 = vadd.f32 0.0, %v1024
    %v1026 = vpop.f32.mrf.mxu0
    %1027 = vdwg.mxu0
    %v1028 = vadd.f32 %v737, %v1022
    %v1029 = vadd.f32 %v740, %v1025
    %1030 = vrot.lane.b32.xlu0 %v161, 116
    %v1031 = vpop.permute.xlu0 %1030
    %1032 = vrot.lane.b32.xlu0 %v163, 84
    %v1033 = vpop.permute.xlu0 %1032
    %v1035 = vsel %vm168, %v1031, 0
    %v1038 = vsel %vm168, %v1033, 0
    %1040 = vmatprep.subr.bf16.mxu0 0
    %1041 = vmatpush1.bf16.xpose.msra.mxu0 0
    %1042 = vmatprep.subr.bf16.mxu0 0
    %1043 = vmatpush1.bf16.xpose.msra.mxu0 0
    %1044 = vmatprep.subr.bf16.mxu0 0
    %1045 = vmatpush1.bf16.xpose.msra.mxu0 0
    %1046 = vmatprep.subr.bf16.mxu0 0
    %1047 = vmatpush1.bf16.xpose.msra.mxu0 0
    %1048 = vmatprep.subr.bf16.mxu0 0
    %1049 = vmatpush1.bf16.xpose.msra.mxu0 0
    %1050 = vmatprep.subr.bf16.mxu0 0
    %1051 = vmatpush1.bf16.xpose.msra.mxu0 0
    %1052 = vmatprep.subr.bf16.mxu0 0
    %1053 = vmatpush1.bf16.xpose.msra.mxu0 0
    %1054 = vmatprep.subr.bf16.mxu0 0
    %1055 = vmatpush1.bf16.xpose.msra.mxu0 %v1038
    %1056 = vmatprep.subr.bf16.mxu0 0
    %1057 = vmatpush2.bf16.xpose.msra.mxu0 0
    %1058 = vmatprep.subr.bf16.mxu0 0
    %1059 = vmatpush2.bf16.xpose.msra.mxu0 0
    %1060 = vmatprep.subr.bf16.mxu0 0
    %1061 = vmatpush2.bf16.xpose.msra.mxu0 0
    %1062 = vmatprep.subr.bf16.mxu0 0
    %1063 = vmatpush2.bf16.xpose.msra.mxu0 0
    %1064 = vmatprep.subr.bf16.mxu0 0
    %1065 = vmatpush2.bf16.xpose.msra.mxu0 0
    %1066 = vmatprep.subr.bf16.mxu0 0
    %1067 = vmatpush2.bf16.xpose.msra.mxu0 0
    %1068 = vmatprep.subr.bf16.mxu0 0
    %1069 = vmatpush2.bf16.xpose.msra.mxu0 0
    %1070 = vmatprep.subr.bf16.mxu0 0
    %1071 = vmatpush2.bf16.xpose.msra.mxu0 0
    %1072 = vmatprep.mubr.bf16.mxu0 0
    %1073 = vmatmul.mubr.bf16.gmra.mxu0 %v1035
    %v1074 = vpop.f32.mrf.mxu0
    %v1075 = vadd.f32 0.0, %v1074
    %v1076 = vpop.f32.mrf.mxu0
    %v1077 = vpop.f32.mrf.mxu0
    %v1078 = vpop.f32.mrf.mxu0
    %1079 = vdwg.mxu0
    %1080 = vrot.lane.b32.xlu0 %v162, 116
    %v1081 = vpop.permute.xlu0 %1080
    %1082 = vrot.lane.b32.xlu0 %v164, 84
    %v1083 = vpop.permute.xlu0 %1082
    %v1085 = vsel %vm168, %v1081, 0
    %v1088 = vsel %vm168, %v1083, 0
    %1090 = vmatprep.subr.bf16.mxu0 0
    %1091 = vmatpush1.bf16.xpose.msra.mxu0 0
    %1092 = vmatprep.subr.bf16.mxu0 0
    %1093 = vmatpush1.bf16.xpose.msra.mxu0 0
    %1094 = vmatprep.subr.bf16.mxu0 0
    %1095 = vmatpush1.bf16.xpose.msra.mxu0 0
    %1096 = vmatprep.subr.bf16.mxu0 0
    %1097 = vmatpush1.bf16.xpose.msra.mxu0 0
    %1098 = vmatprep.subr.bf16.mxu0 0
    %1099 = vmatpush1.bf16.xpose.msra.mxu0 0
    %1100 = vmatprep.subr.bf16.mxu0 0
    %1101 = vmatpush1.bf16.xpose.msra.mxu0 0
    %1102 = vmatprep.subr.bf16.mxu0 0
    %1103 = vmatpush1.bf16.xpose.msra.mxu0 0
    %1104 = vmatprep.subr.bf16.mxu0 0
    %1105 = vmatpush1.bf16.xpose.msra.mxu0 %v1088
    %1106 = vmatprep.subr.bf16.mxu0 0
    %1107 = vmatpush2.bf16.xpose.msra.mxu0 0
    %1108 = vmatprep.subr.bf16.mxu0 0
    %1109 = vmatpush2.bf16.xpose.msra.mxu0 0
    %1110 = vmatprep.subr.bf16.mxu0 0
    %1111 = vmatpush2.bf16.xpose.msra.mxu0 0
    %1112 = vmatprep.subr.bf16.mxu0 0
    %1113 = vmatpush2.bf16.xpose.msra.mxu0 0
    %1114 = vmatprep.subr.bf16.mxu0 0
    %1115 = vmatpush2.bf16.xpose.msra.mxu0 0
    %1116 = vmatprep.subr.bf16.mxu0 0
    %1117 = vmatpush2.bf16.xpose.msra.mxu0 0
    %1118 = vmatprep.subr.bf16.mxu0 0
    %1119 = vmatpush2.bf16.xpose.msra.mxu0 0
    %1120 = vmatprep.subr.bf16.mxu0 0
    %1121 = vmatpush2.bf16.xpose.msra.mxu0 0
    %1122 = vmatprep.mubr.bf16.mxu0 0
    %1123 = vmatmul.mubr.bf16.gmra.mxu0 %v1085
    %v1124 = vpop.f32.mrf.mxu0
    %v1125 = vadd.f32 0.0, %v1124
    %v1126 = vpop.f32.mrf.mxu0
    %v1127 = vpop.f32.mrf.mxu0
    %v1128 = vpop.f32.mrf.mxu0
    %1129 = vdwg.mxu0
    %v1130 = vsel %vm264, %v1075, -inf
    %1131 = vmax.xlane.f32.xlu0 %v1130
    %v1132 = vpop.xlane.xlu0 %1131
    %v1133 = vsel %vm264, %v1125, -inf
    %1134 = vmax.xlane.f32.xlu0 %v1133
    %v1135 = vpop.xlane.xlu0 %1134
    %v1136 = vsub.f32 %v1075, %v1132
    %v1137 = vsub.f32 %v1125, %v1135
    %v1138 = vmul.f32 %v1136, 1.442695
    %v1139 = vpow.pop %v1138
    %v1140 = vmul.f32 %v1137, 1.442695
    %v1141 = vpow.pop %v1140
    %v1142 = vsel %vm264, %v1139, 0.0
    %1143 = vadd.xlane.f32.xlu0 %v1142
    %v1144 = vpop.xlane.xlu0 %1143
    %v1145 = vsel %vm264, %v1141, 0.0
    %1146 = vadd.xlane.f32.xlu0 %v1145
    %v1147 = vpop.xlane.xlu0 %1146
    %v1148 = vrcp.pop %v1144
    %v1149 = vmul.f32 %v1139, %v1148
    %v1150 = vrcp.pop %v1147
    %v1151 = vmul.f32 %v1141, %v1150
    %vm1152 = vcmp.ge.f32.partialorder %v1075, 0.0
    %vm1153 = vcmp.ge.f32.partialorder %v1125, 0.0
    %v1154 = vmul.f32 %v1075, 0.01
    %v1155 = vmul.f32 %v1125, 0.01
    %v1156 = vsel %vm1152, %v1075, %v1154
    %v1157 = vsel %vm1153, %v1125, %v1155
    %s1158 = sld [smem:[#allocation8 + $0x3]]
    %v1159 = vstv %s1158
    %v1160 = vmul.f32 %v1159, %v1149
    %v1161 = vmul.f32 %v1159, %v1151
    %s1162 = sld [smem:[#allocation9 + $0x3]]
    %v1163 = vstv %s1162
    %v1164 = vmul.f32 %v1163, %v1156
    %v1165 = vmul.f32 %v1163, %v1157
    %v1166 = vadd.f32 %v1160, %v1164
    %v1167 = vadd.f32 %v1161, %v1165
    %v1168 = vpack.c.bf16 %v1166, %v1166
    %v1169 = vpack.c.bf16 %v1167, %v1167
    %1170 = vrot.lane.b32.xlu0 %v163, 52
    %v1171 = vpop.permute.xlu0 %1170
    %v1173 = vsel %vm264, %v1168, 0
    %v1176 = vsel %vm310, %v1171, 0
    %1178 = vmatprep.subr.bf16.mxu0 0
    %1179 = vmatpush1.bf16.msra.mxu0 0
    %1180 = vmatprep.subr.bf16.mxu0 0
    %1181 = vmatpush1.bf16.msra.mxu0 0
    %1182 = vmatprep.subr.bf16.mxu0 0
    %1183 = vmatpush1.bf16.msra.mxu0 0
    %1184 = vmatprep.subr.bf16.mxu0 0
    %1185 = vmatpush1.bf16.msra.mxu0 0
    %1186 = vmatprep.subr.bf16.mxu0 0
    %1187 = vmatpush1.bf16.msra.mxu0 0
    %1188 = vmatprep.subr.bf16.mxu0 0
    %1189 = vmatpush1.bf16.msra.mxu0 0
    %1190 = vmatprep.subr.bf16.mxu0 0
    %1191 = vmatpush1.bf16.msra.mxu0 0
    %1192 = vmatprep.subr.bf16.mxu0 0
    %1193 = vmatpush1.bf16.msra.mxu0 %v1176
    %1194 = vmatprep.subr.bf16.mxu0 0
    %1195 = vmatpush2.bf16.msra.mxu0 0
    %1196 = vmatprep.subr.bf16.mxu0 0
    %1197 = vmatpush2.bf16.msra.mxu0 0
    %1198 = vmatprep.subr.bf16.mxu0 0
    %1199 = vmatpush2.bf16.msra.mxu0 0
    %1200 = vmatprep.subr.bf16.mxu0 0
    %1201 = vmatpush2.bf16.msra.mxu0 0
    %1202 = vmatprep.subr.bf16.mxu0 0
    %1203 = vmatpush2.bf16.msra.mxu0 0
    %1204 = vmatprep.subr.bf16.mxu0 0
    %1205 = vmatpush2.bf16.msra.mxu0 0
    %1206 = vmatprep.subr.bf16.mxu0 0
    %1207 = vmatpush2.bf16.msra.mxu0 0
    %1208 = vmatprep.subr.bf16.mxu0 0
    %1209 = vmatpush2.bf16.msra.mxu0 0
    %1210 = vmatprep.mubr.bf16.mxu0 0
    %1211 = vmatmul.mubr.bf16.gmra.mxu0 %v1173
    %v1212 = vpop.f32.mrf.mxu0
    %v1213 = vadd.f32 0.0, %v1212
    %v1214 = vpop.f32.mrf.mxu0
    %v1215 = vpop.f32.mrf.mxu0
    %v1216 = vpop.f32.mrf.mxu0
    %1217 = vdwg.mxu0
    %1218 = vrot.lane.b32.xlu0 %v164, 52
    %v1219 = vpop.permute.xlu0 %1218
    %v1221 = vsel %vm264, %v1169, 0
    %v1224 = vsel %vm310, %v1219, 0
    %1226 = vmatprep.subr.bf16.mxu0 0
    %1227 = vmatpush1.bf16.msra.mxu0 0
    %1228 = vmatprep.subr.bf16.mxu0 0
    %1229 = vmatpush1.bf16.msra.mxu0 0
    %1230 = vmatprep.subr.bf16.mxu0 0
    %1231 = vmatpush1.bf16.msra.mxu0 0
    %1232 = vmatprep.subr.bf16.mxu0 0
    %1233 = vmatpush1.bf16.msra.mxu0 0
    %1234 = vmatprep.subr.bf16.mxu0 0
    %1235 = vmatpush1.bf16.msra.mxu0 0
    %1236 = vmatprep.subr.bf16.mxu0 0
    %1237 = vmatpush1.bf16.msra.mxu0 0
    %1238 = vmatprep.subr.bf16.mxu0 0
    %1239 = vmatpush1.bf16.msra.mxu0 0
    %1240 = vmatprep.subr.bf16.mxu0 0
    %1241 = vmatpush1.bf16.msra.mxu0 %v1224
    %1242 = vmatprep.subr.bf16.mxu0 0
    %1243 = vmatpush2.bf16.msra.mxu0 0
    %1244 = vmatprep.subr.bf16.mxu0 0
    %1245 = vmatpush2.bf16.msra.mxu0 0
    %1246 = vmatprep.subr.bf16.mxu0 0
    %1247 = vmatpush2.bf16.msra.mxu0 0
    %1248 = vmatprep.subr.bf16.mxu0 0
    %1249 = vmatpush2.bf16.msra.mxu0 0
    %1250 = vmatprep.subr.bf16.mxu0 0
    %1251 = vmatpush2.bf16.msra.mxu0 0
    %1252 = vmatprep.subr.bf16.mxu0 0
    %1253 = vmatpush2.bf16.msra.mxu0 0
    %1254 = vmatprep.subr.bf16.mxu0 0
    %1255 = vmatpush2.bf16.msra.mxu0 0
    %1256 = vmatprep.subr.bf16.mxu0 0
    %1257 = vmatpush2.bf16.msra.mxu0 0
    %1258 = vmatprep.mubr.bf16.mxu0 0
    %1259 = vmatmul.mubr.bf16.gmra.mxu0 %v1221
    %v1260 = vpop.f32.mrf.mxu0
    %v1261 = vadd.f32 0.0, %v1260
    %v1262 = vpop.f32.mrf.mxu0
    %v1263 = vpop.f32.mrf.mxu0
    %v1264 = vpop.f32.mrf.mxu0
    %1265 = vdwg.mxu0
    %v1266 = vpack.c.bf16 %v1261, %v1213
    %v1267 = vld [vmem:[#allocation11 + $0x4] sm:$0xc]
    %v1269 = vunpack.c.l.b16 %v1267
    %v1270 = vpack.c.b16 %v1269, %v1269
    %v1271 = vrot.slane %v1270, 2
    %v1273 = vsel %vm168, %v1266, 0
    %v1276 = vsel %vm651, %v1271, 0
    %1278 = vmatprep.subr.bf16.mxu0 0
    %1279 = vmatpush1.bf16.msra.mxu0 0
    %1280 = vmatprep.subr.bf16.mxu0 0
    %1281 = vmatpush1.bf16.msra.mxu0 0
    %1282 = vmatprep.subr.bf16.mxu0 0
    %1283 = vmatpush1.bf16.msra.mxu0 0
    %1284 = vmatprep.subr.bf16.mxu0 0
    %1285 = vmatpush1.bf16.msra.mxu0 0
    %1286 = vmatprep.subr.bf16.mxu0 0
    %1287 = vmatpush1.bf16.msra.mxu0 0
    %1288 = vmatprep.subr.bf16.mxu0 0
    %1289 = vmatpush1.bf16.msra.mxu0 0
    %1290 = vmatprep.subr.bf16.mxu0 0
    %1291 = vmatpush1.bf16.msra.mxu0 0
    %1292 = vmatprep.subr.bf16.mxu0 0
    %1293 = vmatpush1.bf16.msra.mxu0 %v1276
    %1294 = vmatprep.subr.bf16.mxu0 0
    %1295 = vmatpush2.bf16.msra.mxu0 0
    %1296 = vmatprep.subr.bf16.mxu0 0
    %1297 = vmatpush2.bf16.msra.mxu0 0
    %1298 = vmatprep.subr.bf16.mxu0 0
    %1299 = vmatpush2.bf16.msra.mxu0 0
    %1300 = vmatprep.subr.bf16.mxu0 0
    %1301 = vmatpush2.bf16.msra.mxu0 0
    %1302 = vmatprep.subr.bf16.mxu0 0
    %1303 = vmatpush2.bf16.msra.mxu0 0
    %1304 = vmatprep.subr.bf16.mxu0 0
    %1305 = vmatpush2.bf16.msra.mxu0 0
    %1306 = vmatprep.subr.bf16.mxu0 0
    %1307 = vmatpush2.bf16.msra.mxu0 0
    %1308 = vmatprep.subr.bf16.mxu0 0
    %1309 = vmatpush2.bf16.msra.mxu0 0
    %1310 = vmatprep.mubr.bf16.mxu0 0
    %1311 = vmatmul.mubr.bf16.gmra.mxu0 %v1273
    %v1312 = vpop.f32.mrf.mxu0
    %v1313 = vadd.f32 0.0, %v1312
    %v1314 = vpop.f32.mrf.mxu0
    %v1315 = vpop.f32.mrf.mxu0
    %v1316 = vadd.f32 0.0, %v1315
    %v1317 = vpop.f32.mrf.mxu0
    %1318 = vdwg.mxu0
    %v1319 = vadd.f32 %v1028, %v1313
    %v1320 = vadd.f32 %v1029, %v1316
    %1321 = vrot.lane.b32.xlu0 %v161, 112
    %v1322 = vpop.permute.xlu0 %1321
    %1323 = vrot.lane.b32.xlu0 %v163, 80
    %v1324 = vpop.permute.xlu0 %1323
    %v1326 = vsel %vm168, %v1322, 0
    %v1329 = vsel %vm168, %v1324, 0
    %1331 = vmatprep.subr.bf16.mxu0 0
    %1332 = vmatpush1.bf16.xpose.msra.mxu0 0
    %1333 = vmatprep.subr.bf16.mxu0 0
    %1334 = vmatpush1.bf16.xpose.msra.mxu0 0
    %1335 = vmatprep.subr.bf16.mxu0 0
    %1336 = vmatpush1.bf16.xpose.msra.mxu0 0
    %1337 = vmatprep.subr.bf16.mxu0 0
    %1338 = vmatpush1.bf16.xpose.msra.mxu0 0
    %1339 = vmatprep.subr.bf16.mxu0 0
    %1340 = vmatpush1.bf16.xpose.msra.mxu0 0
    %1341 = vmatprep.subr.bf16.mxu0 0
    %1342 = vmatpush1.bf16.xpose.msra.mxu0 0
    %1343 = vmatprep.subr.bf16.mxu0 0
    %1344 = vmatpush1.bf16.xpose.msra.mxu0 0
    %1345 = vmatprep.subr.bf16.mxu0 0
    %1346 = vmatpush1.bf16.xpose.msra.mxu0 %v1329
    %1347 = vmatprep.subr.bf16.mxu0 0
    %1348 = vmatpush2.bf16.xpose.msra.mxu0 0
    %1349 = vmatprep.subr.bf16.mxu0 0
    %1350 = vmatpush2.bf16.xpose.msra.mxu0 0
    %1351 = vmatprep.subr.bf16.mxu0 0
    %1352 = vmatpush2.bf16.xpose.msra.mxu0 0
    %1353 = vmatprep.subr.bf16.mxu0 0
    %1354 = vmatpush2.bf16.xpose.msra.mxu0 0
    %1355 = vmatprep.subr.bf16.mxu0 0
    %1356 = vmatpush2.bf16.xpose.msra.mxu0 0
    %1357 = vmatprep.subr.bf16.mxu0 0
    %1358 = vmatpush2.bf16.xpose.msra.mxu0 0
    %1359 = vmatprep.subr.bf16.mxu0 0
    %1360 = vmatpush2.bf16.xpose.msra.mxu0 0
    %1361 = vmatprep.subr.bf16.mxu0 0
    %1362 = vmatpush2.bf16.xpose.msra.mxu0 0
    %1363 = vmatprep.mubr.bf16.mxu0 0
    %1364 = vmatmul.mubr.bf16.gmra.mxu0 %v1326
    %v1365 = vpop.f32.mrf.mxu0
    %v1366 = vadd.f32 0.0, %v1365
    %v1367 = vpop.f32.mrf.mxu0
    %v1368 = vpop.f32.mrf.mxu0
    %v1369 = vpop.f32.mrf.mxu0
    %1370 = vdwg.mxu0
    %1371 = vrot.lane.b32.xlu0 %v162, 112
    %v1372 = vpop.permute.xlu0 %1371
    %1373 = vrot.lane.b32.xlu0 %v164, 80
    %v1374 = vpop.permute.xlu0 %1373
    %v1376 = vsel %vm168, %v1372, 0
    %v1379 = vsel %vm168, %v1374, 0
    %1381 = vmatprep.subr.bf16.mxu0 0
    %1382 = vmatpush1.bf16.xpose.msra.mxu0 0
    %1383 = vmatprep.subr.bf16.mxu0 0
    %1384 = vmatpush1.bf16.xpose.msra.mxu0 0
    %1385 = vmatprep.subr.bf16.mxu0 0
    %1386 = vmatpush1.bf16.xpose.msra.mxu0 0
    %1387 = vmatprep.subr.bf16.mxu0 0
    %1388 = vmatpush1.bf16.xpose.msra.mxu0 0
    %1389 = vmatprep.subr.bf16.mxu0 0
    %1390 = vmatpush1.bf16.xpose.msra.mxu0 0
    %1391 = vmatprep.subr.bf16.mxu0 0
    %1392 = vmatpush1.bf16.xpose.msra.mxu0 0
    %1393 = vmatprep.subr.bf16.mxu0 0
    %1394 = vmatpush1.bf16.xpose.msra.mxu0 0
    %1395 = vmatprep.subr.bf16.mxu0 0
    %1396 = vmatpush1.bf16.xpose.msra.mxu0 %v1379
    %1397 = vmatprep.subr.bf16.mxu0 0
    %1398 = vmatpush2.bf16.xpose.msra.mxu0 0
    %1399 = vmatprep.subr.bf16.mxu0 0
    %1400 = vmatpush2.bf16.xpose.msra.mxu0 0
    %1401 = vmatprep.subr.bf16.mxu0 0
    %1402 = vmatpush2.bf16.xpose.msra.mxu0 0
    %1403 = vmatprep.subr.bf16.mxu0 0
    %1404 = vmatpush2.bf16.xpose.msra.mxu0 0
    %1405 = vmatprep.subr.bf16.mxu0 0
    %1406 = vmatpush2.bf16.xpose.msra.mxu0 0
    %1407 = vmatprep.subr.bf16.mxu0 0
    %1408 = vmatpush2.bf16.xpose.msra.mxu0 0
    %1409 = vmatprep.subr.bf16.mxu0 0
    %1410 = vmatpush2.bf16.xpose.msra.mxu0 0
    %1411 = vmatprep.subr.bf16.mxu0 0
    %1412 = vmatpush2.bf16.xpose.msra.mxu0 0
    %1413 = vmatprep.mubr.bf16.mxu0 0
    %1414 = vmatmul.mubr.bf16.gmra.mxu0 %v1376
    %v1415 = vpop.f32.mrf.mxu0
    %v1416 = vadd.f32 0.0, %v1415
    %v1417 = vpop.f32.mrf.mxu0
    %v1418 = vpop.f32.mrf.mxu0
    %v1419 = vpop.f32.mrf.mxu0
    %1420 = vdwg.mxu0
    %v1421 = vsel %vm264, %v1366, -inf
    %1422 = vmax.xlane.f32.xlu0 %v1421
    %v1423 = vpop.xlane.xlu0 %1422
    %v1424 = vsel %vm264, %v1416, -inf
    %1425 = vmax.xlane.f32.xlu0 %v1424
    %v1426 = vpop.xlane.xlu0 %1425
    %v1427 = vsub.f32 %v1366, %v1423
    %v1428 = vsub.f32 %v1416, %v1426
    %v1429 = vmul.f32 %v1427, 1.442695
    %v1430 = vpow.pop %v1429
    %v1431 = vmul.f32 %v1428, 1.442695
    %v1432 = vpow.pop %v1431
    %v1433 = vsel %vm264, %v1430, 0.0
    %1434 = vadd.xlane.f32.xlu0 %v1433
    %v1435 = vpop.xlane.xlu0 %1434
    %v1436 = vsel %vm264, %v1432, 0.0
    %1437 = vadd.xlane.f32.xlu0 %v1436
    %v1438 = vpop.xlane.xlu0 %1437
    %v1439 = vrcp.pop %v1435
    %v1440 = vmul.f32 %v1430, %v1439
    %v1441 = vrcp.pop %v1438
    %v1442 = vmul.f32 %v1432, %v1441
    %vm1443 = vcmp.ge.f32.partialorder %v1366, 0.0
    %vm1444 = vcmp.ge.f32.partialorder %v1416, 0.0
    %v1445 = vmul.f32 %v1366, 0.01
    %v1446 = vmul.f32 %v1416, 0.01
    %v1447 = vsel %vm1443, %v1366, %v1445
    %v1448 = vsel %vm1444, %v1416, %v1446
    %s1449 = sld [smem:[#allocation8 + $0x4]]
    %v1450 = vstv %s1449
    %v1451 = vmul.f32 %v1450, %v1440
    %v1452 = vmul.f32 %v1450, %v1442
    %s1453 = sld [smem:[#allocation9 + $0x4]]
    %v1454 = vstv %s1453
    %v1455 = vmul.f32 %v1454, %v1447
    %v1456 = vmul.f32 %v1454, %v1448
    %v1457 = vadd.f32 %v1451, %v1455
    %v1458 = vadd.f32 %v1452, %v1456
    %v1459 = vpack.c.bf16 %v1457, %v1457
    %v1460 = vpack.c.bf16 %v1458, %v1458
    %1461 = vrot.lane.b32.xlu0 %v163, 48
    %v1462 = vpop.permute.xlu0 %1461
    %v1464 = vsel %vm264, %v1459, 0
    %v1467 = vsel %vm310, %v1462, 0
    %1469 = vmatprep.subr.bf16.mxu0 0
    %1470 = vmatpush1.bf16.msra.mxu0 0
    %1471 = vmatprep.subr.bf16.mxu0 0
    %1472 = vmatpush1.bf16.msra.mxu0 0
    %1473 = vmatprep.subr.bf16.mxu0 0
    %1474 = vmatpush1.bf16.msra.mxu0 0
    %1475 = vmatprep.subr.bf16.mxu0 0
    %1476 = vmatpush1.bf16.msra.mxu0 0
    %1477 = vmatprep.subr.bf16.mxu0 0
    %1478 = vmatpush1.bf16.msra.mxu0 0
    %1479 = vmatprep.subr.bf16.mxu0 0
    %1480 = vmatpush1.bf16.msra.mxu0 0
    %1481 = vmatprep.subr.bf16.mxu0 0
    %1482 = vmatpush1.bf16.msra.mxu0 0
    %1483 = vmatprep.subr.bf16.mxu0 0
    %1484 = vmatpush1.bf16.msra.mxu0 %v1467
    %1485 = vmatprep.subr.bf16.mxu0 0
    %1486 = vmatpush2.bf16.msra.mxu0 0
    %1487 = vmatprep.subr.bf16.mxu0 0
    %1488 = vmatpush2.bf16.msra.mxu0 0
    %1489 = vmatprep.subr.bf16.mxu0 0
    %1490 = vmatpush2.bf16.msra.mxu0 0
    %1491 = vmatprep.subr.bf16.mxu0 0
    %1492 = vmatpush2.bf16.msra.mxu0 0
    %1493 = vmatprep.subr.bf16.mxu0 0
    %1494 = vmatpush2.bf16.msra.mxu0 0
    %1495 = vmatprep.subr.bf16.mxu0 0
    %1496 = vmatpush2.bf16.msra.mxu0 0
    %1497 = vmatprep.subr.bf16.mxu0 0
    %1498 = vmatpush2.bf16.msra.mxu0 0
    %1499 = vmatprep.subr.bf16.mxu0 0
    %1500 = vmatpush2.bf16.msra.mxu0 0
    %1501 = vmatprep.mubr.bf16.mxu0 0
    %1502 = vmatmul.mubr.bf16.gmra.mxu0 %v1464
    %v1503 = vpop.f32.mrf.mxu0
    %v1504 = vadd.f32 0.0, %v1503
    %v1505 = vpop.f32.mrf.mxu0
    %v1506 = vpop.f32.mrf.mxu0
    %v1507 = vpop.f32.mrf.mxu0
    %1508 = vdwg.mxu0
    %1509 = vrot.lane.b32.xlu0 %v164, 48
    %v1510 = vpop.permute.xlu0 %1509
    %v1512 = vsel %vm264, %v1460, 0
    %v1515 = vsel %vm310, %v1510, 0
    %1517 = vmatprep.subr.bf16.mxu0 0
    %1518 = vmatpush1.bf16.msra.mxu0 0
    %1519 = vmatprep.subr.bf16.mxu0 0
    %1520 = vmatpush1.bf16.msra.mxu0 0
    %1521 = vmatprep.subr.bf16.mxu0 0
    %1522 = vmatpush1.bf16.msra.mxu0 0
    %1523 = vmatprep.subr.bf16.mxu0 0
    %1524 = vmatpush1.bf16.msra.mxu0 0
    %1525 = vmatprep.subr.bf16.mxu0 0
    %1526 = vmatpush1.bf16.msra.mxu0 0
    %1527 = vmatprep.subr.bf16.mxu0 0
    %1528 = vmatpush1.bf16.msra.mxu0 0
    %1529 = vmatprep.subr.bf16.mxu0 0
    %1530 = vmatpush1.bf16.msra.mxu0 0
    %1531 = vmatprep.subr.bf16.mxu0 0
    %1532 = vmatpush1.bf16.msra.mxu0 %v1515
    %1533 = vmatprep.subr.bf16.mxu0 0
    %1534 = vmatpush2.bf16.msra.mxu0 0
    %1535 = vmatprep.subr.bf16.mxu0 0
    %1536 = vmatpush2.bf16.msra.mxu0 0
    %1537 = vmatprep.subr.bf16.mxu0 0
    %1538 = vmatpush2.bf16.msra.mxu0 0
    %1539 = vmatprep.subr.bf16.mxu0 0
    %1540 = vmatpush2.bf16.msra.mxu0 0
    %1541 = vmatprep.subr.bf16.mxu0 0
    %1542 = vmatpush2.bf16.msra.mxu0 0
    %1543 = vmatprep.subr.bf16.mxu0 0
    %1544 = vmatpush2.bf16.msra.mxu0 0
    %1545 = vmatprep.subr.bf16.mxu0 0
    %1546 = vmatpush2.bf16.msra.mxu0 0
    %1547 = vmatprep.subr.bf16.mxu0 0
    %1548 = vmatpush2.bf16.msra.mxu0 0
    %1549 = vmatprep.mubr.bf16.mxu0 0
    %1550 = vmatmul.mubr.bf16.gmra.mxu0 %v1512
    %v1551 = vpop.f32.mrf.mxu0
    %v1552 = vadd.f32 0.0, %v1551
    %v1553 = vpop.f32.mrf.mxu0
    %v1554 = vpop.f32.mrf.mxu0
    %v1555 = vpop.f32.mrf.mxu0
    %1556 = vdwg.mxu0
    %v1557 = vpack.c.bf16 %v1552, %v1504
    %v1558 = vld [vmem:[#allocation11 + $0x8] sm:$0x3]
    %v1560 = vsel %vm168, %v1557, 0
    %v1563 = vsel %vm651, %v1558, 0
    %1565 = vmatprep.subr.bf16.mxu0 0
    %1566 = vmatpush1.bf16.msra.mxu0 0
    %1567 = vmatprep.subr.bf16.mxu0 0
    %1568 = vmatpush1.bf16.msra.mxu0 0
    %1569 = vmatprep.subr.bf16.mxu0 0
    %1570 = vmatpush1.bf16.msra.mxu0 0
    %1571 = vmatprep.subr.bf16.mxu0 0
    %1572 = vmatpush1.bf16.msra.mxu0 0
    %1573 = vmatprep.subr.bf16.mxu0 0
    %1574 = vmatpush1.bf16.msra.mxu0 0
    %1575 = vmatprep.subr.bf16.mxu0 0
    %1576 = vmatpush1.bf16.msra.mxu0 0
    %1577 = vmatprep.subr.bf16.mxu0 0
    %1578 = vmatpush1.bf16.msra.mxu0 0
    %1579 = vmatprep.subr.bf16.mxu0 0
    %1580 = vmatpush1.bf16.msra.mxu0 %v1563
    %1581 = vmatprep.subr.bf16.mxu0 0
    %1582 = vmatpush2.bf16.msra.mxu0 0
    %1583 = vmatprep.subr.bf16.mxu0 0
    %1584 = vmatpush2.bf16.msra.mxu0 0
    %1585 = vmatprep.subr.bf16.mxu0 0
    %1586 = vmatpush2.bf16.msra.mxu0 0
    %1587 = vmatprep.subr.bf16.mxu0 0
    %1588 = vmatpush2.bf16.msra.mxu0 0
    %1589 = vmatprep.subr.bf16.mxu0 0
    %1590 = vmatpush2.bf16.msra.mxu0 0
    %1591 = vmatprep.subr.bf16.mxu0 0
    %1592 = vmatpush2.bf16.msra.mxu0 0
    %1593 = vmatprep.subr.bf16.mxu0 0
    %1594 = vmatpush2.bf16.msra.mxu0 0
    %1595 = vmatprep.subr.bf16.mxu0 0
    %1596 = vmatpush2.bf16.msra.mxu0 0
    %1597 = vmatprep.mubr.bf16.mxu0 0
    %1598 = vmatmul.mubr.bf16.gmra.mxu0 %v1560
    %v1599 = vpop.f32.mrf.mxu0
    %v1600 = vadd.f32 0.0, %v1599
    %v1601 = vpop.f32.mrf.mxu0
    %v1602 = vpop.f32.mrf.mxu0
    %v1603 = vadd.f32 0.0, %v1602
    %v1604 = vpop.f32.mrf.mxu0
    %1605 = vdwg.mxu0
    %v1606 = vadd.f32 %v1319, %v1600
    %v1607 = vadd.f32 %v1320, %v1603
    %1608 = vrot.lane.b32.xlu0 %v161, 108
    %v1609 = vpop.permute.xlu0 %1608
    %1610 = vrot.lane.b32.xlu0 %v163, 76
    %v1611 = vpop.permute.xlu0 %1610
    %v1613 = vsel %vm168, %v1609, 0
    %v1616 = vsel %vm168, %v1611, 0
    %1618 = vmatprep.subr.bf16.mxu0 0
    %1619 = vmatpush1.bf16.xpose.msra.mxu0 0
    %1620 = vmatprep.subr.bf16.mxu0 0
    %1621 = vmatpush1.bf16.xpose.msra.mxu0 0
    %1622 = vmatprep.subr.bf16.mxu0 0
    %1623 = vmatpush1.bf16.xpose.msra.mxu0 0
    %1624 = vmatprep.subr.bf16.mxu0 0
    %1625 = vmatpush1.bf16.xpose.msra.mxu0 0
    %1626 = vmatprep.subr.bf16.mxu0 0
    %1627 = vmatpush1.bf16.xpose.msra.mxu0 0
    %1628 = vmatprep.subr.bf16.mxu0 0
    %1629 = vmatpush1.bf16.xpose.msra.mxu0 0
    %1630 = vmatprep.subr.bf16.mxu0 0
    %1631 = vmatpush1.bf16.xpose.msra.mxu0 0
    %1632 = vmatprep.subr.bf16.mxu0 0
    %1633 = vmatpush1.bf16.xpose.msra.mxu0 %v1616
    %1634 = vmatprep.subr.bf16.mxu0 0
    %1635 = vmatpush2.bf16.xpose.msra.mxu0 0
    %1636 = vmatprep.subr.bf16.mxu0 0
    %1637 = vmatpush2.bf16.xpose.msra.mxu0 0
    %1638 = vmatprep.subr.bf16.mxu0 0
    %1639 = vmatpush2.bf16.xpose.msra.mxu0 0
    %1640 = vmatprep.subr.bf16.mxu0 0
    %1641 = vmatpush2.bf16.xpose.msra.mxu0 0
    %1642 = vmatprep.subr.bf16.mxu0 0
    %1643 = vmatpush2.bf16.xpose.msra.mxu0 0
    %1644 = vmatprep.subr.bf16.mxu0 0
    %1645 = vmatpush2.bf16.xpose.msra.mxu0 0
    %1646 = vmatprep.subr.bf16.mxu0 0
    %1647 = vmatpush2.bf16.xpose.msra.mxu0 0
    %1648 = vmatprep.subr.bf16.mxu0 0
    %1649 = vmatpush2.bf16.xpose.msra.mxu0 0
    %1650 = vmatprep.mubr.bf16.mxu0 0
    %1651 = vmatmul.mubr.bf16.gmra.mxu0 %v1613
    %v1652 = vpop.f32.mrf.mxu0
    %v1653 = vadd.f32 0.0, %v1652
    %v1654 = vpop.f32.mrf.mxu0
    %v1655 = vpop.f32.mrf.mxu0
    %v1656 = vpop.f32.mrf.mxu0
    %1657 = vdwg.mxu0
    %1658 = vrot.lane.b32.xlu0 %v162, 108
    %v1659 = vpop.permute.xlu0 %1658
    %1660 = vrot.lane.b32.xlu0 %v164, 76
    %v1661 = vpop.permute.xlu0 %1660
    %v1663 = vsel %vm168, %v1659, 0
    %v1666 = vsel %vm168, %v1661, 0
    %1668 = vmatprep.subr.bf16.mxu0 0
    %1669 = vmatpush1.bf16.xpose.msra.mxu0 0
    %1670 = vmatprep.subr.bf16.mxu0 0
    %1671 = vmatpush1.bf16.xpose.msra.mxu0 0
    %1672 = vmatprep.subr.bf16.mxu0 0
    %1673 = vmatpush1.bf16.xpose.msra.mxu0 0
    %1674 = vmatprep.subr.bf16.mxu0 0
    %1675 = vmatpush1.bf16.xpose.msra.mxu0 0
    %1676 = vmatprep.subr.bf16.mxu0 0
    %1677 = vmatpush1.bf16.xpose.msra.mxu0 0
    %1678 = vmatprep.subr.bf16.mxu0 0
    %1679 = vmatpush1.bf16.xpose.msra.mxu0 0
    %1680 = vmatprep.subr.bf16.mxu0 0
    %1681 = vmatpush1.bf16.xpose.msra.mxu0 0
    %1682 = vmatprep.subr.bf16.mxu0 0
    %1683 = vmatpush1.bf16.xpose.msra.mxu0 %v1666
    %1684 = vmatprep.subr.bf16.mxu0 0
    %1685 = vmatpush2.bf16.xpose.msra.mxu0 0
    %1686 = vmatprep.subr.bf16.mxu0 0
    %1687 = vmatpush2.bf16.xpose.msra.mxu0 0
    %1688 = vmatprep.subr.bf16.mxu0 0
    %1689 = vmatpush2.bf16.xpose.msra.mxu0 0
    %1690 = vmatprep.subr.bf16.mxu0 0
    %1691 = vmatpush2.bf16.xpose.msra.mxu0 0
    %1692 = vmatprep.subr.bf16.mxu0 0
    %1693 = vmatpush2.bf16.xpose.msra.mxu0 0
    %1694 = vmatprep.subr.bf16.mxu0 0
    %1695 = vmatpush2.bf16.xpose.msra.mxu0 0
    %1696 = vmatprep.subr.bf16.mxu0 0
    %1697 = vmatpush2.bf16.xpose.msra.mxu0 0
    %1698 = vmatprep.subr.bf16.mxu0 0
    %1699 = vmatpush2.bf16.xpose.msra.mxu0 0
    %1700 = vmatprep.mubr.bf16.mxu0 0
    %1701 = vmatmul.mubr.bf16.gmra.mxu0 %v1663
    %v1702 = vpop.f32.mrf.mxu0
    %v1703 = vadd.f32 0.0, %v1702
    %v1704 = vpop.f32.mrf.mxu0
    %v1705 = vpop.f32.mrf.mxu0
    %v1706 = vpop.f32.mrf.mxu0
    %1707 = vdwg.mxu0
    %v1708 = vsel %vm264, %v1653, -inf
    %1709 = vmax.xlane.f32.xlu0 %v1708
    %v1710 = vpop.xlane.xlu0 %1709
    %v1711 = vsel %vm264, %v1703, -inf
    %1712 = vmax.xlane.f32.xlu0 %v1711
    %v1713 = vpop.xlane.xlu0 %1712
    %v1714 = vsub.f32 %v1653, %v1710
    %v1715 = vsub.f32 %v1703, %v1713
    %v1716 = vmul.f32 %v1714, 1.442695
    %v1717 = vpow.pop %v1716
    %v1718 = vmul.f32 %v1715, 1.442695
    %v1719 = vpow.pop %v1718
    %v1720 = vsel %vm264, %v1717, 0.0
    %1721 = vadd.xlane.f32.xlu0 %v1720
    %v1722 = vpop.xlane.xlu0 %1721
    %v1723 = vsel %vm264, %v1719, 0.0
    %1724 = vadd.xlane.f32.xlu0 %v1723
    %v1725 = vpop.xlane.xlu0 %1724
    %v1726 = vrcp.pop %v1722
    %v1727 = vmul.f32 %v1717, %v1726
    %v1728 = vrcp.pop %v1725
    %v1729 = vmul.f32 %v1719, %v1728
    %vm1730 = vcmp.ge.f32.partialorder %v1653, 0.0
    %vm1731 = vcmp.ge.f32.partialorder %v1703, 0.0
    %v1732 = vmul.f32 %v1653, 0.01
    %v1733 = vmul.f32 %v1703, 0.01
    %v1734 = vsel %vm1730, %v1653, %v1732
    %v1735 = vsel %vm1731, %v1703, %v1733
    %s1736 = sld [smem:[#allocation8 + $0x5]]
    %v1737 = vstv %s1736
    %v1738 = vmul.f32 %v1737, %v1727
    %v1739 = vmul.f32 %v1737, %v1729
    %s1740 = sld [smem:[#allocation9 + $0x5]]
    %v1741 = vstv %s1740
    %v1742 = vmul.f32 %v1741, %v1734
    %v1743 = vmul.f32 %v1741, %v1735
    %v1744 = vadd.f32 %v1738, %v1742
    %v1745 = vadd.f32 %v1739, %v1743
    %v1746 = vpack.c.bf16 %v1744, %v1744
    %v1747 = vpack.c.bf16 %v1745, %v1745
    %1748 = vrot.lane.b32.xlu0 %v163, 44
    %v1749 = vpop.permute.xlu0 %1748
    %v1751 = vsel %vm264, %v1746, 0
    %v1754 = vsel %vm310, %v1749, 0
    %1756 = vmatprep.subr.bf16.mxu0 0
    %1757 = vmatpush1.bf16.msra.mxu0 0
    %1758 = vmatprep.subr.bf16.mxu0 0
    %1759 = vmatpush1.bf16.msra.mxu0 0
    %1760 = vmatprep.subr.bf16.mxu0 0
    %1761 = vmatpush1.bf16.msra.mxu0 0
    %1762 = vmatprep.subr.bf16.mxu0 0
    %1763 = vmatpush1.bf16.msra.mxu0 0
    %1764 = vmatprep.subr.bf16.mxu0 0
    %1765 = vmatpush1.bf16.msra.mxu0 0
    %1766 = vmatprep.subr.bf16.mxu0 0
    %1767 = vmatpush1.bf16.msra.mxu0 0
    %1768 = vmatprep.subr.bf16.mxu0 0
    %1769 = vmatpush1.bf16.msra.mxu0 0
    %1770 = vmatprep.subr.bf16.mxu0 0
    %1771 = vmatpush1.bf16.msra.mxu0 %v1754
    %1772 = vmatprep.subr.bf16.mxu0 0
    %1773 = vmatpush2.bf16.msra.mxu0 0
    %1774 = vmatprep.subr.bf16.mxu0 0
    %1775 = vmatpush2.bf16.msra.mxu0 0
    %1776 = vmatprep.subr.bf16.mxu0 0
    %1777 = vmatpush2.bf16.msra.mxu0 0
    %1778 = vmatprep.subr.bf16.mxu0 0
    %1779 = vmatpush2.bf16.msra.mxu0 0
    %1780 = vmatprep.subr.bf16.mxu0 0
    %1781 = vmatpush2.bf16.msra.mxu0 0
    %1782 = vmatprep.subr.bf16.mxu0 0
    %1783 = vmatpush2.bf16.msra.mxu0 0
    %1784 = vmatprep.subr.bf16.mxu0 0
    %1785 = vmatpush2.bf16.msra.mxu0 0
    %1786 = vmatprep.subr.bf16.mxu0 0
    %1787 = vmatpush2.bf16.msra.mxu0 0
    %1788 = vmatprep.mubr.bf16.mxu0 0
    %1789 = vmatmul.mubr.bf16.gmra.mxu0 %v1751
    %v1790 = vpop.f32.mrf.mxu0
    %v1791 = vadd.f32 0.0, %v1790
    %v1792 = vpop.f32.mrf.mxu0
    %v1793 = vpop.f32.mrf.mxu0
    %v1794 = vpop.f32.mrf.mxu0
    %1795 = vdwg.mxu0
    %1796 = vrot.lane.b32.xlu0 %v164, 44
    %v1797 = vpop.permute.xlu0 %1796
    %v1799 = vsel %vm264, %v1747, 0
    %v1802 = vsel %vm310, %v1797, 0
    %1804 = vmatprep.subr.bf16.mxu0 0
    %1805 = vmatpush1.bf16.msra.mxu0 0
    %1806 = vmatprep.subr.bf16.mxu0 0
    %1807 = vmatpush1.bf16.msra.mxu0 0
    %1808 = vmatprep.subr.bf16.mxu0 0
    %1809 = vmatpush1.bf16.msra.mxu0 0
    %1810 = vmatprep.subr.bf16.mxu0 0
    %1811 = vmatpush1.bf16.msra.mxu0 0
    %1812 = vmatprep.subr.bf16.mxu0 0
    %1813 = vmatpush1.bf16.msra.mxu0 0
    %1814 = vmatprep.subr.bf16.mxu0 0
    %1815 = vmatpush1.bf16.msra.mxu0 0
    %1816 = vmatprep.subr.bf16.mxu0 0
    %1817 = vmatpush1.bf16.msra.mxu0 0
    %1818 = vmatprep.subr.bf16.mxu0 0
    %1819 = vmatpush1.bf16.msra.mxu0 %v1802
    %1820 = vmatprep.subr.bf16.mxu0 0
    %1821 = vmatpush2.bf16.msra.mxu0 0
    %1822 = vmatprep.subr.bf16.mxu0 0
    %1823 = vmatpush2.bf16.msra.mxu0 0
    %1824 = vmatprep.subr.bf16.mxu0 0
    %1825 = vmatpush2.bf16.msra.mxu0 0
    %1826 = vmatprep.subr.bf16.mxu0 0
    %1827 = vmatpush2.bf16.msra.mxu0 0
    %1828 = vmatprep.subr.bf16.mxu0 0
    %1829 = vmatpush2.bf16.msra.mxu0 0
    %1830 = vmatprep.subr.bf16.mxu0 0
    %1831 = vmatpush2.bf16.msra.mxu0 0
    %1832 = vmatprep.subr.bf16.mxu0 0
    %1833 = vmatpush2.bf16.msra.mxu0 0
    %1834 = vmatprep.subr.bf16.mxu0 0
    %1835 = vmatpush2.bf16.msra.mxu0 0
    %1836 = vmatprep.mubr.bf16.mxu0 0
    %1837 = vmatmul.mubr.bf16.gmra.mxu0 %v1799
    %v1838 = vpop.f32.mrf.mxu0
    %v1839 = vadd.f32 0.0, %v1838
    %v1840 = vpop.f32.mrf.mxu0
    %v1841 = vpop.f32.mrf.mxu0
    %v1842 = vpop.f32.mrf.mxu0
    %1843 = vdwg.mxu0
    %v1844 = vpack.c.bf16 %v1839, %v1791
    %v1845 = vld [vmem:[#allocation11 + $0x8] sm:$0xc]
    %v1847 = vunpack.c.l.b16 %v1845
    %v1848 = vpack.c.b16 %v1847, %v1847
    %v1849 = vrot.slane %v1848, 2
    %v1851 = vsel %vm168, %v1844, 0
    %v1854 = vsel %vm651, %v1849, 0
    %1856 = vmatprep.subr.bf16.mxu0 0
    %1857 = vmatpush1.bf16.msra.mxu0 0
    %1858 = vmatprep.subr.bf16.mxu0 0
    %1859 = vmatpush1.bf16.msra.mxu0 0
    %1860 = vmatprep.subr.bf16.mxu0 0
    %1861 = vmatpush1.bf16.msra.mxu0 0
    %1862 = vmatprep.subr.bf16.mxu0 0
    %1863 = vmatpush1.bf16.msra.mxu0 0
    %1864 = vmatprep.subr.bf16.mxu0 0
    %1865 = vmatpush1.bf16.msra.mxu0 0
    %1866 = vmatprep.subr.bf16.mxu0 0
    %1867 = vmatpush1.bf16.msra.mxu0 0
    %1868 = vmatprep.subr.bf16.mxu0 0
    %1869 = vmatpush1.bf16.msra.mxu0 0
    %1870 = vmatprep.subr.bf16.mxu0 0
    %1871 = vmatpush1.bf16.msra.mxu0 %v1854
    %1872 = vmatprep.subr.bf16.mxu0 0
    %1873 = vmatpush2.bf16.msra.mxu0 0
    %1874 = vmatprep.subr.bf16.mxu0 0
    %1875 = vmatpush2.bf16.msra.mxu0 0
    %1876 = vmatprep.subr.bf16.mxu0 0
    %1877 = vmatpush2.bf16.msra.mxu0 0
    %1878 = vmatprep.subr.bf16.mxu0 0
    %1879 = vmatpush2.bf16.msra.mxu0 0
    %1880 = vmatprep.subr.bf16.mxu0 0
    %1881 = vmatpush2.bf16.msra.mxu0 0
    %1882 = vmatprep.subr.bf16.mxu0 0
    %1883 = vmatpush2.bf16.msra.mxu0 0
    %1884 = vmatprep.subr.bf16.mxu0 0
    %1885 = vmatpush2.bf16.msra.mxu0 0
    %1886 = vmatprep.subr.bf16.mxu0 0
    %1887 = vmatpush2.bf16.msra.mxu0 0
    %1888 = vmatprep.mubr.bf16.mxu0 0
    %1889 = vmatmul.mubr.bf16.gmra.mxu0 %v1851
    %v1890 = vpop.f32.mrf.mxu0
    %v1891 = vadd.f32 0.0, %v1890
    %v1892 = vpop.f32.mrf.mxu0
    %v1893 = vpop.f32.mrf.mxu0
    %v1894 = vadd.f32 0.0, %v1893
    %v1895 = vpop.f32.mrf.mxu0
    %1896 = vdwg.mxu0
    %v1897 = vadd.f32 %v1606, %v1891
    %v1898 = vadd.f32 %v1607, %v1894
    %1899 = vrot.lane.b32.xlu0 %v161, 104
    %v1900 = vpop.permute.xlu0 %1899
    %1901 = vrot.lane.b32.xlu0 %v163, 72
    %v1902 = vpop.permute.xlu0 %1901
    %v1904 = vsel %vm168, %v1900, 0
    %v1907 = vsel %vm168, %v1902, 0
    %1909 = vmatprep.subr.bf16.mxu0 0
    %1910 = vmatpush1.bf16.xpose.msra.mxu0 0
    %1911 = vmatprep.subr.bf16.mxu0 0
    %1912 = vmatpush1.bf16.xpose.msra.mxu0 0
    %1913 = vmatprep.subr.bf16.mxu0 0
    %1914 = vmatpush1.bf16.xpose.msra.mxu0 0
    %1915 = vmatprep.subr.bf16.mxu0 0
    %1916 = vmatpush1.bf16.xpose.msra.mxu0 0
    %1917 = vmatprep.subr.bf16.mxu0 0
    %1918 = vmatpush1.bf16.xpose.msra.mxu0 0
    %1919 = vmatprep.subr.bf16.mxu0 0
    %1920 = vmatpush1.bf16.xpose.msra.mxu0 0
    %1921 = vmatprep.subr.bf16.mxu0 0
    %1922 = vmatpush1.bf16.xpose.msra.mxu0 0
    %1923 = vmatprep.subr.bf16.mxu0 0
    %1924 = vmatpush1.bf16.xpose.msra.mxu0 %v1907
    %1925 = vmatprep.subr.bf16.mxu0 0
    %1926 = vmatpush2.bf16.xpose.msra.mxu0 0
    %1927 = vmatprep.subr.bf16.mxu0 0
    %1928 = vmatpush2.bf16.xpose.msra.mxu0 0
    %1929 = vmatprep.subr.bf16.mxu0 0
    %1930 = vmatpush2.bf16.xpose.msra.mxu0 0
    %1931 = vmatprep.subr.bf16.mxu0 0
    %1932 = vmatpush2.bf16.xpose.msra.mxu0 0
    %1933 = vmatprep.subr.bf16.mxu0 0
    %1934 = vmatpush2.bf16.xpose.msra.mxu0 0
    %1935 = vmatprep.subr.bf16.mxu0 0
    %1936 = vmatpush2.bf16.xpose.msra.mxu0 0
    %1937 = vmatprep.subr.bf16.mxu0 0
    %1938 = vmatpush2.bf16.xpose.msra.mxu0 0
    %1939 = vmatprep.subr.bf16.mxu0 0
    %1940 = vmatpush2.bf16.xpose.msra.mxu0 0
    %1941 = vmatprep.mubr.bf16.mxu0 0
    %1942 = vmatmul.mubr.bf16.gmra.mxu0 %v1904
    %v1943 = vpop.f32.mrf.mxu0
    %v1944 = vadd.f32 0.0, %v1943
    %v1945 = vpop.f32.mrf.mxu0
    %v1946 = vpop.f32.mrf.mxu0
    %v1947 = vpop.f32.mrf.mxu0
    %1948 = vdwg.mxu0
    %1949 = vrot.lane.b32.xlu0 %v162, 104
    %v1950 = vpop.permute.xlu0 %1949
    %1951 = vrot.lane.b32.xlu0 %v164, 72
    %v1952 = vpop.permute.xlu0 %1951
    %v1954 = vsel %vm168, %v1950, 0
    %v1957 = vsel %vm168, %v1952, 0
    %1959 = vmatprep.subr.bf16.mxu0 0
    %1960 = vmatpush1.bf16.xpose.msra.mxu0 0
    %1961 = vmatprep.subr.bf16.mxu0 0
    %1962 = vmatpush1.bf16.xpose.msra.mxu0 0
    %1963 = vmatprep.subr.bf16.mxu0 0
    %1964 = vmatpush1.bf16.xpose.msra.mxu0 0
    %1965 = vmatprep.subr.bf16.mxu0 0
    %1966 = vmatpush1.bf16.xpose.msra.mxu0 0
    %1967 = vmatprep.subr.bf16.mxu0 0
    %1968 = vmatpush1.bf16.xpose.msra.mxu0 0
    %1969 = vmatprep.subr.bf16.mxu0 0
    %1970 = vmatpush1.bf16.xpose.msra.mxu0 0
    %1971 = vmatprep.subr.bf16.mxu0 0
    %1972 = vmatpush1.bf16.xpose.msra.mxu0 0
    %1973 = vmatprep.subr.bf16.mxu0 0
    %1974 = vmatpush1.bf16.xpose.msra.mxu0 %v1957
    %1975 = vmatprep.subr.bf16.mxu0 0
    %1976 = vmatpush2.bf16.xpose.msra.mxu0 0
    %1977 = vmatprep.subr.bf16.mxu0 0
    %1978 = vmatpush2.bf16.xpose.msra.mxu0 0
    %1979 = vmatprep.subr.bf16.mxu0 0
    %1980 = vmatpush2.bf16.xpose.msra.mxu0 0
    %1981 = vmatprep.subr.bf16.mxu0 0
    %1982 = vmatpush2.bf16.xpose.msra.mxu0 0
    %1983 = vmatprep.subr.bf16.mxu0 0
    %1984 = vmatpush2.bf16.xpose.msra.mxu0 0
    %1985 = vmatprep.subr.bf16.mxu0 0
    %1986 = vmatpush2.bf16.xpose.msra.mxu0 0
    %1987 = vmatprep.subr.bf16.mxu0 0
    %1988 = vmatpush2.bf16.xpose.msra.mxu0 0
    %1989 = vmatprep.subr.bf16.mxu0 0
    %1990 = vmatpush2.bf16.xpose.msra.mxu0 0
    %1991 = vmatprep.mubr.bf16.mxu0 0
    %1992 = vmatmul.mubr.bf16.gmra.mxu0 %v1954
    %v1993 = vpop.f32.mrf.mxu0
    %v1994 = vadd.f32 0.0, %v1993
    %v1995 = vpop.f32.mrf.mxu0
    %v1996 = vpop.f32.mrf.mxu0
    %v1997 = vpop.f32.mrf.mxu0
    %1998 = vdwg.mxu0
    %v1999 = vsel %vm264, %v1944, -inf
    %2000 = vmax.xlane.f32.xlu0 %v1999
    %v2001 = vpop.xlane.xlu0 %2000
    %v2002 = vsel %vm264, %v1994, -inf
    %2003 = vmax.xlane.f32.xlu0 %v2002
    %v2004 = vpop.xlane.xlu0 %2003
    %v2005 = vsub.f32 %v1944, %v2001
    %v2006 = vsub.f32 %v1994, %v2004
    %v2007 = vmul.f32 %v2005, 1.442695
    %v2008 = vpow.pop %v2007
    %v2009 = vmul.f32 %v2006, 1.442695
    %v2010 = vpow.pop %v2009
    %v2011 = vsel %vm264, %v2008, 0.0
    %2012 = vadd.xlane.f32.xlu0 %v2011
    %v2013 = vpop.xlane.xlu0 %2012
    %v2014 = vsel %vm264, %v2010, 0.0
    %2015 = vadd.xlane.f32.xlu0 %v2014
    %v2016 = vpop.xlane.xlu0 %2015
    %v2017 = vrcp.pop %v2013
    %v2018 = vmul.f32 %v2008, %v2017
    %v2019 = vrcp.pop %v2016
    %v2020 = vmul.f32 %v2010, %v2019
    %vm2021 = vcmp.ge.f32.partialorder %v1944, 0.0
    %vm2022 = vcmp.ge.f32.partialorder %v1994, 0.0
    %v2023 = vmul.f32 %v1944, 0.01
    %v2024 = vmul.f32 %v1994, 0.01
    %v2025 = vsel %vm2021, %v1944, %v2023
    %v2026 = vsel %vm2022, %v1994, %v2024
    %s2027 = sld [smem:[#allocation8 + $0x6]]
    %v2028 = vstv %s2027
    %v2029 = vmul.f32 %v2028, %v2018
    %v2030 = vmul.f32 %v2028, %v2020
    %s2031 = sld [smem:[#allocation9 + $0x6]]
    %v2032 = vstv %s2031
    %v2033 = vmul.f32 %v2032, %v2025
    %v2034 = vmul.f32 %v2032, %v2026
    %v2035 = vadd.f32 %v2029, %v2033
    %v2036 = vadd.f32 %v2030, %v2034
    %v2037 = vpack.c.bf16 %v2035, %v2035
    %v2038 = vpack.c.bf16 %v2036, %v2036
    %2039 = vrot.lane.b32.xlu0 %v163, 40
    %v2040 = vpop.permute.xlu0 %2039
    %v2042 = vsel %vm264, %v2037, 0
    %v2045 = vsel %vm310, %v2040, 0
    %2047 = vmatprep.subr.bf16.mxu0 0
    %2048 = vmatpush1.bf16.msra.mxu0 0
    %2049 = vmatprep.subr.bf16.mxu0 0
    %2050 = vmatpush1.bf16.msra.mxu0 0
    %2051 = vmatprep.subr.bf16.mxu0 0
    %2052 = vmatpush1.bf16.msra.mxu0 0
    %2053 = vmatprep.subr.bf16.mxu0 0
    %2054 = vmatpush1.bf16.msra.mxu0 0
    %2055 = vmatprep.subr.bf16.mxu0 0
    %2056 = vmatpush1.bf16.msra.mxu0 0
    %2057 = vmatprep.subr.bf16.mxu0 0
    %2058 = vmatpush1.bf16.msra.mxu0 0
    %2059 = vmatprep.subr.bf16.mxu0 0
    %2060 = vmatpush1.bf16.msra.mxu0 0
    %2061 = vmatprep.subr.bf16.mxu0 0
    %2062 = vmatpush1.bf16.msra.mxu0 %v2045
    %2063 = vmatprep.subr.bf16.mxu0 0
    %2064 = vmatpush2.bf16.msra.mxu0 0
    %2065 = vmatprep.subr.bf16.mxu0 0
    %2066 = vmatpush2.bf16.msra.mxu0 0
    %2067 = vmatprep.subr.bf16.mxu0 0
    %2068 = vmatpush2.bf16.msra.mxu0 0
    %2069 = vmatprep.subr.bf16.mxu0 0
    %2070 = vmatpush2.bf16.msra.mxu0 0
    %2071 = vmatprep.subr.bf16.mxu0 0
    %2072 = vmatpush2.bf16.msra.mxu0 0
    %2073 = vmatprep.subr.bf16.mxu0 0
    %2074 = vmatpush2.bf16.msra.mxu0 0
    %2075 = vmatprep.subr.bf16.mxu0 0
    %2076 = vmatpush2.bf16.msra.mxu0 0
    %2077 = vmatprep.subr.bf16.mxu0 0
    %2078 = vmatpush2.bf16.msra.mxu0 0
    %2079 = vmatprep.mubr.bf16.mxu0 0
    %2080 = vmatmul.mubr.bf16.gmra.mxu0 %v2042
    %v2081 = vpop.f32.mrf.mxu0
    %v2082 = vadd.f32 0.0, %v2081
    %v2083 = vpop.f32.mrf.mxu0
    %v2084 = vpop.f32.mrf.mxu0
    %v2085 = vpop.f32.mrf.mxu0
    %2086 = vdwg.mxu0
    %2087 = vrot.lane.b32.xlu0 %v164, 40
    %v2088 = vpop.permute.xlu0 %2087
    %v2090 = vsel %vm264, %v2038, 0
    %v2093 = vsel %vm310, %v2088, 0
    %2095 = vmatprep.subr.bf16.mxu0 0
    %2096 = vmatpush1.bf16.msra.mxu0 0
    %2097 = vmatprep.subr.bf16.mxu0 0
    %2098 = vmatpush1.bf16.msra.mxu0 0
    %2099 = vmatprep.subr.bf16.mxu0 0
    %2100 = vmatpush1.bf16.msra.mxu0 0
    %2101 = vmatprep.subr.bf16.mxu0 0
    %2102 = vmatpush1.bf16.msra.mxu0 0
    %2103 = vmatprep.subr.bf16.mxu0 0
    %2104 = vmatpush1.bf16.msra.mxu0 0
    %2105 = vmatprep.subr.bf16.mxu0 0
    %2106 = vmatpush1.bf16.msra.mxu0 0
    %2107 = vmatprep.subr.bf16.mxu0 0
    %2108 = vmatpush1.bf16.msra.mxu0 0
    %2109 = vmatprep.subr.bf16.mxu0 0
    %2110 = vmatpush1.bf16.msra.mxu0 %v2093
    %2111 = vmatprep.subr.bf16.mxu0 0
    %2112 = vmatpush2.bf16.msra.mxu0 0
    %2113 = vmatprep.subr.bf16.mxu0 0
    %2114 = vmatpush2.bf16.msra.mxu0 0
    %2115 = vmatprep.subr.bf16.mxu0 0
    %2116 = vmatpush2.bf16.msra.mxu0 0
    %2117 = vmatprep.subr.bf16.mxu0 0
    %2118 = vmatpush2.bf16.msra.mxu0 0
    %2119 = vmatprep.subr.bf16.mxu0 0
    %2120 = vmatpush2.bf16.msra.mxu0 0
    %2121 = vmatprep.subr.bf16.mxu0 0
    %2122 = vmatpush2.bf16.msra.mxu0 0
    %2123 = vmatprep.subr.bf16.mxu0 0
    %2124 = vmatpush2.bf16.msra.mxu0 0
    %2125 = vmatprep.subr.bf16.mxu0 0
    %2126 = vmatpush2.bf16.msra.mxu0 0
    %2127 = vmatprep.mubr.bf16.mxu0 0
    %2128 = vmatmul.mubr.bf16.gmra.mxu0 %v2090
    %v2129 = vpop.f32.mrf.mxu0
    %v2130 = vadd.f32 0.0, %v2129
    %v2131 = vpop.f32.mrf.mxu0
    %v2132 = vpop.f32.mrf.mxu0
    %v2133 = vpop.f32.mrf.mxu0
    %2134 = vdwg.mxu0
    %v2135 = vpack.c.bf16 %v2130, %v2082
    %v2136 = vld [vmem:[#allocation11 + $0xc] sm:$0x3]
    %v2138 = vsel %vm168, %v2135, 0
    %v2141 = vsel %vm651, %v2136, 0
    %2143 = vmatprep.subr.bf16.mxu0 0
    %2144 = vmatpush1.bf16.msra.mxu0 0
    %2145 = vmatprep.subr.bf16.mxu0 0
    %2146 = vmatpush1.bf16.msra.mxu0 0
    %2147 = vmatprep.subr.bf16.mxu0 0
    %2148 = vmatpush1.bf16.msra.mxu0 0
    %2149 = vmatprep.subr.bf16.mxu0 0
    %2150 = vmatpush1.bf16.msra.mxu0 0
    %2151 = vmatprep.subr.bf16.mxu0 0
    %2152 = vmatpush1.bf16.msra.mxu0 0
    %2153 = vmatprep.subr.bf16.mxu0 0
    %2154 = vmatpush1.bf16.msra.mxu0 0
    %2155 = vmatprep.subr.bf16.mxu0 0
    %2156 = vmatpush1.bf16.msra.mxu0 0
    %2157 = vmatprep.subr.bf16.mxu0 0
    %2158 = vmatpush1.bf16.msra.mxu0 %v2141
    %2159 = vmatprep.subr.bf16.mxu0 0
    %2160 = vmatpush2.bf16.msra.mxu0 0
    %2161 = vmatprep.subr.bf16.mxu0 0
    %2162 = vmatpush2.bf16.msra.mxu0 0
    %2163 = vmatprep.subr.bf16.mxu0 0
    %2164 = vmatpush2.bf16.msra.mxu0 0
    %2165 = vmatprep.subr.bf16.mxu0 0
    %2166 = vmatpush2.bf16.msra.mxu0 0
    %2167 = vmatprep.subr.bf16.mxu0 0
    %2168 = vmatpush2.bf16.msra.mxu0 0
    %2169 = vmatprep.subr.bf16.mxu0 0
    %2170 = vmatpush2.bf16.msra.mxu0 0
    %2171 = vmatprep.subr.bf16.mxu0 0
    %2172 = vmatpush2.bf16.msra.mxu0 0
    %2173 = vmatprep.subr.bf16.mxu0 0
    %2174 = vmatpush2.bf16.msra.mxu0 0
    %2175 = vmatprep.mubr.bf16.mxu0 0
    %2176 = vmatmul.mubr.bf16.gmra.mxu0 %v2138
    %v2177 = vpop.f32.mrf.mxu0
    %v2178 = vadd.f32 0.0, %v2177
    %v2179 = vpop.f32.mrf.mxu0
    %v2180 = vpop.f32.mrf.mxu0
    %v2181 = vadd.f32 0.0, %v2180
    %v2182 = vpop.f32.mrf.mxu0
    %2183 = vdwg.mxu0
    %v2184 = vadd.f32 %v1897, %v2178
    %v2185 = vadd.f32 %v1898, %v2181
    %2186 = vrot.lane.b32.xlu0 %v161, 100
    %v2187 = vpop.permute.xlu0 %2186
    %2188 = vrot.lane.b32.xlu0 %v163, 68
    %v2189 = vpop.permute.xlu0 %2188
    %v2191 = vsel %vm168, %v2187, 0
    %v2194 = vsel %vm168, %v2189, 0
    %2196 = vmatprep.subr.bf16.mxu0 0
    %2197 = vmatpush1.bf16.xpose.msra.mxu0 0
    %2198 = vmatprep.subr.bf16.mxu0 0
    %2199 = vmatpush1.bf16.xpose.msra.mxu0 0
    %2200 = vmatprep.subr.bf16.mxu0 0
    %2201 = vmatpush1.bf16.xpose.msra.mxu0 0
    %2202 = vmatprep.subr.bf16.mxu0 0
    %2203 = vmatpush1.bf16.xpose.msra.mxu0 0
    %2204 = vmatprep.subr.bf16.mxu0 0
    %2205 = vmatpush1.bf16.xpose.msra.mxu0 0
    %2206 = vmatprep.subr.bf16.mxu0 0
    %2207 = vmatpush1.bf16.xpose.msra.mxu0 0
    %2208 = vmatprep.subr.bf16.mxu0 0
    %2209 = vmatpush1.bf16.xpose.msra.mxu0 0
    %2210 = vmatprep.subr.bf16.mxu0 0
    %2211 = vmatpush1.bf16.xpose.msra.mxu0 %v2194
    %2212 = vmatprep.subr.bf16.mxu0 0
    %2213 = vmatpush2.bf16.xpose.msra.mxu0 0
    %2214 = vmatprep.subr.bf16.mxu0 0
    %2215 = vmatpush2.bf16.xpose.msra.mxu0 0
    %2216 = vmatprep.subr.bf16.mxu0 0
    %2217 = vmatpush2.bf16.xpose.msra.mxu0 0
    %2218 = vmatprep.subr.bf16.mxu0 0
    %2219 = vmatpush2.bf16.xpose.msra.mxu0 0
    %2220 = vmatprep.subr.bf16.mxu0 0
    %2221 = vmatpush2.bf16.xpose.msra.mxu0 0
    %2222 = vmatprep.subr.bf16.mxu0 0
    %2223 = vmatpush2.bf16.xpose.msra.mxu0 0
    %2224 = vmatprep.subr.bf16.mxu0 0
    %2225 = vmatpush2.bf16.xpose.msra.mxu0 0
    %2226 = vmatprep.subr.bf16.mxu0 0
    %2227 = vmatpush2.bf16.xpose.msra.mxu0 0
    %2228 = vmatprep.mubr.bf16.mxu0 0
    %2229 = vmatmul.mubr.bf16.gmra.mxu0 %v2191
    %v2230 = vpop.f32.mrf.mxu0
    %v2231 = vadd.f32 0.0, %v2230
    %v2232 = vpop.f32.mrf.mxu0
    %v2233 = vpop.f32.mrf.mxu0
    %v2234 = vpop.f32.mrf.mxu0
    %2235 = vdwg.mxu0
    %2236 = vrot.lane.b32.xlu0 %v162, 100
    %v2237 = vpop.permute.xlu0 %2236
    %2238 = vrot.lane.b32.xlu0 %v164, 68
    %v2239 = vpop.permute.xlu0 %2238
    %v2241 = vsel %vm168, %v2237, 0
    %v2244 = vsel %vm168, %v2239, 0
    %2246 = vmatprep.subr.bf16.mxu0 0
    %2247 = vmatpush1.bf16.xpose.msra.mxu0 0
    %2248 = vmatprep.subr.bf16.mxu0 0
    %2249 = vmatpush1.bf16.xpose.msra.mxu0 0
    %2250 = vmatprep.subr.bf16.mxu0 0
    %2251 = vmatpush1.bf16.xpose.msra.mxu0 0
    %2252 = vmatprep.subr.bf16.mxu0 0
    %2253 = vmatpush1.bf16.xpose.msra.mxu0 0
    %2254 = vmatprep.subr.bf16.mxu0 0
    %2255 = vmatpush1.bf16.xpose.msra.mxu0 0
    %2256 = vmatprep.subr.bf16.mxu0 0
    %2257 = vmatpush1.bf16.xpose.msra.mxu0 0
    %2258 = vmatprep.subr.bf16.mxu0 0
    %2259 = vmatpush1.bf16.xpose.msra.mxu0 0
    %2260 = vmatprep.subr.bf16.mxu0 0
    %2261 = vmatpush1.bf16.xpose.msra.mxu0 %v2244
    %2262 = vmatprep.subr.bf16.mxu0 0
    %2263 = vmatpush2.bf16.xpose.msra.mxu0 0
    %2264 = vmatprep.subr.bf16.mxu0 0
    %2265 = vmatpush2.bf16.xpose.msra.mxu0 0
    %2266 = vmatprep.subr.bf16.mxu0 0
    %2267 = vmatpush2.bf16.xpose.msra.mxu0 0
    %2268 = vmatprep.subr.bf16.mxu0 0
    %2269 = vmatpush2.bf16.xpose.msra.mxu0 0
    %2270 = vmatprep.subr.bf16.mxu0 0
    %2271 = vmatpush2.bf16.xpose.msra.mxu0 0
    %2272 = vmatprep.subr.bf16.mxu0 0
    %2273 = vmatpush2.bf16.xpose.msra.mxu0 0
    %2274 = vmatprep.subr.bf16.mxu0 0
    %2275 = vmatpush2.bf16.xpose.msra.mxu0 0
    %2276 = vmatprep.subr.bf16.mxu0 0
    %2277 = vmatpush2.bf16.xpose.msra.mxu0 0
    %2278 = vmatprep.mubr.bf16.mxu0 0
    %2279 = vmatmul.mubr.bf16.gmra.mxu0 %v2241
    %v2280 = vpop.f32.mrf.mxu0
    %v2281 = vadd.f32 0.0, %v2280
    %v2282 = vpop.f32.mrf.mxu0
    %v2283 = vpop.f32.mrf.mxu0
    %v2284 = vpop.f32.mrf.mxu0
    %2285 = vdwg.mxu0
    %v2286 = vsel %vm264, %v2231, -inf
    %2287 = vmax.xlane.f32.xlu0 %v2286
    %v2288 = vpop.xlane.xlu0 %2287
    %v2289 = vsel %vm264, %v2281, -inf
    %2290 = vmax.xlane.f32.xlu0 %v2289
    %v2291 = vpop.xlane.xlu0 %2290
    %v2292 = vsub.f32 %v2231, %v2288
    %v2293 = vsub.f32 %v2281, %v2291
    %v2294 = vmul.f32 %v2292, 1.442695
    %v2295 = vpow.pop %v2294
    %v2296 = vmul.f32 %v2293, 1.442695
    %v2297 = vpow.pop %v2296
    %v2298 = vsel %vm264, %v2295, 0.0
    %2299 = vadd.xlane.f32.xlu0 %v2298
    %v2300 = vpop.xlane.xlu0 %2299
    %v2301 = vsel %vm264, %v2297, 0.0
    %2302 = vadd.xlane.f32.xlu0 %v2301
    %v2303 = vpop.xlane.xlu0 %2302
    %v2304 = vrcp.pop %v2300
    %v2305 = vmul.f32 %v2295, %v2304
    %v2306 = vrcp.pop %v2303
    %v2307 = vmul.f32 %v2297, %v2306
    %vm2308 = vcmp.ge.f32.partialorder %v2231, 0.0
    %vm2309 = vcmp.ge.f32.partialorder %v2281, 0.0
    %v2310 = vmul.f32 %v2231, 0.01
    %v2311 = vmul.f32 %v2281, 0.01
    %v2312 = vsel %vm2308, %v2231, %v2310
    %v2313 = vsel %vm2309, %v2281, %v2311
    %s2314 = sld [smem:[#allocation8 + $0x7]]
    %v2315 = vstv %s2314
    %v2316 = vmul.f32 %v2315, %v2305
    %v2317 = vmul.f32 %v2315, %v2307
    %s2318 = sld [smem:[#allocation9 + $0x7]]
    %v2319 = vstv %s2318
    %v2320 = vmul.f32 %v2319, %v2312
    %v2321 = vmul.f32 %v2319, %v2313
    %v2322 = vadd.f32 %v2316, %v2320
    %v2323 = vadd.f32 %v2317, %v2321
    %v2324 = vpack.c.bf16 %v2322, %v2322
    %v2325 = vpack.c.bf16 %v2323, %v2323
    %2326 = vrot.lane.b32.xlu0 %v163, 36
    %v2327 = vpop.permute.xlu0 %2326
    %v2329 = vsel %vm264, %v2324, 0
    %v2332 = vsel %vm310, %v2327, 0
    %2334 = vmatprep.subr.bf16.mxu0 0
    %2335 = vmatpush1.bf16.msra.mxu0 0
    %2336 = vmatprep.subr.bf16.mxu0 0
    %2337 = vmatpush1.bf16.msra.mxu0 0
    %2338 = vmatprep.subr.bf16.mxu0 0
    %2339 = vmatpush1.bf16.msra.mxu0 0
    %2340 = vmatprep.subr.bf16.mxu0 0
    %2341 = vmatpush1.bf16.msra.mxu0 0
    %2342 = vmatprep.subr.bf16.mxu0 0
    %2343 = vmatpush1.bf16.msra.mxu0 0
    %2344 = vmatprep.subr.bf16.mxu0 0
    %2345 = vmatpush1.bf16.msra.mxu0 0
    %2346 = vmatprep.subr.bf16.mxu0 0
    %2347 = vmatpush1.bf16.msra.mxu0 0
    %2348 = vmatprep.subr.bf16.mxu0 0
    %2349 = vmatpush1.bf16.msra.mxu0 %v2332
    %2350 = vmatprep.subr.bf16.mxu0 0
    %2351 = vmatpush2.bf16.msra.mxu0 0
    %2352 = vmatprep.subr.bf16.mxu0 0
    %2353 = vmatpush2.bf16.msra.mxu0 0
    %2354 = vmatprep.subr.bf16.mxu0 0
    %2355 = vmatpush2.bf16.msra.mxu0 0
    %2356 = vmatprep.subr.bf16.mxu0 0
    %2357 = vmatpush2.bf16.msra.mxu0 0
    %2358 = vmatprep.subr.bf16.mxu0 0
    %2359 = vmatpush2.bf16.msra.mxu0 0
    %2360 = vmatprep.subr.bf16.mxu0 0
    %2361 = vmatpush2.bf16.msra.mxu0 0
    %2362 = vmatprep.subr.bf16.mxu0 0
    %2363 = vmatpush2.bf16.msra.mxu0 0
    %2364 = vmatprep.subr.bf16.mxu0 0
    %2365 = vmatpush2.bf16.msra.mxu0 0
    %2366 = vmatprep.mubr.bf16.mxu0 0
    %2367 = vmatmul.mubr.bf16.gmra.mxu0 %v2329
    %v2368 = vpop.f32.mrf.mxu0
    %v2369 = vadd.f32 0.0, %v2368
    %v2370 = vpop.f32.mrf.mxu0
    %v2371 = vpop.f32.mrf.mxu0
    %v2372 = vpop.f32.mrf.mxu0
    %2373 = vdwg.mxu0
    %2374 = vrot.lane.b32.xlu0 %v164, 36
    %v2375 = vpop.permute.xlu0 %2374
    %v2377 = vsel %vm264, %v2325, 0
    %v2380 = vsel %vm310, %v2375, 0
    %2382 = vmatprep.subr.bf16.mxu0 0
    %2383 = vmatpush1.bf16.msra.mxu0 0
    %2384 = vmatprep.subr.bf16.mxu0 0
    %2385 = vmatpush1.bf16.msra.mxu0 0
    %2386 = vmatprep.subr.bf16.mxu0 0
    %2387 = vmatpush1.bf16.msra.mxu0 0
    %2388 = vmatprep.subr.bf16.mxu0 0
    %2389 = vmatpush1.bf16.msra.mxu0 0
    %2390 = vmatprep.subr.bf16.mxu0 0
    %2391 = vmatpush1.bf16.msra.mxu0 0
    %2392 = vmatprep.subr.bf16.mxu0 0
    %2393 = vmatpush1.bf16.msra.mxu0 0
    %2394 = vmatprep.subr.bf16.mxu0 0
    %2395 = vmatpush1.bf16.msra.mxu0 0
    %2396 = vmatprep.subr.bf16.mxu0 0
    %2397 = vmatpush1.bf16.msra.mxu0 %v2380
    %2398 = vmatprep.subr.bf16.mxu0 0
    %2399 = vmatpush2.bf16.msra.mxu0 0
    %2400 = vmatprep.subr.bf16.mxu0 0
    %2401 = vmatpush2.bf16.msra.mxu0 0
    %2402 = vmatprep.subr.bf16.mxu0 0
    %2403 = vmatpush2.bf16.msra.mxu0 0
    %2404 = vmatprep.subr.bf16.mxu0 0
    %2405 = vmatpush2.bf16.msra.mxu0 0
    %2406 = vmatprep.subr.bf16.mxu0 0
    %2407 = vmatpush2.bf16.msra.mxu0 0
    %2408 = vmatprep.subr.bf16.mxu0 0
    %2409 = vmatpush2.bf16.msra.mxu0 0
    %2410 = vmatprep.subr.bf16.mxu0 0
    %2411 = vmatpush2.bf16.msra.mxu0 0
    %2412 = vmatprep.subr.bf16.mxu0 0
    %2413 = vmatpush2.bf16.msra.mxu0 0
    %2414 = vmatprep.mubr.bf16.mxu0 0
    %2415 = vmatmul.mubr.bf16.gmra.mxu0 %v2377
    %v2416 = vpop.f32.mrf.mxu0
    %v2417 = vadd.f32 0.0, %v2416
    %v2418 = vpop.f32.mrf.mxu0
    %v2419 = vpop.f32.mrf.mxu0
    %v2420 = vpop.f32.mrf.mxu0
    %2421 = vdwg.mxu0
    %v2422 = vpack.c.bf16 %v2417, %v2369
    %v2423 = vld [vmem:[#allocation11 + $0xc] sm:$0xc]
    %v2425 = vunpack.c.l.b16 %v2423
    %v2426 = vpack.c.b16 %v2425, %v2425
    %v2427 = vrot.slane %v2426, 2
    %v2429 = vsel %vm168, %v2422, 0
    %v2432 = vsel %vm651, %v2427, 0
    %2434 = vmatprep.subr.bf16.mxu0 0
    %2435 = vmatpush1.bf16.msra.mxu0 0
    %2436 = vmatprep.subr.bf16.mxu0 0
    %2437 = vmatpush1.bf16.msra.mxu0 0
    %2438 = vmatprep.subr.bf16.mxu0 0
    %2439 = vmatpush1.bf16.msra.mxu0 0
    %2440 = vmatprep.subr.bf16.mxu0 0
    %2441 = vmatpush1.bf16.msra.mxu0 0
    %2442 = vmatprep.subr.bf16.mxu0 0
    %2443 = vmatpush1.bf16.msra.mxu0 0
    %2444 = vmatprep.subr.bf16.mxu0 0
    %2445 = vmatpush1.bf16.msra.mxu0 0
    %2446 = vmatprep.subr.bf16.mxu0 0
    %2447 = vmatpush1.bf16.msra.mxu0 0
    %2448 = vmatprep.subr.bf16.mxu0 0
    %2449 = vmatpush1.bf16.msra.mxu0 %v2432
    %2450 = vmatprep.subr.bf16.mxu0 0
    %2451 = vmatpush2.bf16.msra.mxu0 0
    %2452 = vmatprep.subr.bf16.mxu0 0
    %2453 = vmatpush2.bf16.msra.mxu0 0
    %2454 = vmatprep.subr.bf16.mxu0 0
    %2455 = vmatpush2.bf16.msra.mxu0 0
    %2456 = vmatprep.subr.bf16.mxu0 0
    %2457 = vmatpush2.bf16.msra.mxu0 0
    %2458 = vmatprep.subr.bf16.mxu0 0
    %2459 = vmatpush2.bf16.msra.mxu0 0
    %2460 = vmatprep.subr.bf16.mxu0 0
    %2461 = vmatpush2.bf16.msra.mxu0 0
    %2462 = vmatprep.subr.bf16.mxu0 0
    %2463 = vmatpush2.bf16.msra.mxu0 0
    %2464 = vmatprep.subr.bf16.mxu0 0
    %2465 = vmatpush2.bf16.msra.mxu0 0
    %2466 = vmatprep.mubr.bf16.mxu0 0
    %2467 = vmatmul.mubr.bf16.gmra.mxu0 %v2429
    %v2468 = vpop.f32.mrf.mxu0
    %v2469 = vadd.f32 0.0, %v2468
    %v2470 = vpop.f32.mrf.mxu0
    %v2471 = vpop.f32.mrf.mxu0
    %v2472 = vadd.f32 0.0, %v2471
    %v2473 = vpop.f32.mrf.mxu0
    %2474 = vdwg.mxu0
    %v2475 = vadd.f32 %v2184, %v2469
    %v2476 = vadd.f32 %v2185, %v2472
    %v2477 = vld [vmem:[%s5] sm:$0x1]
    %v2479 = vlaneseq
    %v2480 = vshrl.u32 %v2479, 7
    %v2481 = vsub.s32 0, %v2480
    %v2482 = vrot.slane %v2477, %v2481
    %v2484 = vadd.f32 %v2475, %v2482
    %v2485 = vadd.f32 %v2476, %v2482
    %2486 = vst.msk [vmem:[#allocation12] sm:$0xff] %vm114, %v2484
    %2487 = vst.msk [vmem:[#allocation12 + $0x8] sm:$0xff] %vm114, %v2485
    // Predicated region
    $region46: #{tpu_custom_call.1} parent=1 // pred_check
      _
    $region47: #{tpu_custom_call.1} parent=1 // pred_check_branch
      %2489 = sbr.rel (0) target = $region49
    $region48: #{tpu_custom_call.1} parent=1 // pred_region
      %s2491 = ssub.s32 256, 256
      %2492 = vsyncadd [#allocation4], %s2491
      %s2493 = sshll.u32 [#allocation12], 4
      %s2494 = int_to_ptr.vmem [resolvable:$true] %s2493
      %2499 = dma.vmem_to_hbm [thread:$0]  %s2494, 256, %s6, [#allocation4], 128, 128, 8
    $region49: #{tpu_custom_call.1} parent=1 // pred_fallthru
      _
    // Predicated region
    $region50: #{tpu_custom_call.1} parent=1 // pred_check
      _
    $region51: #{tpu_custom_call.1} parent=1 // pred_check_branch
      %2501 = sbr.rel (0) target = $region53
    $region52: #{tpu_custom_call.1} parent=1 // pred_region
      %2502 = dma.done [#allocation4], 256
    $region53: #{tpu_custom_call.1} parent=1 // pred_fallthru
      _
    %2503 = vsyncpa [#allocation3], 1
    %2504 = vsyncpa [#allocation7], 1
    %2505 = vsyncpa [#allocation4], 1
    %2506 = vsyncpa [#allocation5], 1
    %2507 = vsyncpa [#allocation10], 1

// kernel: tpu_custom_call.1
$region0: #{tpu_custom_call.1}
  #allocation0 [shape = 'u32[]', space=smem, size = 0x4, offset = 0x4, fixed_abs, tag = 'smem constant byte address 0x4 - core index']
  #allocation1 [shape = 'u32[144,128]{1,0:T(1,128)}', space=vmem, size = 0x12000, scoped, tag = 'internal scratch']
  %s0 = inlined_call_operand.hbm [shape: bf16[16,32], index: 0, kind: input, shape index: {}]
  %s1 = inlined_call_operand.hbm [shape: bf16[32,96], index: 1, kind: input, shape index: {}]
  %s2 = inlined_call_operand.vmem [shape: f32[8], index: 2, kind: input, shape index: {}]
  %s3 = inlined_call_operand.vmem [shape: f32[8], index: 3, kind: input, shape index: {}]
  %s4 = inlined_call_operand.hbm [shape: bf16[32,32], index: 4, kind: input, shape index: {}]
  %s5 = inlined_call_operand.vmem [shape: f32[1,32], index: 5, kind: input, shape index: {}]
  %s6 = inlined_call_operand.hbm [shape: f32[16,32], index: 6, kind: output, shape index: {}]
  %s7 = sld [smem:[#allocation0]]
  $region54: #{tpu_custom_call.1} parent=0
    _
  %s9 = ssub.s32 1, %s7
  %s10 = scalar_select 0, %s9, %s7
  $region1: #{tpu_custom_call.1} parent=0
    #allocation2 [shape = 'u8[4096]{0}', space=vmem, size = 0x1000, scoped, tag = 'input window, operand 0, single buffered']
    #allocation3 [shape = 's32[1]{0}', space=sflag, size = 0x4, scoped, tag = 'scoped memory for tpu_custom_call.1']
    #allocation4 [shape = 's32[1]{0}', space=sflag, size = 0x4, scoped, tag = 'scoped memory for tpu_custom_call.1']
    #allocation5 [shape = 's32[1]{0}', space=sflag, size = 0x4, scoped, tag = 'scoped memory for tpu_custom_call.1']
    #allocation6 [shape = 'u8[8192]{0}', space=vmem, size = 0x2000, scoped, tag = 'input window, operand 1, single buffered']
    #allocation7 [shape = 's32[1]{0}', space=sflag, size = 0x4, scoped, tag = 'scoped memory for tpu_custom_call.1']
    #allocation8 [shape = 'u8[512]{0}', space=smem, size = 0x200, scoped, tag = 'input window, operand 2, single buffered']
    #allocation9 [shape = 'u8[512]{0}', space=smem, size = 0x200, scoped, tag = 'input window, operand 3, single buffered']
    #allocation10 [shape = 's32[1]{0}', space=sflag, size = 0x4, scoped, tag = 'scoped memory for tpu_custom_call.1']
    #allocation11 [shape = 'u8[8192]{0}', space=vmem, size = 0x2000, scoped, tag = 'input window, operand 4, single buffered']
    #allocation12 [shape = 'u8[8192]{0}', space=vmem, size = 0x2000, scoped, tag = 'output window, operand 0, single buffered']
    %11 = vsyncpa [#allocation3], 0
    %12 = vsyncpa [#allocation7], 0
    %13 = vsyncpa [#allocation5], 0
    %14 = vsyncpa [#allocation10], 0
    %15 = vsyncpa [#allocation4], 0
    // Predicated region
    $region2: #{tpu_custom_call.1} parent=1 // pred_check
      _
    $region3: #{tpu_custom_call.1} parent=1 // pred_check_branch
      %17 = sbr.rel (0) target = $region5
    $region4: #{tpu_custom_call.1} parent=1 // pred_region
      %s19 = ssub.s32 128, 128
      %20 = vsyncadd [#allocation3], %s19
      %s21 = sshll.u32 [#allocation2], 4
      %s22 = int_to_ptr.vmem [resolvable:$true] %s21
      %27 = dma.hbm_to_vmem [thread:$0]  %s0, 128, %s22, [#allocation3], 64, 64, 4
    $region5: #{tpu_custom_call.1} parent=1 // pred_fallthru
      _
    // Predicated region
    $region6: #{tpu_custom_call.1} parent=1 // pred_check
      _
    $region7: #{tpu_custom_call.1} parent=1 // pred_check_branch
      %29 = sbr.rel (0) target = $region9
    $region8: #{tpu_custom_call.1} parent=1 // pred_region
      %s31 = ssub.s32 256, 256
      %32 = vsyncadd [#allocation7], %s31
      %s33 = sshll.u32 [#allocation6], 4
      %s34 = int_to_ptr.vmem [resolvable:$true] %s33
      %39 = dma.hbm_to_vmem [thread:$0]  %s1, 256, %s34, [#allocation7], 64, 64, 4
    $region9: #{tpu_custom_call.1} parent=1 // pred_fallthru
      _
    // Predicated region
    $region10: #{tpu_custom_call.1} parent=1 // pred_check
      _
    $region11: #{tpu_custom_call.1} parent=1 // pred_check_branch
      %41 = sbr.rel (0) target = $region13
    $region12: #{tpu_custom_call.1} parent=1 // pred_region
      %s43 = ssub.s32 16, 16
      %44 = vsyncadd [#allocation5], %s43
      %s46 = sshll.u32 %s2, 4
      %s47 = int_to_ptr.vmem [resolvable:$true] %s46
      %49 = dma.vmem_to_smem %s47, 16, [#allocation8], [#allocation5]
    $region13: #{tpu_custom_call.1} parent=1 // pred_fallthru
      _
    // Predicated region
    $region14: #{tpu_custom_call.1} parent=1 // pred_check
      _
    $region15: #{tpu_custom_call.1} parent=1 // pred_check_branch
      %51 = sbr.rel (0) target = $region17
    $region16: #{tpu_custom_call.1} parent=1 // pred_region
      %s53 = ssub.s32 16, 16
      %54 = vsyncadd [#allocation10], %s53
      %s56 = sshll.u32 %s3, 4
      %s57 = int_to_ptr.vmem [resolvable:$true] %s56
      %59 = dma.vmem_to_smem %s57, 16, [#allocation9], [#allocation10]
    $region17: #{tpu_custom_call.1} parent=1 // pred_fallthru
      _
    // Predicated region
    $region18: #{tpu_custom_call.1} parent=1 // pred_check
      _
    $region19: #{tpu_custom_call.1} parent=1 // pred_check_branch
      %61 = sbr.rel (0) target = $region21
    $region20: #{tpu_custom_call.1} parent=1 // pred_region
      %s63 = ssub.s32 256, 256
      %64 = vsyncadd [#allocation7], %s63
      %s65 = sshll.u32 [#allocation11], 4
      %s66 = int_to_ptr.vmem [resolvable:$true] %s65
      %71 = dma.hbm_to_vmem [thread:$0]  %s4, 256, %s66, [#allocation7], 64, 64, 4
    $region21: #{tpu_custom_call.1} parent=1 // pred_fallthru
      _
    // Predicated region
    $region22: #{tpu_custom_call.1} parent=1 // pred_check
      _
    $region23: #{tpu_custom_call.1} parent=1 // pred_check_branch
      %73 = sbr.rel (0) target = $region25
    $region24: #{tpu_custom_call.1} parent=1 // pred_region
      _
    $region25: #{tpu_custom_call.1} parent=1 // pred_fallthru
      _
    // Predicated region
    $region26: #{tpu_custom_call.1} parent=1 // pred_check
      _
    $region27: #{tpu_custom_call.1} parent=1 // pred_check_branch
      %75 = sbr.rel (0) target = $region29
    $region28: #{tpu_custom_call.1} parent=1 // pred_region
      %76 = dma.done [#allocation3], 128
    $region29: #{tpu_custom_call.1} parent=1 // pred_fallthru
      _
    // Predicated region
    $region30: #{tpu_custom_call.1} parent=1 // pred_check
      _
    $region31: #{tpu_custom_call.1} parent=1 // pred_check_branch
      %78 = sbr.rel (0) target = $region33
    $region32: #{tpu_custom_call.1} parent=1 // pred_region
      %79 = dma.done [#allocation7], 256
    $region33: #{tpu_custom_call.1} parent=1 // pred_fallthru
      _
    // Predicated region
    $region34: #{tpu_custom_call.1} parent=1 // pred_check
      _
    $region35: #{tpu_custom_call.1} parent=1 // pred_check_branch
      %81 = sbr.rel (0) target = $region37
    $region36: #{tpu_custom_call.1} parent=1 // pred_region
      %82 = dma.done [#allocation5], 16
    $region37: #{tpu_custom_call.1} parent=1 // pred_fallthru
      _
    // Predicated region
    $region38: #{tpu_custom_call.1} parent=1 // pred_check
      _
    $region39: #{tpu_custom_call.1} parent=1 // pred_check_branch
      %84 = sbr.rel (0) target = $region41
    $region40: #{tpu_custom_call.1} parent=1 // pred_region
      %85 = dma.done [#allocation10], 16
    $region41: #{tpu_custom_call.1} parent=1 // pred_fallthru
      _
    // Predicated region
    $region42: #{tpu_custom_call.1} parent=1 // pred_check
      _
    $region43: #{tpu_custom_call.1} parent=1 // pred_check_branch
      %87 = sbr.rel (0) target = $region45
    $region44: #{tpu_custom_call.1} parent=1 // pred_region
      %88 = dma.done [#allocation7], 256
    $region45: #{tpu_custom_call.1} parent=1 // pred_fallthru
      _
    %89 = sfence
    %v91 = vld [vmem:[#allocation2] sm:$0xf]
    %v92 = vld [vmem:[#allocation2 + $0x4] sm:$0xf]
    %v93 = vld [vmem:[#allocation6] sm:$0xf]
    %v94 = vld [vmem:[#allocation6 + $0x4] sm:$0xf]
    %v95 = vld [vmem:[#allocation6 + $0x8] sm:$0xf]
    %v96 = vld [vmem:[#allocation6 + $0xc] sm:$0xf]
    %v99 = vunpack.c.l.b16 %v91
    %v100 = vunpack.c.l.b16 %v92
    %v101 = vpack.c.b16 %v100, %v99
    %v106 = vunpack.c.l.b16 %v93
    %v107 = vunpack.c.l.b16 %v94
    %v108 = vunpack.c.l.b16 %v95
    %v109 = vunpack.c.l.b16 %v96
    %v110 = vpack.c.b16 %v107, %v106
    %v111 = vpack.c.b16 %v109, %v108
    %vm114 = vcmask 261120
    %v116 = vsel %vm114, %v101, 0
    %118 = vmatprep.subr.bf16.mxu0 0
    %119 = vmatpush1.bf16.msra.mxu0 0
    %120 = vmatprep.subr.bf16.mxu0 0
    %121 = vmatpush1.bf16.msra.mxu0 0
    %122 = vmatprep.subr.bf16.mxu0 0
    %123 = vmatpush1.bf16.msra.mxu0 0
    %124 = vmatprep.subr.bf16.mxu0 0
    %125 = vmatpush1.bf16.msra.mxu0 0
    %126 = vmatprep.subr.bf16.mxu0 0
    %127 = vmatpush1.bf16.msra.mxu0 0
    %128 = vmatprep.subr.bf16.mxu0 0
    %129 = vmatpush1.bf16.msra.mxu0 0
    %130 = vmatprep.subr.bf16.mxu0 0
    %131 = vmatpush1.bf16.msra.mxu0 %v111
    %132 = vmatprep.subr.bf16.mxu0 0
    %133 = vmatpush1.bf16.msra.mxu0 %v110
    %134 = vmatprep.subr.bf16.mxu0 0
    %135 = vmatpush2.bf16.msra.mxu0 0
    %136 = vmatprep.subr.bf16.mxu0 0
    %137 = vmatpush2.bf16.msra.mxu0 0
    %138 = vmatprep.subr.bf16.mxu0 0
    %139 = vmatpush2.bf16.msra.mxu0 0
    %140 = vmatprep.subr.bf16.mxu0 0
    %141 = vmatpush2.bf16.msra.mxu0 0
    %142 = vmatprep.subr.bf16.mxu0 0
    %143 = vmatpush2.bf16.msra.mxu0 0
    %144 = vmatprep.subr.bf16.mxu0 0
    %145 = vmatpush2.bf16.msra.mxu0 0
    %146 = vmatprep.subr.bf16.mxu0 0
    %147 = vmatpush2.bf16.msra.mxu0 0
    %148 = vmatprep.subr.bf16.mxu0 0
    %149 = vmatpush2.bf16.msra.mxu0 0
    %150 = vmatprep.mubr.bf16.mxu0 0
    %151 = vmatmul.mubr.bf16.gmra.mxu0 %v116
    %v152 = vpop.f32.mrf.mxu0
    %v153 = vadd.f32 0.0, %v152
    %v154 = vpop.f32.mrf.mxu0
    %v155 = vpop.f32.mrf.mxu0
    %v156 = vadd.f32 0.0, %v155
    %v157 = vpop.f32.mrf.mxu0
    %158 = vdwg.mxu0
    %v159 = vmul.f32 %v153, 0.5
    %v160 = vmul.f32 %v156, 0.5
    %v161 = vpack.c.bf16 %v159, %v159
    %v162 = vpack.c.bf16 %v160, %v160
    %v163 = vpack.c.bf16 %v153, %v153
    %v164 = vpack.c.bf16 %v156, %v156
    %166 = vrot.lane.b32.xlu0 %v163, 96
    %v167 = vpop.permute.xlu0 %166
    %vm168 = vcmask 31744
    %v170 = vsel %vm168, %v161, 0
    %v173 = vsel %vm168, %v167, 0
    %175 = vmatprep.subr.bf16.mxu0 0
    %176 = vmatpush1.bf16.xpose.msra.mxu0 0
    %177 = vmatprep.subr.bf16.mxu0 0
    %178 = vmatpush1.bf16.xpose.msra.mxu0 0
    %179 = vmatprep.subr.bf16.mxu0 0
    %180 = vmatpush1.bf16.xpose.msra.mxu0 0
    %181 = vmatprep.subr.bf16.mxu0 0
    %182 = vmatpush1.bf16.xpose.msra.mxu0 0
    %183 = vmatprep.subr.bf16.mxu0 0
    %184 = vmatpush1.bf16.xpose.msra.mxu0 0
    %185 = vmatprep.subr.bf16.mxu0 0
    %186 = vmatpush1.bf16.xpose.msra.mxu0 0
    %187 = vmatprep.subr.bf16.mxu0 0
    %188 = vmatpush1.bf16.xpose.msra.mxu0 0
    %189 = vmatprep.subr.bf16.mxu0 0
    %190 = vmatpush1.bf16.xpose.msra.mxu0 %v173
    %191 = vmatprep.subr.bf16.mxu0 0
    %192 = vmatpush2.bf16.xpose.msra.mxu0 0
    %193 = vmatprep.subr.bf16.mxu0 0
    %194 = vmatpush2.bf16.xpose.msra.mxu0 0
    %195 = vmatprep.subr.bf16.mxu0 0
    %196 = vmatpush2.bf16.xpose.msra.mxu0 0
    %197 = vmatprep.subr.bf16.mxu0 0
    %198 = vmatpush2.bf16.xpose.msra.mxu0 0
    %199 = vmatprep.subr.bf16.mxu0 0
    %200 = vmatpush2.bf16.xpose.msra.mxu0 0
    %201 = vmatprep.subr.bf16.mxu0 0
    %202 = vmatpush2.bf16.xpose.msra.mxu0 0
    %203 = vmatprep.subr.bf16.mxu0 0
    %204 = vmatpush2.bf16.xpose.msra.mxu0 0
    %205 = vmatprep.subr.bf16.mxu0 0
    %206 = vmatpush2.bf16.xpose.msra.mxu0 0
    %207 = vmatprep.mubr.bf16.mxu0 0
    %208 = vmatmul.mubr.bf16.gmra.mxu0 %v170
    %v209 = vpop.f32.mrf.mxu0
    %v210 = vadd.f32 0.0, %v209
    %v211 = vpop.f32.mrf.mxu0
    %v212 = vpop.f32.mrf.mxu0
    %v213 = vpop.f32.mrf.mxu0
    %214 = vdwg.mxu0
    %216 = vrot.lane.b32.xlu0 %v164, 96
    %v217 = vpop.permute.xlu0 %216
    %v219 = vsel %vm168, %v162, 0
    %v222 = vsel %vm168, %v217, 0
    %224 = vmatprep.subr.bf16.mxu0 0
    %225 = vmatpush1.bf16.xpose.msra.mxu0 0
    %226 = vmatprep.subr.bf16.mxu0 0
    %227 = vmatpush1.bf16.xpose.msra.mxu0 0
    %228 = vmatprep.subr.bf16.mxu0 0
    %229 = vmatpush1.bf16.xpose.msra.mxu0 0
    %230 = vmatprep.subr.bf16.mxu0 0
    %231 = vmatpush1.bf16.xpose.msra.mxu0 0
    %232 = vmatprep.subr.bf16.mxu0 0
    %233 = vmatpush1.bf16.xpose.msra.mxu0 0
    %234 = vmatprep.subr.bf16.mxu0 0
    %235 = vmatpush1.bf16.xpose.msra.mxu0 0
    %236 = vmatprep.subr.bf16.mxu0 0
    %237 = vmatpush1.bf16.xpose.msra.mxu0 0
    %238 = vmatprep.subr.bf16.mxu0 0
    %239 = vmatpush1.bf16.xpose.msra.mxu0 %v222
    %240 = vmatprep.subr.bf16.mxu0 0
    %241 = vmatpush2.bf16.xpose.msra.mxu0 0
    %242 = vmatprep.subr.bf16.mxu0 0
    %243 = vmatpush2.bf16.xpose.msra.mxu0 0
    %244 = vmatprep.subr.bf16.mxu0 0
    %245 = vmatpush2.bf16.xpose.msra.mxu0 0
    %246 = vmatprep.subr.bf16.mxu0 0
    %247 = vmatpush2.bf16.xpose.msra.mxu0 0
    %248 = vmatprep.subr.bf16.mxu0 0
    %249 = vmatpush2.bf16.xpose.msra.mxu0 0
    %250 = vmatprep.subr.bf16.mxu0 0
    %251 = vmatpush2.bf16.xpose.msra.mxu0 0
    %252 = vmatprep.subr.bf16.mxu0 0
    %253 = vmatpush2.bf16.xpose.msra.mxu0 0
    %254 = vmatprep.subr.bf16.mxu0 0
    %255 = vmatpush2.bf16.xpose.msra.mxu0 0
    %256 = vmatprep.mubr.bf16.mxu0 0
    %257 = vmatmul.mubr.bf16.gmra.mxu0 %v219
    %v258 = vpop.f32.mrf.mxu0
    %v259 = vadd.f32 0.0, %v258
    %v260 = vpop.f32.mrf.mxu0
    %v261 = vpop.f32.mrf.mxu0
    %v262 = vpop.f32.mrf.mxu0
    %263 = vdwg.mxu0
    %vm264 = vcmask 64512
    %v265 = vsel %vm264, %v210, -inf
    %266 = vmax.xlane.f32.xlu0 %v265
    %v267 = vpop.xlane.xlu0 %266
    %v268 = vsel %vm264, %v259, -inf
    %269 = vmax.xlane.f32.xlu0 %v268
    %v270 = vpop.xlane.xlu0 %269
    %v271 = vsub.f32 %v210, %v267
    %v272 = vsub.f32 %v259, %v270
    %v273 = vmul.f32 %v271, 1.442695
    %v274 = vpow.pop %v273
    %v275 = vmul.f32 %v272, 1.442695
    %v276 = vpow.pop %v275
    %v277 = vsel %vm264, %v274, 0.0
    %278 = vadd.xlane.f32.xlu0 %v277
    %v279 = vpop.xlane.xlu0 %278
    %v280 = vsel %vm264, %v276, 0.0
    %281 = vadd.xlane.f32.xlu0 %v280
    %v282 = vpop.xlane.xlu0 %281
    %v283 = vrcp.pop %v279
    %v284 = vmul.f32 %v274, %v283
    %v285 = vrcp.pop %v282
    %v286 = vmul.f32 %v276, %v285
    %vm287 = vcmp.ge.f32.partialorder %v210, 0.0
    %vm288 = vcmp.ge.f32.partialorder %v259, 0.0
    %v289 = vmul.f32 %v210, 0.01
    %v290 = vmul.f32 %v259, 0.01
    %v291 = vsel %vm287, %v210, %v289
    %v292 = vsel %vm288, %v259, %v290
    %s293 = sld [smem:[#allocation8]]
    %v294 = vstv %s293
    %v295 = vmul.f32 %v294, %v284
    %v296 = vmul.f32 %v294, %v286
    %s297 = sld [smem:[#allocation9]]
    %v298 = vstv %s297
    %v299 = vmul.f32 %v298, %v291
    %v300 = vmul.f32 %v298, %v292
    %v301 = vadd.f32 %v295, %v299
    %v302 = vadd.f32 %v296, %v300
    %v303 = vpack.c.bf16 %v301, %v301
    %v304 = vpack.c.bf16 %v302, %v302
    %305 = vrot.lane.b32.xlu0 %v163, 64
    %v306 = vpop.permute.xlu0 %305
    %v308 = vsel %vm264, %v303, 0
    %vm310 = vcmask 1043456
    %v312 = vsel %vm310, %v306, 0
    %314 = vmatprep.subr.bf16.mxu0 0
    %315 = vmatpush1.bf16.msra.mxu0 0
    %316 = vmatprep.subr.bf16.mxu0 0
    %317 = vmatpush1.bf16.msra.mxu0 0
    %318 = vmatprep.subr.bf16.mxu0 0
    %319 = vmatpush1.bf16.msra.mxu0 0
    %320 = vmatprep.subr.bf16.mxu0 0
    %321 = vmatpush1.bf16.msra.mxu0 0
    %322 = vmatprep.subr.bf16.mxu0 0
    %323 = vmatpush1.bf16.msra.mxu0 0
    %324 = vmatprep.subr.bf16.mxu0 0
    %325 = vmatpush1.bf16.msra.mxu0 0
    %326 = vmatprep.subr.bf16.mxu0 0
    %327 = vmatpush1.bf16.msra.mxu0 0
    %328 = vmatprep.subr.bf16.mxu0 0
    %329 = vmatpush1.bf16.msra.mxu0 %v312
    %330 = vmatprep.subr.bf16.mxu0 0
    %331 = vmatpush2.bf16.msra.mxu0 0
    %332 = vmatprep.subr.bf16.mxu0 0
    %333 = vmatpush2.bf16.msra.mxu0 0
    %334 = vmatprep.subr.bf16.mxu0 0
    %335 = vmatpush2.bf16.msra.mxu0 0
    %336 = vmatprep.subr.bf16.mxu0 0
    %337 = vmatpush2.bf16.msra.mxu0 0
    %338 = vmatprep.subr.bf16.mxu0 0
    %339 = vmatpush2.bf16.msra.mxu0 0
    %340 = vmatprep.subr.bf16.mxu0 0
    %341 = vmatpush2.bf16.msra.mxu0 0
    %342 = vmatprep.subr.bf16.mxu0 0
    %343 = vmatpush2.bf16.msra.mxu0 0
    %344 = vmatprep.subr.bf16.mxu0 0
    %345 = vmatpush2.bf16.msra.mxu0 0
    %346 = vmatprep.mubr.bf16.mxu0 0
    %347 = vmatmul.mubr.bf16.gmra.mxu0 %v308
    %v348 = vpop.f32.mrf.mxu0
    %v349 = vadd.f32 0.0, %v348
    %v350 = vpop.f32.mrf.mxu0
    %v351 = vpop.f32.mrf.mxu0
    %v352 = vpop.f32.mrf.mxu0
    %353 = vdwg.mxu0
    %354 = vrot.lane.b32.xlu0 %v164, 64
    %v355 = vpop.permute.xlu0 %354
    %v357 = vsel %vm264, %v304, 0
    %v360 = vsel %vm310, %v355, 0
    %362 = vmatprep.subr.bf16.mxu0 0
    %363 = vmatpush1.bf16.msra.mxu0 0
    %364 = vmatprep.subr.bf16.mxu0 0
    %365 = vmatpush1.bf16.msra.mxu0 0
    %366 = vmatprep.subr.bf16.mxu0 0
    %367 = vmatpush1.bf16.msra.mxu0 0
    %368 = vmatprep.subr.bf16.mxu0 0
    %369 = vmatpush1.bf16.msra.mxu0 0
    %370 = vmatprep.subr.bf16.mxu0 0
    %371 = vmatpush1.bf16.msra.mxu0 0
    %372 = vmatprep.subr.bf16.mxu0 0
    %373 = vmatpush1.bf16.msra.mxu0 0
    %374 = vmatprep.subr.bf16.mxu0 0
    %375 = vmatpush1.bf16.msra.mxu0 0
    %376 = vmatprep.subr.bf16.mxu0 0
    %377 = vmatpush1.bf16.msra.mxu0 %v360
    %378 = vmatprep.subr.bf16.mxu0 0
    %379 = vmatpush2.bf16.msra.mxu0 0
    %380 = vmatprep.subr.bf16.mxu0 0
    %381 = vmatpush2.bf16.msra.mxu0 0
    %382 = vmatprep.subr.bf16.mxu0 0
    %383 = vmatpush2.bf16.msra.mxu0 0
    %384 = vmatprep.subr.bf16.mxu0 0
    %385 = vmatpush2.bf16.msra.mxu0 0
    %386 = vmatprep.subr.bf16.mxu0 0
    %387 = vmatpush2.bf16.msra.mxu0 0
    %388 = vmatprep.subr.bf16.mxu0 0
    %389 = vmatpush2.bf16.msra.mxu0 0
    %390 = vmatprep.subr.bf16.mxu0 0
    %391 = vmatpush2.bf16.msra.mxu0 0
    %392 = vmatprep.subr.bf16.mxu0 0
    %393 = vmatpush2.bf16.msra.mxu0 0
    %394 = vmatprep.mubr.bf16.mxu0 0
    %395 = vmatmul.mubr.bf16.gmra.mxu0 %v357
    %v396 = vpop.f32.mrf.mxu0
    %v397 = vadd.f32 0.0, %v396
    %v398 = vpop.f32.mrf.mxu0
    %v399 = vpop.f32.mrf.mxu0
    %v400 = vpop.f32.mrf.mxu0
    %401 = vdwg.mxu0
    %v402 = vpack.c.bf16 %v397, %v349
    %v403 = vld [vmem:[#allocation11] sm:$0x3]
    %405 = vrot.lane.b32.xlu0 %v161, 124
    %v406 = vpop.permute.xlu0 %405
    %407 = vrot.lane.b32.xlu0 %v163, 92
    %v408 = vpop.permute.xlu0 %407
    %v410 = vsel %vm168, %v406, 0
    %v413 = vsel %vm168, %v408, 0
    %415 = vmatprep.subr.bf16.mxu0 0
    %416 = vmatpush1.bf16.xpose.msra.mxu0 0
    %417 = vmatprep.subr.bf16.mxu0 0
    %418 = vmatpush1.bf16.xpose.msra.mxu0 0
    %419 = vmatprep.subr.bf16.mxu0 0
    %420 = vmatpush1.bf16.xpose.msra.mxu0 0
    %421 = vmatprep.subr.bf16.mxu0 0
    %422 = vmatpush1.bf16.xpose.msra.mxu0 0
    %423 = vmatprep.subr.bf16.mxu0 0
    %424 = vmatpush1.bf16.xpose.msra.mxu0 0
    %425 = vmatprep.subr.bf16.mxu0 0
    %426 = vmatpush1.bf16.xpose.msra.mxu0 0
    %427 = vmatprep.subr.bf16.mxu0 0
    %428 = vmatpush1.bf16.xpose.msra.mxu0 0
    %429 = vmatprep.subr.bf16.mxu0 0
    %430 = vmatpush1.bf16.xpose.msra.mxu0 %v413
    %431 = vmatprep.subr.bf16.mxu0 0
    %432 = vmatpush2.bf16.xpose.msra.mxu0 0
    %433 = vmatprep.subr.bf16.mxu0 0
    %434 = vmatpush2.bf16.xpose.msra.mxu0 0
    %435 = vmatprep.subr.bf16.mxu0 0
    %436 = vmatpush2.bf16.xpose.msra.mxu0 0
    %437 = vmatprep.subr.bf16.mxu0 0
    %438 = vmatpush2.bf16.xpose.msra.mxu0 0
    %439 = vmatprep.subr.bf16.mxu0 0
    %440 = vmatpush2.bf16.xpose.msra.mxu0 0
    %441 = vmatprep.subr.bf16.mxu0 0
    %442 = vmatpush2.bf16.xpose.msra.mxu0 0
    %443 = vmatprep.subr.bf16.mxu0 0
    %444 = vmatpush2.bf16.xpose.msra.mxu0 0
    %445 = vmatprep.subr.bf16.mxu0 0
    %446 = vmatpush2.bf16.xpose.msra.mxu0 0
    %447 = vmatprep.mubr.bf16.mxu0 0
    %448 = vmatmul.mubr.bf16.gmra.mxu0 %v410
    %v449 = vpop.f32.mrf.mxu0
    %v450 = vadd.f32 0.0, %v449
    %v451 = vpop.f32.mrf.mxu0
    %v452 = vpop.f32.mrf.mxu0
    %v453 = vpop.f32.mrf.mxu0
    %454 = vdwg.mxu0
    %456 = vrot.lane.b32.xlu0 %v162, 124
    %v457 = vpop.permute.xlu0 %456
    %458 = vrot.lane.b32.xlu0 %v164, 92
    %v459 = vpop.permute.xlu0 %458
    %v461 = vsel %vm168, %v457, 0
    %v464 = vsel %vm168, %v459, 0
    %466 = vmatprep.subr.bf16.mxu0 0
    %467 = vmatpush1.bf16.xpose.msra.mxu0 0
    %468 = vmatprep.subr.bf16.mxu0 0
    %469 = vmatpush1.bf16.xpose.msra.mxu0 0
    %470 = vmatprep.subr.bf16.mxu0 0
    %471 = vmatpush1.bf16.xpose.msra.mxu0 0
    %472 = vmatprep.subr.bf16.mxu0 0
    %473 = vmatpush1.bf16.xpose.msra.mxu0 0
    %474 = vmatprep.subr.bf16.mxu0 0
    %475 = vmatpush1.bf16.xpose.msra.mxu0 0
    %476 = vmatprep.subr.bf16.mxu0 0
    %477 = vmatpush1.bf16.xpose.msra.mxu0 0
    %478 = vmatprep.subr.bf16.mxu0 0
    %479 = vmatpush1.bf16.xpose.msra.mxu0 0
    %480 = vmatprep.subr.bf16.mxu0 0
    %481 = vmatpush1.bf16.xpose.msra.mxu0 %v464
    %482 = vmatprep.subr.bf16.mxu0 0
    %483 = vmatpush2.bf16.xpose.msra.mxu0 0
    %484 = vmatprep.subr.bf16.mxu0 0
    %485 = vmatpush2.bf16.xpose.msra.mxu0 0
    %486 = vmatprep.subr.bf16.mxu0 0
    %487 = vmatpush2.bf16.xpose.msra.mxu0 0
    %488 = vmatprep.subr.bf16.mxu0 0
    %489 = vmatpush2.bf16.xpose.msra.mxu0 0
    %490 = vmatprep.subr.bf16.mxu0 0
    %491 = vmatpush2.bf16.xpose.msra.mxu0 0
    %492 = vmatprep.subr.bf16.mxu0 0
    %493 = vmatpush2.bf16.xpose.msra.mxu0 0
    %494 = vmatprep.subr.bf16.mxu0 0
    %495 = vmatpush2.bf16.xpose.msra.mxu0 0
    %496 = vmatprep.subr.bf16.mxu0 0
    %497 = vmatpush2.bf16.xpose.msra.mxu0 0
    %498 = vmatprep.mubr.bf16.mxu0 0
    %499 = vmatmul.mubr.bf16.gmra.mxu0 %v461
    %v500 = vpop.f32.mrf.mxu0
    %v501 = vadd.f32 0.0, %v500
    %v502 = vpop.f32.mrf.mxu0
    %v503 = vpop.f32.mrf.mxu0
    %v504 = vpop.f32.mrf.mxu0
    %505 = vdwg.mxu0
    %v506 = vsel %vm264, %v450, -inf
    %507 = vmax.xlane.f32.xlu0 %v506
    %v508 = vpop.xlane.xlu0 %507
    %v509 = vsel %vm264, %v501, -inf
    %510 = vmax.xlane.f32.xlu0 %v509
    %v511 = vpop.xlane.xlu0 %510
    %v512 = vsub.f32 %v450, %v508
    %v513 = vsub.f32 %v501, %v511
    %v514 = vmul.f32 %v512, 1.442695
    %v515 = vpow.pop %v514
    %v516 = vmul.f32 %v513, 1.442695
    %v517 = vpow.pop %v516
    %v518 = vsel %vm264, %v515, 0.0
    %519 = vadd.xlane.f32.xlu0 %v518
    %v520 = vpop.xlane.xlu0 %519
    %v521 = vsel %vm264, %v517, 0.0
    %522 = vadd.xlane.f32.xlu0 %v521
    %v523 = vpop.xlane.xlu0 %522
    %v524 = vrcp.pop %v520
    %v525 = vmul.f32 %v515, %v524
    %v526 = vrcp.pop %v523
    %v527 = vmul.f32 %v517, %v526
    %vm528 = vcmp.ge.f32.partialorder %v450, 0.0
    %vm529 = vcmp.ge.f32.partialorder %v501, 0.0
    %v530 = vmul.f32 %v450, 0.01
    %v531 = vmul.f32 %v501, 0.01
    %v532 = vsel %vm528, %v450, %v530
    %v533 = vsel %vm529, %v501, %v531
    %s534 = sld [smem:[#allocation8 + $0x1]]
    %v535 = vstv %s534
    %v536 = vmul.f32 %v535, %v525
    %v537 = vmul.f32 %v535, %v527
    %s538 = sld [smem:[#allocation9 + $0x1]]
    %v539 = vstv %s538
    %v540 = vmul.f32 %v539, %v532
    %v541 = vmul.f32 %v539, %v533
    %v542 = vadd.f32 %v536, %v540
    %v543 = vadd.f32 %v537, %v541
    %v544 = vpack.c.bf16 %v542, %v542
    %v545 = vpack.c.bf16 %v543, %v543
    %546 = vrot.lane.b32.xlu0 %v163, 60
    %v547 = vpop.permute.xlu0 %546
    %v549 = vsel %vm264, %v544, 0
    %v552 = vsel %vm310, %v547, 0
    %554 = vmatprep.subr.bf16.mxu0 0
    %555 = vmatpush1.bf16.msra.mxu0 0
    %556 = vmatprep.subr.bf16.mxu0 0
    %557 = vmatpush1.bf16.msra.mxu0 0
    %558 = vmatprep.subr.bf16.mxu0 0
    %559 = vmatpush1.bf16.msra.mxu0 0
    %560 = vmatprep.subr.bf16.mxu0 0
    %561 = vmatpush1.bf16.msra.mxu0 0
    %562 = vmatprep.subr.bf16.mxu0 0
    %563 = vmatpush1.bf16.msra.mxu0 0
    %564 = vmatprep.subr.bf16.mxu0 0
    %565 = vmatpush1.bf16.msra.mxu0 0
    %566 = vmatprep.subr.bf16.mxu0 0
    %567 = vmatpush1.bf16.msra.mxu0 0
    %568 = vmatprep.subr.bf16.mxu0 0
    %569 = vmatpush1.bf16.msra.mxu0 %v552
    %570 = vmatprep.subr.bf16.mxu0 0
    %571 = vmatpush2.bf16.msra.mxu0 0
    %572 = vmatprep.subr.bf16.mxu0 0
    %573 = vmatpush2.bf16.msra.mxu0 0
    %574 = vmatprep.subr.bf16.mxu0 0
    %575 = vmatpush2.bf16.msra.mxu0 0
    %576 = vmatprep.subr.bf16.mxu0 0
    %577 = vmatpush2.bf16.msra.mxu0 0
    %578 = vmatprep.subr.bf16.mxu0 0
    %579 = vmatpush2.bf16.msra.mxu0 0
    %580 = vmatprep.subr.bf16.mxu0 0
    %581 = vmatpush2.bf16.msra.mxu0 0
    %582 = vmatprep.subr.bf16.mxu0 0
    %583 = vmatpush2.bf16.msra.mxu0 0
    %584 = vmatprep.subr.bf16.mxu0 0
    %585 = vmatpush2.bf16.msra.mxu0 0
    %586 = vmatprep.mubr.bf16.mxu0 0
    %587 = vmatmul.mubr.bf16.gmra.mxu0 %v549
    %v588 = vpop.f32.mrf.mxu0
    %v589 = vadd.f32 0.0, %v588
    %v590 = vpop.f32.mrf.mxu0
    %v591 = vpop.f32.mrf.mxu0
    %v592 = vpop.f32.mrf.mxu0
    %593 = vdwg.mxu0
    %594 = vrot.lane.b32.xlu0 %v164, 60
    %v595 = vpop.permute.xlu0 %594
    %v597 = vsel %vm264, %v545, 0
    %v600 = vsel %vm310, %v595, 0
    %602 = vmatprep.subr.bf16.mxu0 0
    %603 = vmatpush1.bf16.msra.mxu0 0
    %604 = vmatprep.subr.bf16.mxu0 0
    %605 = vmatpush1.bf16.msra.mxu0 0
    %606 = vmatprep.subr.bf16.mxu0 0
    %607 = vmatpush1.bf16.msra.mxu0 0
    %608 = vmatprep.subr.bf16.mxu0 0
    %609 = vmatpush1.bf16.msra.mxu0 0
    %610 = vmatprep.subr.bf16.mxu0 0
    %611 = vmatpush1.bf16.msra.mxu0 0
    %612 = vmatprep.subr.bf16.mxu0 0
    %613 = vmatpush1.bf16.msra.mxu0 0
    %614 = vmatprep.subr.bf16.mxu0 0
    %615 = vmatpush1.bf16.msra.mxu0 0
    %616 = vmatprep.subr.bf16.mxu0 0
    %617 = vmatpush1.bf16.msra.mxu0 %v600
    %618 = vmatprep.subr.bf16.mxu0 0
    %619 = vmatpush2.bf16.msra.mxu0 0
    %620 = vmatprep.subr.bf16.mxu0 0
    %621 = vmatpush2.bf16.msra.mxu0 0
    %622 = vmatprep.subr.bf16.mxu0 0
    %623 = vmatpush2.bf16.msra.mxu0 0
    %624 = vmatprep.subr.bf16.mxu0 0
    %625 = vmatpush2.bf16.msra.mxu0 0
    %626 = vmatprep.subr.bf16.mxu0 0
    %627 = vmatpush2.bf16.msra.mxu0 0
    %628 = vmatprep.subr.bf16.mxu0 0
    %629 = vmatpush2.bf16.msra.mxu0 0
    %630 = vmatprep.subr.bf16.mxu0 0
    %631 = vmatpush2.bf16.msra.mxu0 0
    %632 = vmatprep.subr.bf16.mxu0 0
    %633 = vmatpush2.bf16.msra.mxu0 0
    %634 = vmatprep.mubr.bf16.mxu0 0
    %635 = vmatmul.mubr.bf16.gmra.mxu0 %v597
    %v636 = vpop.f32.mrf.mxu0
    %v637 = vadd.f32 0.0, %v636
    %v638 = vpop.f32.mrf.mxu0
    %v639 = vpop.f32.mrf.mxu0
    %v640 = vpop.f32.mrf.mxu0
    %641 = vdwg.mxu0
    %v642 = vpack.c.bf16 %v637, %v589
    %v643 = vld [vmem:[#allocation11] sm:$0xc]
    %v645 = vunpack.c.l.b16 %v643
    %v646 = vpack.c.b16 %v645, %v645
    %v647 = vrot.slane %v646, 2
    %v649 = vsel %vm168, %v642, 0
    %vm651 = vcmask 1041408
    %v653 = vsel %vm651, %v647, 0
    %655 = vmatprep.subr.bf16.mxu0 0
    %656 = vmatpush1.bf16.msra.mxu0 0
    %657 = vmatprep.subr.bf16.mxu0 0
    %658 = vmatpush1.bf16.msra.mxu0 0
    %659 = vmatprep.subr.bf16.mxu0 0
    %660 = vmatpush1.bf16.msra.mxu0 0
    %661 = vmatprep.subr.bf16.mxu0 0
    %662 = vmatpush1.bf16.msra.mxu0 0
    %663 = vmatprep.subr.bf16.mxu0 0
    %664 = vmatpush1.bf16.msra.mxu0 0
    %665 = vmatprep.subr.bf16.mxu0 0
    %666 = vmatpush1.bf16.msra.mxu0 0
    %667 = vmatprep.subr.bf16.mxu0 0
    %668 = vmatpush1.bf16.msra.mxu0 0
    %669 = vmatprep.subr.bf16.mxu0 0
    %670 = vmatpush1.bf16.msra.mxu0 %v653
    %671 = vmatprep.subr.bf16.mxu0 0
    %672 = vmatpush2.bf16.msra.mxu0 0
    %673 = vmatprep.subr.bf16.mxu0 0
    %674 = vmatpush2.bf16.msra.mxu0 0
    %675 = vmatprep.subr.bf16.mxu0 0
    %676 = vmatpush2.bf16.msra.mxu0 0
    %677 = vmatprep.subr.bf16.mxu0 0
    %678 = vmatpush2.bf16.msra.mxu0 0
    %679 = vmatprep.subr.bf16.mxu0 0
    %680 = vmatpush2.bf16.msra.mxu0 0
    %681 = vmatprep.subr.bf16.mxu0 0
    %682 = vmatpush2.bf16.msra.mxu0 0
    %683 = vmatprep.subr.bf16.mxu0 0
    %684 = vmatpush2.bf16.msra.mxu0 0
    %685 = vmatprep.subr.bf16.mxu0 0
    %686 = vmatpush2.bf16.msra.mxu0 0
    %687 = vmatprep.mubr.bf16.mxu0 0
    %688 = vmatmul.mubr.bf16.gmra.mxu0 %v649
    %v689 = vpop.f32.mrf.mxu0
    %v690 = vadd.f32 0.0, %v689
    %v691 = vpop.f32.mrf.mxu0
    %v692 = vpop.f32.mrf.mxu0
    %v693 = vadd.f32 0.0, %v692
    %v694 = vpop.f32.mrf.mxu0
    %695 = vdwg.mxu0
    %v697 = vsel %vm168, %v402, 0
    %v700 = vsel %vm651, %v403, 0
    %702 = vmatprep.subr.bf16.mxu0 0
    %703 = vmatpush1.bf16.msra.mxu0 0
    %704 = vmatprep.subr.bf16.mxu0 0
    %705 = vmatpush1.bf16.msra.mxu0 0
    %706 = vmatprep.subr.bf16.mxu0 0
    %707 = vmatpush1.bf16.msra.mxu0 0
    %708 = vmatprep.subr.bf16.mxu0 0
    %709 = vmatpush1.bf16.msra.mxu0 0
    %710 = vmatprep.subr.bf16.mxu0 0
    %711 = vmatpush1.bf16.msra.mxu0 0
    %712 = vmatprep.subr.bf16.mxu0 0
    %713 = vmatpush1.bf16.msra.mxu0 0
    %714 = vmatprep.subr.bf16.mxu0 0
    %715 = vmatpush1.bf16.msra.mxu0 0
    %716 = vmatprep.subr.bf16.mxu0 0
    %717 = vmatpush1.bf16.msra.mxu0 %v700
    %718 = vmatprep.subr.bf16.mxu0 0
    %719 = vmatpush2.bf16.msra.mxu0 0
    %720 = vmatprep.subr.bf16.mxu0 0
    %721 = vmatpush2.bf16.msra.mxu0 0
    %722 = vmatprep.subr.bf16.mxu0 0
    %723 = vmatpush2.bf16.msra.mxu0 0
    %724 = vmatprep.subr.bf16.mxu0 0
    %725 = vmatpush2.bf16.msra.mxu0 0
    %726 = vmatprep.subr.bf16.mxu0 0
    %727 = vmatpush2.bf16.msra.mxu0 0
    %728 = vmatprep.subr.bf16.mxu0 0
    %729 = vmatpush2.bf16.msra.mxu0 0
    %730 = vmatprep.subr.bf16.mxu0 0
    %731 = vmatpush2.bf16.msra.mxu0 0
    %732 = vmatprep.subr.bf16.mxu0 0
    %733 = vmatpush2.bf16.msra.mxu0 0
    %734 = vmatprep.mubr.bf16.mxu0 0
    %735 = vmatmul.mubr.bf16.gmra.mxu0 %v697
    %v736 = vpop.f32.mrf.mxu0
    %v737 = vadd.f32 %v690, %v736
    %v738 = vpop.f32.mrf.mxu0
    %v739 = vpop.f32.mrf.mxu0
    %v740 = vadd.f32 %v693, %v739
    %v741 = vpop.f32.mrf.mxu0
    %742 = vdwg.mxu0
    %743 = vrot.lane.b32.xlu0 %v161, 120
    %v744 = vpop.permute.xlu0 %743
    %745 = vrot.lane.b32.xlu0 %v163, 88
    %v746 = vpop.permute.xlu0 %745
    %v748 = vsel %vm168, %v744, 0
    %v751 = vsel %vm168, %v746, 0
    %753 = vmatprep.subr.bf16.mxu0 0
    %754 = vmatpush1.bf16.xpose.msra.mxu0 0
    %755 = vmatprep.subr.bf16.mxu0 0
    %756 = vmatpush1.bf16.xpose.msra.mxu0 0
    %757 = vmatprep.subr.bf16.mxu0 0
    %758 = vmatpush1.bf16.xpose.msra.mxu0 0
    %759 = vmatprep.subr.bf16.mxu0 0
    %760 = vmatpush1.bf16.xpose.msra.mxu0 0
    %761 = vmatprep.subr.bf16.mxu0 0
    %762 = vmatpush1.bf16.xpose.msra.mxu0 0
    %763 = vmatprep.subr.bf16.mxu0 0
    %764 = vmatpush1.bf16.xpose.msra.mxu0 0
    %765 = vmatprep.subr.bf16.mxu0 0
    %766 = vmatpush1.bf16.xpose.msra.mxu0 0
    %767 = vmatprep.subr.bf16.mxu0 0
    %768 = vmatpush1.bf16.xpose.msra.mxu0 %v751
    %769 = vmatprep.subr.bf16.mxu0 0
    %770 = vmatpush2.bf16.xpose.msra.mxu0 0
    %771 = vmatprep.subr.bf16.mxu0 0
    %772 = vmatpush2.bf16.xpose.msra.mxu0 0
    %773 = vmatprep.subr.bf16.mxu0 0
    %774 = vmatpush2.bf16.xpose.msra.mxu0 0
    %775 = vmatprep.subr.bf16.mxu0 0
    %776 = vmatpush2.bf16.xpose.msra.mxu0 0
    %777 = vmatprep.subr.bf16.mxu0 0
    %778 = vmatpush2.bf16.xpose.msra.mxu0 0
    %779 = vmatprep.subr.bf16.mxu0 0
    %780 = vmatpush2.bf16.xpose.msra.mxu0 0
    %781 = vmatprep.subr.bf16.mxu0 0
    %782 = vmatpush2.bf16.xpose.msra.mxu0 0
    %783 = vmatprep.subr.bf16.mxu0 0
    %784 = vmatpush2.bf16.xpose.msra.mxu0 0
    %785 = vmatprep.mubr.bf16.mxu0 0
    %786 = vmatmul.mubr.bf16.gmra.mxu0 %v748
    %v787 = vpop.f32.mrf.mxu0
    %v788 = vadd.f32 0.0, %v787
    %v789 = vpop.f32.mrf.mxu0
    %v790 = vpop.f32.mrf.mxu0
    %v791 = vpop.f32.mrf.mxu0
    %792 = vdwg.mxu0
    %793 = vrot.lane.b32.xlu0 %v162, 120
    %v794 = vpop.permute.xlu0 %793
    %795 = vrot.lane.b32.xlu0 %v164, 88
    %v796 = vpop.permute.xlu0 %795
    %v798 = vsel %vm168, %v794, 0
    %v801 = vsel %vm168, %v796, 0
    %803 = vmatprep.subr.bf16.mxu0 0
    %804 = vmatpush1.bf16.xpose.msra.mxu0 0
    %805 = vmatprep.subr.bf16.mxu0 0
    %806 = vmatpush1.bf16.xpose.msra.mxu0 0
    %807 = vmatprep.subr.bf16.mxu0 0
    %808 = vmatpush1.bf16.xpose.msra.mxu0 0
    %809 = vmatprep.subr.bf16.mxu0 0
    %810 = vmatpush1.bf16.xpose.msra.mxu0 0
    %811 = vmatprep.subr.bf16.mxu0 0
    %812 = vmatpush1.bf16.xpose.msra.mxu0 0
    %813 = vmatprep.subr.bf16.mxu0 0
    %814 = vmatpush1.bf16.xpose.msra.mxu0 0
    %815 = vmatprep.subr.bf16.mxu0 0
    %816 = vmatpush1.bf16.xpose.msra.mxu0 0
    %817 = vmatprep.subr.bf16.mxu0 0
    %818 = vmatpush1.bf16.xpose.msra.mxu0 %v801
    %819 = vmatprep.subr.bf16.mxu0 0
    %820 = vmatpush2.bf16.xpose.msra.mxu0 0
    %821 = vmatprep.subr.bf16.mxu0 0
    %822 = vmatpush2.bf16.xpose.msra.mxu0 0
    %823 = vmatprep.subr.bf16.mxu0 0
    %824 = vmatpush2.bf16.xpose.msra.mxu0 0
    %825 = vmatprep.subr.bf16.mxu0 0
    %826 = vmatpush2.bf16.xpose.msra.mxu0 0
    %827 = vmatprep.subr.bf16.mxu0 0
    %828 = vmatpush2.bf16.xpose.msra.mxu0 0
    %829 = vmatprep.subr.bf16.mxu0 0
    %830 = vmatpush2.bf16.xpose.msra.mxu0 0
    %831 = vmatprep.subr.bf16.mxu0 0
    %832 = vmatpush2.bf16.xpose.msra.mxu0 0
    %833 = vmatprep.subr.bf16.mxu0 0
    %834 = vmatpush2.bf16.xpose.msra.mxu0 0
    %835 = vmatprep.mubr.bf16.mxu0 0
    %836 = vmatmul.mubr.bf16.gmra.mxu0 %v798
    %v837 = vpop.f32.mrf.mxu0
    %v838 = vadd.f32 0.0, %v837
    %v839 = vpop.f32.mrf.mxu0
    %v840 = vpop.f32.mrf.mxu0
    %v841 = vpop.f32.mrf.mxu0
    %842 = vdwg.mxu0
    %v843 = vsel %vm264, %v788, -inf
    %844 = vmax.xlane.f32.xlu0 %v843
    %v845 = vpop.xlane.xlu0 %844
    %v846 = vsel %vm264, %v838, -inf
    %847 = vmax.xlane.f32.xlu0 %v846
    %v848 = vpop.xlane.xlu0 %847
    %v849 = vsub.f32 %v788, %v845
    %v850 = vsub.f32 %v838, %v848
    %v851 = vmul.f32 %v849, 1.442695
    %v852 = vpow.pop %v851
    %v853 = vmul.f32 %v850, 1.442695
    %v854 = vpow.pop %v853
    %v855 = vsel %vm264, %v852, 0.0
    %856 = vadd.xlane.f32.xlu0 %v855
    %v857 = vpop.xlane.xlu0 %856
    %v858 = vsel %vm264, %v854, 0.0
    %859 = vadd.xlane.f32.xlu0 %v858
    %v860 = vpop.xlane.xlu0 %859
    %v861 = vrcp.pop %v857
    %v862 = vmul.f32 %v852, %v861
    %v863 = vrcp.pop %v860
    %v864 = vmul.f32 %v854, %v863
    %vm865 = vcmp.ge.f32.partialorder %v788, 0.0
    %vm866 = vcmp.ge.f32.partialorder %v838, 0.0
    %v867 = vmul.f32 %v788, 0.01
    %v868 = vmul.f32 %v838, 0.01
    %v869 = vsel %vm865, %v788, %v867
    %v870 = vsel %vm866, %v838, %v868
    %s871 = sld [smem:[#allocation8 + $0x2]]
    %v872 = vstv %s871
    %v873 = vmul.f32 %v872, %v862
    %v874 = vmul.f32 %v872, %v864
    %s875 = sld [smem:[#allocation9 + $0x2]]
    %v876 = vstv %s875
    %v877 = vmul.f32 %v876, %v869
    %v878 = vmul.f32 %v876, %v870
    %v879 = vadd.f32 %v873, %v877
    %v880 = vadd.f32 %v874, %v878
    %v881 = vpack.c.bf16 %v879, %v879
    %v882 = vpack.c.bf16 %v880, %v880
    %883 = vrot.lane.b32.xlu0 %v163, 56
    %v884 = vpop.permute.xlu0 %883
    %v886 = vsel %vm264, %v881, 0
    %v889 = vsel %vm310, %v884, 0
    %891 = vmatprep.subr.bf16.mxu0 0
    %892 = vmatpush1.bf16.msra.mxu0 0
    %893 = vmatprep.subr.bf16.mxu0 0
    %894 = vmatpush1.bf16.msra.mxu0 0
    %895 = vmatprep.subr.bf16.mxu0 0
    %896 = vmatpush1.bf16.msra.mxu0 0
    %897 = vmatprep.subr.bf16.mxu0 0
    %898 = vmatpush1.bf16.msra.mxu0 0
    %899 = vmatprep.subr.bf16.mxu0 0
    %900 = vmatpush1.bf16.msra.mxu0 0
    %901 = vmatprep.subr.bf16.mxu0 0
    %902 = vmatpush1.bf16.msra.mxu0 0
    %903 = vmatprep.subr.bf16.mxu0 0
    %904 = vmatpush1.bf16.msra.mxu0 0
    %905 = vmatprep.subr.bf16.mxu0 0
    %906 = vmatpush1.bf16.msra.mxu0 %v889
    %907 = vmatprep.subr.bf16.mxu0 0
    %908 = vmatpush2.bf16.msra.mxu0 0
    %909 = vmatprep.subr.bf16.mxu0 0
    %910 = vmatpush2.bf16.msra.mxu0 0
    %911 = vmatprep.subr.bf16.mxu0 0
    %912 = vmatpush2.bf16.msra.mxu0 0
    %913 = vmatprep.subr.bf16.mxu0 0
    %914 = vmatpush2.bf16.msra.mxu0 0
    %915 = vmatprep.subr.bf16.mxu0 0
    %916 = vmatpush2.bf16.msra.mxu0 0
    %917 = vmatprep.subr.bf16.mxu0 0
    %918 = vmatpush2.bf16.msra.mxu0 0
    %919 = vmatprep.subr.bf16.mxu0 0
    %920 = vmatpush2.bf16.msra.mxu0 0
    %921 = vmatprep.subr.bf16.mxu0 0
    %922 = vmatpush2.bf16.msra.mxu0 0
    %923 = vmatprep.mubr.bf16.mxu0 0
    %924 = vmatmul.mubr.bf16.gmra.mxu0 %v886
    %v925 = vpop.f32.mrf.mxu0
    %v926 = vadd.f32 0.0, %v925
    %v927 = vpop.f32.mrf.mxu0
    %v928 = vpop.f32.mrf.mxu0
    %v929 = vpop.f32.mrf.mxu0
    %930 = vdwg.mxu0
    %931 = vrot.lane.b32.xlu0 %v164, 56
    %v932 = vpop.permute.xlu0 %931
    %v934 = vsel %vm264, %v882, 0
    %v937 = vsel %vm310, %v932, 0
    %939 = vmatprep.subr.bf16.mxu0 0
    %940 = vmatpush1.bf16.msra.mxu0 0
    %941 = vmatprep.subr.bf16.mxu0 0
    %942 = vmatpush1.bf16.msra.mxu0 0
    %943 = vmatprep.subr.bf16.mxu0 0
    %944 = vmatpush1.bf16.msra.mxu0 0
    %945 = vmatprep.subr.bf16.mxu0 0
    %946 = vmatpush1.bf16.msra.mxu0 0
    %947 = vmatprep.subr.bf16.mxu0 0
    %948 = vmatpush1.bf16.msra.mxu0 0
    %949 = vmatprep.subr.bf16.mxu0 0
    %950 = vmatpush1.bf16.msra.mxu0 0
    %951 = vmatprep.subr.bf16.mxu0 0
    %952 = vmatpush1.bf16.msra.mxu0 0
    %953 = vmatprep.subr.bf16.mxu0 0
    %954 = vmatpush1.bf16.msra.mxu0 %v937
    %955 = vmatprep.subr.bf16.mxu0 0
    %956 = vmatpush2.bf16.msra.mxu0 0
    %957 = vmatprep.subr.bf16.mxu0 0
    %958 = vmatpush2.bf16.msra.mxu0 0
    %959 = vmatprep.subr.bf16.mxu0 0
    %960 = vmatpush2.bf16.msra.mxu0 0
    %961 = vmatprep.subr.bf16.mxu0 0
    %962 = vmatpush2.bf16.msra.mxu0 0
    %963 = vmatprep.subr.bf16.mxu0 0
    %964 = vmatpush2.bf16.msra.mxu0 0
    %965 = vmatprep.subr.bf16.mxu0 0
    %966 = vmatpush2.bf16.msra.mxu0 0
    %967 = vmatprep.subr.bf16.mxu0 0
    %968 = vmatpush2.bf16.msra.mxu0 0
    %969 = vmatprep.subr.bf16.mxu0 0
    %970 = vmatpush2.bf16.msra.mxu0 0
    %971 = vmatprep.mubr.bf16.mxu0 0
    %972 = vmatmul.mubr.bf16.gmra.mxu0 %v934
    %v973 = vpop.f32.mrf.mxu0
    %v974 = vadd.f32 0.0, %v973
    %v975 = vpop.f32.mrf.mxu0
    %v976 = vpop.f32.mrf.mxu0
    %v977 = vpop.f32.mrf.mxu0
    %978 = vdwg.mxu0
    %v979 = vpack.c.bf16 %v974, %v926
    %v980 = vld [vmem:[#allocation11 + $0x4] sm:$0x3]
    %v982 = vsel %vm168, %v979, 0
    %v985 = vsel %vm651, %v980, 0
    %987 = vmatprep.subr.bf16.mxu0 0
    %988 = vmatpush1.bf16.msra.mxu0 0
    %989 = vmatprep.subr.bf16.mxu0 0
    %990 = vmatpush1.bf16.msra.mxu0 0
    %991 = vmatprep.subr.bf16.mxu0 0
    %992 = vmatpush1.bf16.msra.mxu0 0
    %993 = vmatprep.subr.bf16.mxu0 0
    %994 = vmatpush1.bf16.msra.mxu0 0
    %995 = vmatprep.subr.bf16.mxu0 0
    %996 = vmatpush1.bf16.msra.mxu0 0
    %997 = vmatprep.subr.bf16.mxu0 0
    %998 = vmatpush1.bf16.msra.mxu0 0
    %999 = vmatprep.subr.bf16.mxu0 0
    %1000 = vmatpush1.bf16.msra.mxu0 0
    %1001 = vmatprep.subr.bf16.mxu0 0
    %1002 = vmatpush1.bf16.msra.mxu0 %v985
    %1003 = vmatprep.subr.bf16.mxu0 0
    %1004 = vmatpush2.bf16.msra.mxu0 0
    %1005 = vmatprep.subr.bf16.mxu0 0
    %1006 = vmatpush2.bf16.msra.mxu0 0
    %1007 = vmatprep.subr.bf16.mxu0 0
    %1008 = vmatpush2.bf16.msra.mxu0 0
    %1009 = vmatprep.subr.bf16.mxu0 0
    %1010 = vmatpush2.bf16.msra.mxu0 0
    %1011 = vmatprep.subr.bf16.mxu0 0
    %1012 = vmatpush2.bf16.msra.mxu0 0
    %1013 = vmatprep.subr.bf16.mxu0 0
    %1014 = vmatpush2.bf16.msra.mxu0 0
    %1015 = vmatprep.subr.bf16.mxu0 0
    %1016 = vmatpush2.bf16.msra.mxu0 0
    %1017 = vmatprep.subr.bf16.mxu0 0
    %1018 = vmatpush2.bf16.msra.mxu0 0
    %1019 = vmatprep.mubr.bf16.mxu0 0
    %1020 = vmatmul.mubr.bf16.gmra.mxu0 %v982
    %v1021 = vpop.f32.mrf.mxu0
    %v1022 = vadd.f32 0.0, %v1021
    %v1023 = vpop.f32.mrf.mxu0
    %v1024 = vpop.f32.mrf.mxu0
    %v1025 = vadd.f32 0.0, %v1024
    %v1026 = vpop.f32.mrf.mxu0
    %1027 = vdwg.mxu0
    %v1028 = vadd.f32 %v737, %v1022
    %v1029 = vadd.f32 %v740, %v1025
    %1030 = vrot.lane.b32.xlu0 %v161, 116
    %v1031 = vpop.permute.xlu0 %1030
    %1032 = vrot.lane.b32.xlu0 %v163, 84
    %v1033 = vpop.permute.xlu0 %1032
    %v1035 = vsel %vm168, %v1031, 0
    %v1038 = vsel %vm168, %v1033, 0
    %1040 = vmatprep.subr.bf16.mxu0 0
    %1041 = vmatpush1.bf16.xpose.msra.mxu0 0
    %1042 = vmatprep.subr.bf16.mxu0 0
    %1043 = vmatpush1.bf16.xpose.msra.mxu0 0
    %1044 = vmatprep.subr.bf16.mxu0 0
    %1045 = vmatpush1.bf16.xpose.msra.mxu0 0
    %1046 = vmatprep.subr.bf16.mxu0 0
    %1047 = vmatpush1.bf16.xpose.msra.mxu0 0
    %1048 = vmatprep.subr.bf16.mxu0 0
    %1049 = vmatpush1.bf16.xpose.msra.mxu0 0
    %1050 = vmatprep.subr.bf16.mxu0 0
    %1051 = vmatpush1.bf16.xpose.msra.mxu0 0
    %1052 = vmatprep.subr.bf16.mxu0 0
    %1053 = vmatpush1.bf16.xpose.msra.mxu0 0
    %1054 = vmatprep.subr.bf16.mxu0 0
    %1055 = vmatpush1.bf16.xpose.msra.mxu0 %v1038
    %1056 = vmatprep.subr.bf16.mxu0 0
    %1057 = vmatpush2.bf16.xpose.msra.mxu0 0
    %1058 = vmatprep.subr.bf16.mxu0 0
    %1059 = vmatpush2.bf16.xpose.msra.mxu0 0
    %1060 = vmatprep.subr.bf16.mxu0 0
    %1061 = vmatpush2.bf16.xpose.msra.mxu0 0
    %1062 = vmatprep.subr.bf16.mxu0 0
    %1063 = vmatpush2.bf16.xpose.msra.mxu0 0
    %1064 = vmatprep.subr.bf16.mxu0 0
    %1065 = vmatpush2.bf16.xpose.msra.mxu0 0
    %1066 = vmatprep.subr.bf16.mxu0 0
    %1067 = vmatpush2.bf16.xpose.msra.mxu0 0
    %1068 = vmatprep.subr.bf16.mxu0 0
    %1069 = vmatpush2.bf16.xpose.msra.mxu0 0
    %1070 = vmatprep.subr.bf16.mxu0 0
    %1071 = vmatpush2.bf16.xpose.msra.mxu0 0
    %1072 = vmatprep.mubr.bf16.mxu0 0
    %1073 = vmatmul.mubr.bf16.gmra.mxu0 %v1035
    %v1074 = vpop.f32.mrf.mxu0
    %v1075 = vadd.f32 0.0, %v1074
    %v1076 = vpop.f32.mrf.mxu0
    %v1077 = vpop.f32.mrf.mxu0
    %v1078 = vpop.f32.mrf.mxu0
    %1079 = vdwg.mxu0
    %1080 = vrot.lane.b32.xlu0 %v162, 116
    %v1081 = vpop.permute.xlu0 %1080
    %1082 = vrot.lane.b32.xlu0 %v164, 84
    %v1083 = vpop.permute.xlu0 %1082
    %v1085 = vsel %vm168, %v1081, 0
    %v1088 = vsel %vm168, %v1083, 0
    %1090 = vmatprep.subr.bf16.mxu0 0
    %1091 = vmatpush1.bf16.xpose.msra.mxu0 0
    %1092 = vmatprep.subr.bf16.mxu0 0
    %1093 = vmatpush1.bf16.xpose.msra.mxu0 0
    %1094 = vmatprep.subr.bf16.mxu0 0
    %1095 = vmatpush1.bf16.xpose.msra.mxu0 0
    %1096 = vmatprep.subr.bf16.mxu0 0
    %1097 = vmatpush1.bf16.xpose.msra.mxu0 0
    %1098 = vmatprep.subr.bf16.mxu0 0
    %1099 = vmatpush1.bf16.xpose.msra.mxu0 0
    %1100 = vmatprep.subr.bf16.mxu0 0
    %1101 = vmatpush1.bf16.xpose.msra.mxu0 0
    %1102 = vmatprep.subr.bf16.mxu0 0
    %1103 = vmatpush1.bf16.xpose.msra.mxu0 0
    %1104 = vmatprep.subr.bf16.mxu0 0
    %1105 = vmatpush1.bf16.xpose.msra.mxu0 %v1088
    %1106 = vmatprep.subr.bf16.mxu0 0
    %1107 = vmatpush2.bf16.xpose.msra.mxu0 0
    %1108 = vmatprep.subr.bf16.mxu0 0
    %1109 = vmatpush2.bf16.xpose.msra.mxu0 0
    %1110 = vmatprep.subr.bf16.mxu0 0
    %1111 = vmatpush2.bf16.xpose.msra.mxu0 0
    %1112 = vmatprep.subr.bf16.mxu0 0
    %1113 = vmatpush2.bf16.xpose.msra.mxu0 0
    %1114 = vmatprep.subr.bf16.mxu0 0
    %1115 = vmatpush2.bf16.xpose.msra.mxu0 0
    %1116 = vmatprep.subr.bf16.mxu0 0
    %1117 = vmatpush2.bf16.xpose.msra.mxu0 0
    %1118 = vmatprep.subr.bf16.mxu0 0
    %1119 = vmatpush2.bf16.xpose.msra.mxu0 0
    %1120 = vmatprep.subr.bf16.mxu0 0
    %1121 = vmatpush2.bf16.xpose.msra.mxu0 0
    %1122 = vmatprep.mubr.bf16.mxu0 0
    %1123 = vmatmul.mubr.bf16.gmra.mxu0 %v1085
    %v1124 = vpop.f32.mrf.mxu0
    %v1125 = vadd.f32 0.0, %v1124
    %v1126 = vpop.f32.mrf.mxu0
    %v1127 = vpop.f32.mrf.mxu0
    %v1128 = vpop.f32.mrf.mxu0
    %1129 = vdwg.mxu0
    %v1130 = vsel %vm264, %v1075, -inf
    %1131 = vmax.xlane.f32.xlu0 %v1130
    %v1132 = vpop.xlane.xlu0 %1131
    %v1133 = vsel %vm264, %v1125, -inf
    %1134 = vmax.xlane.f32.xlu0 %v1133
    %v1135 = vpop.xlane.xlu0 %1134
    %v1136 = vsub.f32 %v1075, %v1132
    %v1137 = vsub.f32 %v1125, %v1135
    %v1138 = vmul.f32 %v1136, 1.442695
    %v1139 = vpow.pop %v1138
    %v1140 = vmul.f32 %v1137, 1.442695
    %v1141 = vpow.pop %v1140
    %v1142 = vsel %vm264, %v1139, 0.0
    %1143 = vadd.xlane.f32.xlu0 %v1142
    %v1144 = vpop.xlane.xlu0 %1143
    %v1145 = vsel %vm264, %v1141, 0.0
    %1146 = vadd.xlane.f32.xlu0 %v1145
    %v1147 = vpop.xlane.xlu0 %1146
    %v1148 = vrcp.pop %v1144
    %v1149 = vmul.f32 %v1139, %v1148
    %v1150 = vrcp.pop %v1147
    %v1151 = vmul.f32 %v1141, %v1150
    %vm1152 = vcmp.ge.f32.partialorder %v1075, 0.0
    %vm1153 = vcmp.ge.f32.partialorder %v1125, 0.0
    %v1154 = vmul.f32 %v1075, 0.01
    %v1155 = vmul.f32 %v1125, 0.01
    %v1156 = vsel %vm1152, %v1075, %v1154
    %v1157 = vsel %vm1153, %v1125, %v1155
    %s1158 = sld [smem:[#allocation8 + $0x3]]
    %v1159 = vstv %s1158
    %v1160 = vmul.f32 %v1159, %v1149
    %v1161 = vmul.f32 %v1159, %v1151
    %s1162 = sld [smem:[#allocation9 + $0x3]]
    %v1163 = vstv %s1162
    %v1164 = vmul.f32 %v1163, %v1156
    %v1165 = vmul.f32 %v1163, %v1157
    %v1166 = vadd.f32 %v1160, %v1164
    %v1167 = vadd.f32 %v1161, %v1165
    %v1168 = vpack.c.bf16 %v1166, %v1166
    %v1169 = vpack.c.bf16 %v1167, %v1167
    %1170 = vrot.lane.b32.xlu0 %v163, 52
    %v1171 = vpop.permute.xlu0 %1170
    %v1173 = vsel %vm264, %v1168, 0
    %v1176 = vsel %vm310, %v1171, 0
    %1178 = vmatprep.subr.bf16.mxu0 0
    %1179 = vmatpush1.bf16.msra.mxu0 0
    %1180 = vmatprep.subr.bf16.mxu0 0
    %1181 = vmatpush1.bf16.msra.mxu0 0
    %1182 = vmatprep.subr.bf16.mxu0 0
    %1183 = vmatpush1.bf16.msra.mxu0 0
    %1184 = vmatprep.subr.bf16.mxu0 0
    %1185 = vmatpush1.bf16.msra.mxu0 0
    %1186 = vmatprep.subr.bf16.mxu0 0
    %1187 = vmatpush1.bf16.msra.mxu0 0
    %1188 = vmatprep.subr.bf16.mxu0 0
    %1189 = vmatpush1.bf16.msra.mxu0 0
    %1190 = vmatprep.subr.bf16.mxu0 0
    %1191 = vmatpush1.bf16.msra.mxu0 0
    %1192 = vmatprep.subr.bf16.mxu0 0
    %1193 = vmatpush1.bf16.msra.mxu0 %v1176
    %1194 = vmatprep.subr.bf16.mxu0 0
    %1195 = vmatpush2.bf16.msra.mxu0 0
    %1196 = vmatprep.subr.bf16.mxu0 0
    %1197 = vmatpush2.bf16.msra.mxu0 0
    %1198 = vmatprep.subr.bf16.mxu0 0
    %1199 = vmatpush2.bf16.msra.mxu0 0
    %1200 = vmatprep.subr.bf16.mxu0 0
    %1201 = vmatpush2.bf16.msra.mxu0 0
    %1202 = vmatprep.subr.bf16.mxu0 0
    %1203 = vmatpush2.bf16.msra.mxu0 0
    %1204 = vmatprep.subr.bf16.mxu0 0
    %1205 = vmatpush2.bf16.msra.mxu0 0
    %1206 = vmatprep.subr.bf16.mxu0 0
    %1207 = vmatpush2.bf16.msra.mxu0 0
    %1208 = vmatprep.subr.bf16.mxu0 0
    %1209 = vmatpush2.bf16.msra.mxu0 0
    %1210 = vmatprep.mubr.bf16.mxu0 0
    %1211 = vmatmul.mubr.bf16.gmra.mxu0 %v1173
    %v1212 = vpop.f32.mrf.mxu0
    %v1213 = vadd.f32 0.0, %v1212
    %v1214 = vpop.f32.mrf.mxu0
    %v1215 = vpop.f32.mrf.mxu0
    %v1216 = vpop.f32.mrf.mxu0
    %1217 = vdwg.mxu0
    %1218 = vrot.lane.b32.xlu0 %v164, 52
    %v1219 = vpop.permute.xlu0 %1218
    %v1221 = vsel %vm264, %v1169, 0
    %v1224 = vsel %vm310, %v1219, 0
    %1226 = vmatprep.subr.bf16.mxu0 0
    %1227 = vmatpush1.bf16.msra.mxu0 0
    %1228 = vmatprep.subr.bf16.mxu0 0
    %1229 = vmatpush1.bf16.msra.mxu0 0
    %1230 = vmatprep.subr.bf16.mxu0 0
    %1231 = vmatpush1.bf16.msra.mxu0 0
    %1232 = vmatprep.subr.bf16.mxu0 0
    %1233 = vmatpush1.bf16.msra.mxu0 0
    %1234 = vmatprep.subr.bf16.mxu0 0
    %1235 = vmatpush1.bf16.msra.mxu0 0
    %1236 = vmatprep.subr.bf16.mxu0 0
    %1237 = vmatpush1.bf16.msra.mxu0 0
    %1238 = vmatprep.subr.bf16.mxu0 0
    %1239 = vmatpush1.bf16.msra.mxu0 0
    %1240 = vmatprep.subr.bf16.mxu0 0
    %1241 = vmatpush1.bf16.msra.mxu0 %v1224
    %1242 = vmatprep.subr.bf16.mxu0 0
    %1243 = vmatpush2.bf16.msra.mxu0 0
    %1244 = vmatprep.subr.bf16.mxu0 0
    %1245 = vmatpush2.bf16.msra.mxu0 0
    %1246 = vmatprep.subr.bf16.mxu0 0
    %1247 = vmatpush2.bf16.msra.mxu0 0
    %1248 = vmatprep.subr.bf16.mxu0 0
    %1249 = vmatpush2.bf16.msra.mxu0 0
    %1250 = vmatprep.subr.bf16.mxu0 0
    %1251 = vmatpush2.bf16.msra.mxu0 0
    %1252 = vmatprep.subr.bf16.mxu0 0
    %1253 = vmatpush2.bf16.msra.mxu0 0
    %1254 = vmatprep.subr.bf16.mxu0 0
    %1255 = vmatpush2.bf16.msra.mxu0 0
    %1256 = vmatprep.subr.bf16.mxu0 0
    %1257 = vmatpush2.bf16.msra.mxu0 0
    %1258 = vmatprep.mubr.bf16.mxu0 0
    %1259 = vmatmul.mubr.bf16.gmra.mxu0 %v1221
    %v1260 = vpop.f32.mrf.mxu0
    %v1261 = vadd.f32 0.0, %v1260
    %v1262 = vpop.f32.mrf.mxu0
    %v1263 = vpop.f32.mrf.mxu0
    %v1264 = vpop.f32.mrf.mxu0
    %1265 = vdwg.mxu0
    %v1266 = vpack.c.bf16 %v1261, %v1213
    %v1267 = vld [vmem:[#allocation11 + $0x4] sm:$0xc]
    %v1269 = vunpack.c.l.b16 %v1267
    %v1270 = vpack.c.b16 %v1269, %v1269
    %v1271 = vrot.slane %v1270, 2
    %v1273 = vsel %vm168, %v1266, 0
    %v1276 = vsel %vm651, %v1271, 0
    %1278 = vmatprep.subr.bf16.mxu0 0
    %1279 = vmatpush1.bf16.msra.mxu0 0
    %1280 = vmatprep.subr.bf16.mxu0 0
    %1281 = vmatpush1.bf16.msra.mxu0 0
    %1282 = vmatprep.subr.bf16.mxu0 0
    %1283 = vmatpush1.bf16.msra.mxu0 0
    %1284 = vmatprep.subr.bf16.mxu0 0
    %1285 = vmatpush1.bf16.msra.mxu0 0
    %1286 = vmatprep.subr.bf16.mxu0 0
    %1287 = vmatpush1.bf16.msra.mxu0 0
    %1288 = vmatprep.subr.bf16.mxu0 0
    %1289 = vmatpush1.bf16.msra.mxu0 0
    %1290 = vmatprep.subr.bf16.mxu0 0
    %1291 = vmatpush1.bf16.msra.mxu0 0
    %1292 = vmatprep.subr.bf16.mxu0 0
    %1293 = vmatpush1.bf16.msra.mxu0 %v1276
    %1294 = vmatprep.subr.bf16.mxu0 0
    %1295 = vmatpush2.bf16.msra.mxu0 0
    %1296 = vmatprep.subr.bf16.mxu0 0
    %1297 = vmatpush2.bf16.msra.mxu0 0
    %1298 = vmatprep.subr.bf16.mxu0 0
    %1299 = vmatpush2.bf16.msra.mxu0 0
    %1300 = vmatprep.subr.bf16.mxu0 0
    %1301 = vmatpush2.bf16.msra.mxu0 0
    %1302 = vmatprep.subr.bf16.mxu0 0
    %1303 = vmatpush2.bf16.msra.mxu0 0
    %1304 = vmatprep.subr.bf16.mxu0 0
    %1305 = vmatpush2.bf16.msra.mxu0 0
    %1306 = vmatprep.subr.bf16.mxu0 0
    %1307 = vmatpush2.bf16.msra.mxu0 0
    %1308 = vmatprep.subr.bf16.mxu0 0
    %1309 = vmatpush2.bf16.msra.mxu0 0
    %1310 = vmatprep.mubr.bf16.mxu0 0
    %1311 = vmatmul.mubr.bf16.gmra.mxu0 %v1273
    %v1312 = vpop.f32.mrf.mxu0
    %v1313 = vadd.f32 0.0, %v1312
    %v1314 = vpop.f32.mrf.mxu0
    %v1315 = vpop.f32.mrf.mxu0
    %v1316 = vadd.f32 0.0, %v1315
    %v1317 = vpop.f32.mrf.mxu0
    %1318 = vdwg.mxu0
    %v1319 = vadd.f32 %v1028, %v1313
    %v1320 = vadd.f32 %v1029, %v1316
    %1321 = vrot.lane.b32.xlu0 %v161, 112
    %v1322 = vpop.permute.xlu0 %1321
    %1323 = vrot.lane.b32.xlu0 %v163, 80
    %v1324 = vpop.permute.xlu0 %1323
    %v1326 = vsel %vm168, %v1322, 0
    %v1329 = vsel %vm168, %v1324, 0
    %1331 = vmatprep.subr.bf16.mxu0 0
    %1332 = vmatpush1.bf16.xpose.msra.mxu0 0
    %1333 = vmatprep.subr.bf16.mxu0 0
    %1334 = vmatpush1.bf16.xpose.msra.mxu0 0
    %1335 = vmatprep.subr.bf16.mxu0 0
    %1336 = vmatpush1.bf16.xpose.msra.mxu0 0
    %1337 = vmatprep.subr.bf16.mxu0 0
    %1338 = vmatpush1.bf16.xpose.msra.mxu0 0
    %1339 = vmatprep.subr.bf16.mxu0 0
    %1340 = vmatpush1.bf16.xpose.msra.mxu0 0
    %1341 = vmatprep.subr.bf16.mxu0 0
    %1342 = vmatpush1.bf16.xpose.msra.mxu0 0
    %1343 = vmatprep.subr.bf16.mxu0 0
    %1344 = vmatpush1.bf16.xpose.msra.mxu0 0
    %1345 = vmatprep.subr.bf16.mxu0 0
    %1346 = vmatpush1.bf16.xpose.msra.mxu0 %v1329
    %1347 = vmatprep.subr.bf16.mxu0 0
    %1348 = vmatpush2.bf16.xpose.msra.mxu0 0
    %1349 = vmatprep.subr.bf16.mxu0 0
    %1350 = vmatpush2.bf16.xpose.msra.mxu0 0
    %1351 = vmatprep.subr.bf16.mxu0 0
    %1352 = vmatpush2.bf16.xpose.msra.mxu0 0
    %1353 = vmatprep.subr.bf16.mxu0 0
    %1354 = vmatpush2.bf16.xpose.msra.mxu0 0
    %1355 = vmatprep.subr.bf16.mxu0 0
    %1356 = vmatpush2.bf16.xpose.msra.mxu0 0
    %1357 = vmatprep.subr.bf16.mxu0 0
    %1358 = vmatpush2.bf16.xpose.msra.mxu0 0
    %1359 = vmatprep.subr.bf16.mxu0 0
    %1360 = vmatpush2.bf16.xpose.msra.mxu0 0
    %1361 = vmatprep.subr.bf16.mxu0 0
    %1362 = vmatpush2.bf16.xpose.msra.mxu0 0
    %1363 = vmatprep.mubr.bf16.mxu0 0
    %1364 = vmatmul.mubr.bf16.gmra.mxu0 %v1326
    %v1365 = vpop.f32.mrf.mxu0
    %v1366 = vadd.f32 0.0, %v1365
    %v1367 = vpop.f32.mrf.mxu0
    %v1368 = vpop.f32.mrf.mxu0
    %v1369 = vpop.f32.mrf.mxu0
    %1370 = vdwg.mxu0
    %1371 = vrot.lane.b32.xlu0 %v162, 112
    %v1372 = vpop.permute.xlu0 %1371
    %1373 = vrot.lane.b32.xlu0 %v164, 80
    %v1374 = vpop.permute.xlu0 %1373
    %v1376 = vsel %vm168, %v1372, 0
    %v1379 = vsel %vm168, %v1374, 0
    %1381 = vmatprep.subr.bf16.mxu0 0
    %1382 = vmatpush1.bf16.xpose.msra.mxu0 0
    %1383 = vmatprep.subr.bf16.mxu0 0
    %1384 = vmatpush1.bf16.xpose.msra.mxu0 0
    %1385 = vmatprep.subr.bf16.mxu0 0
    %1386 = vmatpush1.bf16.xpose.msra.mxu0 0
    %1387 = vmatprep.subr.bf16.mxu0 0
    %1388 = vmatpush1.bf16.xpose.msra.mxu0 0
    %1389 = vmatprep.subr.bf16.mxu0 0
    %1390 = vmatpush1.bf16.xpose.msra.mxu0 0
    %1391 = vmatprep.subr.bf16.mxu0 0
    %1392 = vmatpush1.bf16.xpose.msra.mxu0 0
    %1393 = vmatprep.subr.bf16.mxu0 0
    %1394 = vmatpush1.bf16.xpose.msra.mxu0 0
    %1395 = vmatprep.subr.bf16.mxu0 0
    %1396 = vmatpush1.bf16.xpose.msra.mxu0 %v1379
    %1397 = vmatprep.subr.bf16.mxu0 0
    %1398 = vmatpush2.bf16.xpose.msra.mxu0 0
    %1399 = vmatprep.subr.bf16.mxu0 0
    %1400 = vmatpush2.bf16.xpose.msra.mxu0 0
    %1401 = vmatprep.subr.bf16.mxu0 0
    %1402 = vmatpush2.bf16.xpose.msra.mxu0 0
    %1403 = vmatprep.subr.bf16.mxu0 0
    %1404 = vmatpush2.bf16.xpose.msra.mxu0 0
    %1405 = vmatprep.subr.bf16.mxu0 0
    %1406 = vmatpush2.bf16.xpose.msra.mxu0 0
    %1407 = vmatprep.subr.bf16.mxu0 0
    %1408 = vmatpush2.bf16.xpose.msra.mxu0 0
    %1409 = vmatprep.subr.bf16.mxu0 0
    %1410 = vmatpush2.bf16.xpose.msra.mxu0 0
    %1411 = vmatprep.subr.bf16.mxu0 0
    %1412 = vmatpush2.bf16.xpose.msra.mxu0 0
    %1413 = vmatprep.mubr.bf16.mxu0 0
    %1414 = vmatmul.mubr.bf16.gmra.mxu0 %v1376
    %v1415 = vpop.f32.mrf.mxu0
    %v1416 = vadd.f32 0.0, %v1415
    %v1417 = vpop.f32.mrf.mxu0
    %v1418 = vpop.f32.mrf.mxu0
    %v1419 = vpop.f32.mrf.mxu0
    %1420 = vdwg.mxu0
    %v1421 = vsel %vm264, %v1366, -inf
    %1422 = vmax.xlane.f32.xlu0 %v1421
    %v1423 = vpop.xlane.xlu0 %1422
    %v1424 = vsel %vm264, %v1416, -inf
    %1425 = vmax.xlane.f32.xlu0 %v1424
    %v1426 = vpop.xlane.xlu0 %1425
    %v1427 = vsub.f32 %v1366, %v1423
    %v1428 = vsub.f32 %v1416, %v1426
    %v1429 = vmul.f32 %v1427, 1.442695
    %v1430 = vpow.pop %v1429
    %v1431 = vmul.f32 %v1428, 1.442695
    %v1432 = vpow.pop %v1431
    %v1433 = vsel %vm264, %v1430, 0.0
    %1434 = vadd.xlane.f32.xlu0 %v1433
    %v1435 = vpop.xlane.xlu0 %1434
    %v1436 = vsel %vm264, %v1432, 0.0
    %1437 = vadd.xlane.f32.xlu0 %v1436
    %v1438 = vpop.xlane.xlu0 %1437
    %v1439 = vrcp.pop %v1435
    %v1440 = vmul.f32 %v1430, %v1439
    %v1441 = vrcp.pop %v1438
    %v1442 = vmul.f32 %v1432, %v1441
    %vm1443 = vcmp.ge.f32.partialorder %v1366, 0.0
    %vm1444 = vcmp.ge.f32.partialorder %v1416, 0.0
    %v1445 = vmul.f32 %v1366, 0.01
    %v1446 = vmul.f32 %v1416, 0.01
    %v1447 = vsel %vm1443, %v1366, %v1445
    %v1448 = vsel %vm1444, %v1416, %v1446
    %s1449 = sld [smem:[#allocation8 + $0x4]]
    %v1450 = vstv %s1449
    %v1451 = vmul.f32 %v1450, %v1440
    %v1452 = vmul.f32 %v1450, %v1442
    %s1453 = sld [smem:[#allocation9 + $0x4]]
    %v1454 = vstv %s1453
    %v1455 = vmul.f32 %v1454, %v1447
    %v1456 = vmul.f32 %v1454, %v1448
    %v1457 = vadd.f32 %v1451, %v1455
    %v1458 = vadd.f32 %v1452, %v1456
    %v1459 = vpack.c.bf16 %v1457, %v1457
    %v1460 = vpack.c.bf16 %v1458, %v1458
    %1461 = vrot.lane.b32.xlu0 %v163, 48
    %v1462 = vpop.permute.xlu0 %1461
    %v1464 = vsel %vm264, %v1459, 0
    %v1467 = vsel %vm310, %v1462, 0
    %1469 = vmatprep.subr.bf16.mxu0 0
    %1470 = vmatpush1.bf16.msra.mxu0 0
    %1471 = vmatprep.subr.bf16.mxu0 0
    %1472 = vmatpush1.bf16.msra.mxu0 0
    %1473 = vmatprep.subr.bf16.mxu0 0
    %1474 = vmatpush1.bf16.msra.mxu0 0
    %1475 = vmatprep.subr.bf16.mxu0 0
    %1476 = vmatpush1.bf16.msra.mxu0 0
    %1477 = vmatprep.subr.bf16.mxu0 0
    %1478 = vmatpush1.bf16.msra.mxu0 0
    %1479 = vmatprep.subr.bf16.mxu0 0
    %1480 = vmatpush1.bf16.msra.mxu0 0
    %1481 = vmatprep.subr.bf16.mxu0 0
    %1482 = vmatpush1.bf16.msra.mxu0 0
    %1483 = vmatprep.subr.bf16.mxu0 0
    %1484 = vmatpush1.bf16.msra.mxu0 %v1467
    %1485 = vmatprep.subr.bf16.mxu0 0
    %1486 = vmatpush2.bf16.msra.mxu0 0
    %1487 = vmatprep.subr.bf16.mxu0 0
    %1488 = vmatpush2.bf16.msra.mxu0 0
    %1489 = vmatprep.subr.bf16.mxu0 0
    %1490 = vmatpush2.bf16.msra.mxu0 0
    %1491 = vmatprep.subr.bf16.mxu0 0
    %1492 = vmatpush2.bf16.msra.mxu0 0
    %1493 = vmatprep.subr.bf16.mxu0 0
    %1494 = vmatpush2.bf16.msra.mxu0 0
    %1495 = vmatprep.subr.bf16.mxu0 0
    %1496 = vmatpush2.bf16.msra.mxu0 0
    %1497 = vmatprep.subr.bf16.mxu0 0
    %1498 = vmatpush2.bf16.msra.mxu0 0
    %1499 = vmatprep.subr.bf16.mxu0 0
    %1500 = vmatpush2.bf16.msra.mxu0 0
    %1501 = vmatprep.mubr.bf16.mxu0 0
    %1502 = vmatmul.mubr.bf16.gmra.mxu0 %v1464
    %v1503 = vpop.f32.mrf.mxu0
    %v1504 = vadd.f32 0.0, %v1503
    %v1505 = vpop.f32.mrf.mxu0
    %v1506 = vpop.f32.mrf.mxu0
    %v1507 = vpop.f32.mrf.mxu0
    %1508 = vdwg.mxu0
    %1509 = vrot.lane.b32.xlu0 %v164, 48
    %v1510 = vpop.permute.xlu0 %1509
    %v1512 = vsel %vm264, %v1460, 0
    %v1515 = vsel %vm310, %v1510, 0
    %1517 = vmatprep.subr.bf16.mxu0 0
    %1518 = vmatpush1.bf16.msra.mxu0 0
    %1519 = vmatprep.subr.bf16.mxu0 0
    %1520 = vmatpush1.bf16.msra.mxu0 0
    %1521 = vmatprep.subr.bf16.mxu0 0
    %1522 = vmatpush1.bf16.msra.mxu0 0
    %1523 = vmatprep.subr.bf16.mxu0 0
    %1524 = vmatpush1.bf16.msra.mxu0 0
    %1525 = vmatprep.subr.bf16.mxu0 0
    %1526 = vmatpush1.bf16.msra.mxu0 0
    %1527 = vmatprep.subr.bf16.mxu0 0
    %1528 = vmatpush1.bf16.msra.mxu0 0
    %1529 = vmatprep.subr.bf16.mxu0 0
    %1530 = vmatpush1.bf16.msra.mxu0 0
    %1531 = vmatprep.subr.bf16.mxu0 0
    %1532 = vmatpush1.bf16.msra.mxu0 %v1515
    %1533 = vmatprep.subr.bf16.mxu0 0
    %1534 = vmatpush2.bf16.msra.mxu0 0
    %1535 = vmatprep.subr.bf16.mxu0 0
    %1536 = vmatpush2.bf16.msra.mxu0 0
    %1537 = vmatprep.subr.bf16.mxu0 0
    %1538 = vmatpush2.bf16.msra.mxu0 0
    %1539 = vmatprep.subr.bf16.mxu0 0
    %1540 = vmatpush2.bf16.msra.mxu0 0
    %1541 = vmatprep.subr.bf16.mxu0 0
    %1542 = vmatpush2.bf16.msra.mxu0 0
    %1543 = vmatprep.subr.bf16.mxu0 0
    %1544 = vmatpush2.bf16.msra.mxu0 0
    %1545 = vmatprep.subr.bf16.mxu0 0
    %1546 = vmatpush2.bf16.msra.mxu0 0
    %1547 = vmatprep.subr.bf16.mxu0 0
    %1548 = vmatpush2.bf16.msra.mxu0 0
    %1549 = vmatprep.mubr.bf16.mxu0 0
    %1550 = vmatmul.mubr.bf16.gmra.mxu0 %v1512
    %v1551 = vpop.f32.mrf.mxu0
    %v1552 = vadd.f32 0.0, %v1551
    %v1553 = vpop.f32.mrf.mxu0
    %v1554 = vpop.f32.mrf.mxu0
    %v1555 = vpop.f32.mrf.mxu0
    %1556 = vdwg.mxu0
    %v1557 = vpack.c.bf16 %v1552, %v1504
    %v1558 = vld [vmem:[#allocation11 + $0x8] sm:$0x3]
    %v1560 = vsel %vm168, %v1557, 0
    %v1563 = vsel %vm651, %v1558, 0
    %1565 = vmatprep.subr.bf16.mxu0 0
    %1566 = vmatpush1.bf16.msra.mxu0 0
    %1567 = vmatprep.subr.bf16.mxu0 0
    %1568 = vmatpush1.bf16.msra.mxu0 0
    %1569 = vmatprep.subr.bf16.mxu0 0
    %1570 = vmatpush1.bf16.msra.mxu0 0
    %1571 = vmatprep.subr.bf16.mxu0 0
    %1572 = vmatpush1.bf16.msra.mxu0 0
    %1573 = vmatprep.subr.bf16.mxu0 0
    %1574 = vmatpush1.bf16.msra.mxu0 0
    %1575 = vmatprep.subr.bf16.mxu0 0
    %1576 = vmatpush1.bf16.msra.mxu0 0
    %1577 = vmatprep.subr.bf16.mxu0 0
    %1578 = vmatpush1.bf16.msra.mxu0 0
    %1579 = vmatprep.subr.bf16.mxu0 0
    %1580 = vmatpush1.bf16.msra.mxu0 %v1563
    %1581 = vmatprep.subr.bf16.mxu0 0
    %1582 = vmatpush2.bf16.msra.mxu0 0
    %1583 = vmatprep.subr.bf16.mxu0 0
    %1584 = vmatpush2.bf16.msra.mxu0 0
    %1585 = vmatprep.subr.bf16.mxu0 0
    %1586 = vmatpush2.bf16.msra.mxu0 0
    %1587 = vmatprep.subr.bf16.mxu0 0
    %1588 = vmatpush2.bf16.msra.mxu0 0
    %1589 = vmatprep.subr.bf16.mxu0 0
    %1590 = vmatpush2.bf16.msra.mxu0 0
    %1591 = vmatprep.subr.bf16.mxu0 0
    %1592 = vmatpush2.bf16.msra.mxu0 0
    %1593 = vmatprep.subr.bf16.mxu0 0
    %1594 = vmatpush2.bf16.msra.mxu0 0
    %1595 = vmatprep.subr.bf16.mxu0 0
    %1596 = vmatpush2.bf16.msra.mxu0 0
    %1597 = vmatprep.mubr.bf16.mxu0 0
    %1598 = vmatmul.mubr.bf16.gmra.mxu0 %v1560
    %v1599 = vpop.f32.mrf.mxu0
    %v1600 = vadd.f32 0.0, %v1599
    %v1601 = vpop.f32.mrf.mxu0
    %v1602 = vpop.f32.mrf.mxu0
    %v1603 = vadd.f32 0.0, %v1602
    %v1604 = vpop.f32.mrf.mxu0
    %1605 = vdwg.mxu0
    %v1606 = vadd.f32 %v1319, %v1600
    %v1607 = vadd.f32 %v1320, %v1603
    %1608 = vrot.lane.b32.xlu0 %v161, 108
    %v1609 = vpop.permute.xlu0 %1608
    %1610 = vrot.lane.b32.xlu0 %v163, 76
    %v1611 = vpop.permute.xlu0 %1610
    %v1613 = vsel %vm168, %v1609, 0
    %v1616 = vsel %vm168, %v1611, 0
    %1618 = vmatprep.subr.bf16.mxu0 0
    %1619 = vmatpush1.bf16.xpose.msra.mxu0 0
    %1620 = vmatprep.subr.bf16.mxu0 0
    %1621 = vmatpush1.bf16.xpose.msra.mxu0 0
    %1622 = vmatprep.subr.bf16.mxu0 0
    %1623 = vmatpush1.bf16.xpose.msra.mxu0 0
    %1624 = vmatprep.subr.bf16.mxu0 0
    %1625 = vmatpush1.bf16.xpose.msra.mxu0 0
    %1626 = vmatprep.subr.bf16.mxu0 0
    %1627 = vmatpush1.bf16.xpose.msra.mxu0 0
    %1628 = vmatprep.subr.bf16.mxu0 0
    %1629 = vmatpush1.bf16.xpose.msra.mxu0 0
    %1630 = vmatprep.subr.bf16.mxu0 0
    %1631 = vmatpush1.bf16.xpose.msra.mxu0 0
    %1632 = vmatprep.subr.bf16.mxu0 0
    %1633 = vmatpush1.bf16.xpose.msra.mxu0 %v1616
    %1634 = vmatprep.subr.bf16.mxu0 0
    %1635 = vmatpush2.bf16.xpose.msra.mxu0 0
    %1636 = vmatprep.subr.bf16.mxu0 0
    %1637 = vmatpush2.bf16.xpose.msra.mxu0 0
    %1638 = vmatprep.subr.bf16.mxu0 0
    %1639 = vmatpush2.bf16.xpose.msra.mxu0 0
    %1640 = vmatprep.subr.bf16.mxu0 0
    %1641 = vmatpush2.bf16.xpose.msra.mxu0 0
    %1642 = vmatprep.subr.bf16.mxu0 0
    %1643 = vmatpush2.bf16.xpose.msra.mxu0 0
    %1644 = vmatprep.subr.bf16.mxu0 0
    %1645 = vmatpush2.bf16.xpose.msra.mxu0 0
    %1646 = vmatprep.subr.bf16.mxu0 0
    %1647 = vmatpush2.bf16.xpose.msra.mxu0 0
    %1648 = vmatprep.subr.bf16.mxu0 0
    %1649 = vmatpush2.bf16.xpose.msra.mxu0 0
    %1650 = vmatprep.mubr.bf16.mxu0 0
    %1651 = vmatmul.mubr.bf16.gmra.mxu0 %v1613
    %v1652 = vpop.f32.mrf.mxu0
    %v1653 = vadd.f32 0.0, %v1652
    %v1654 = vpop.f32.mrf.mxu0
    %v1655 = vpop.f32.mrf.mxu0
    %v1656 = vpop.f32.mrf.mxu0
    %1657 = vdwg.mxu0
    %1658 = vrot.lane.b32.xlu0 %v162, 108
    %v1659 = vpop.permute.xlu0 %1658
    %1660 = vrot.lane.b32.xlu0 %v164, 76
    %v1661 = vpop.permute.xlu0 %1660
    %v1663 = vsel %vm168, %v1659, 0
    %v1666 = vsel %vm168, %v1661, 0
    %1668 = vmatprep.subr.bf16.mxu0 0
    %1669 = vmatpush1.bf16.xpose.msra.mxu0 0
    %1670 = vmatprep.subr.bf16.mxu0 0
    %1671 = vmatpush1.bf16.xpose.msra.mxu0 0
    %1672 = vmatprep.subr.bf16.mxu0 0
    %1673 = vmatpush1.bf16.xpose.msra.mxu0 0
    %1674 = vmatprep.subr.bf16.mxu0 0
    %1675 = vmatpush1.bf16.xpose.msra.mxu0 0
    %1676 = vmatprep.subr.bf16.mxu0 0
    %1677 = vmatpush1.bf16.xpose.msra.mxu0 0
    %1678 = vmatprep.subr.bf16.mxu0 0
    %1679 = vmatpush1.bf16.xpose.msra.mxu0 0
    %1680 = vmatprep.subr.bf16.mxu0 0
    %1681 = vmatpush1.bf16.xpose.msra.mxu0 0
    %1682 = vmatprep.subr.bf16.mxu0 0
    %1683 = vmatpush1.bf16.xpose.msra.mxu0 %v1666
    %1684 = vmatprep.subr.bf16.mxu0 0
    %1685 = vmatpush2.bf16.xpose.msra.mxu0 0
    %1686 = vmatprep.subr.bf16.mxu0 0
    %1687 = vmatpush2.bf16.xpose.msra.mxu0 0
    %1688 = vmatprep.subr.bf16.mxu0 0
    %1689 = vmatpush2.bf16.xpose.msra.mxu0 0
    %1690 = vmatprep.subr.bf16.mxu0 0
    %1691 = vmatpush2.bf16.xpose.msra.mxu0 0
    %1692 = vmatprep.subr.bf16.mxu0 0
    %1693 = vmatpush2.bf16.xpose.msra.mxu0 0
    %1694 = vmatprep.subr.bf16.mxu0 0
    %1695 = vmatpush2.bf16.xpose.msra.mxu0 0
    %1696 = vmatprep.subr.bf16.mxu0 0
    %1697 = vmatpush2.bf16.xpose.msra.mxu0 0
    %1698 = vmatprep.subr.bf16.mxu0 0
    %1699 = vmatpush2.bf16.xpose.msra.mxu0 0
    %1700 = vmatprep.mubr.bf16.mxu0 0
    %1701 = vmatmul.mubr.bf16.gmra.mxu0 %v1663
    %v1702 = vpop.f32.mrf.mxu0
    %v1703 = vadd.f32 0.0, %v1702
    %v1704 = vpop.f32.mrf.mxu0
    %v1705 = vpop.f32.mrf.mxu0
    %v1706 = vpop.f32.mrf.mxu0
    %1707 = vdwg.mxu0
    %v1708 = vsel %vm264, %v1653, -inf
    %1709 = vmax.xlane.f32.xlu0 %v1708
    %v1710 = vpop.xlane.xlu0 %1709
    %v1711 = vsel %vm264, %v1703, -inf
    %1712 = vmax.xlane.f32.xlu0 %v1711
    %v1713 = vpop.xlane.xlu0 %1712
    %v1714 = vsub.f32 %v1653, %v1710
    %v1715 = vsub.f32 %v1703, %v1713
    %v1716 = vmul.f32 %v1714, 1.442695
    %v1717 = vpow.pop %v1716
    %v1718 = vmul.f32 %v1715, 1.442695
    %v1719 = vpow.pop %v1718
    %v1720 = vsel %vm264, %v1717, 0.0
    %1721 = vadd.xlane.f32.xlu0 %v1720
    %v1722 = vpop.xlane.xlu0 %1721
    %v1723 = vsel %vm264, %v1719, 0.0
    %1724 = vadd.xlane.f32.xlu0 %v1723
    %v1725 = vpop.xlane.xlu0 %1724
    %v1726 = vrcp.pop %v1722
    %v1727 = vmul.f32 %v1717, %v1726
    %v1728 = vrcp.pop %v1725
    %v1729 = vmul.f32 %v1719, %v1728
    %vm1730 = vcmp.ge.f32.partialorder %v1653, 0.0
    %vm1731 = vcmp.ge.f32.partialorder %v1703, 0.0
    %v1732 = vmul.f32 %v1653, 0.01
    %v1733 = vmul.f32 %v1703, 0.01
    %v1734 = vsel %vm1730, %v1653, %v1732
    %v1735 = vsel %vm1731, %v1703, %v1733
    %s1736 = sld [smem:[#allocation8 + $0x5]]
    %v1737 = vstv %s1736
    %v1738 = vmul.f32 %v1737, %v1727
    %v1739 = vmul.f32 %v1737, %v1729
    %s1740 = sld [smem:[#allocation9 + $0x5]]
    %v1741 = vstv %s1740
    %v1742 = vmul.f32 %v1741, %v1734
    %v1743 = vmul.f32 %v1741, %v1735
    %v1744 = vadd.f32 %v1738, %v1742
    %v1745 = vadd.f32 %v1739, %v1743
    %v1746 = vpack.c.bf16 %v1744, %v1744
    %v1747 = vpack.c.bf16 %v1745, %v1745
    %1748 = vrot.lane.b32.xlu0 %v163, 44
    %v1749 = vpop.permute.xlu0 %1748
    %v1751 = vsel %vm264, %v1746, 0
    %v1754 = vsel %vm310, %v1749, 0
    %1756 = vmatprep.subr.bf16.mxu0 0
    %1757 = vmatpush1.bf16.msra.mxu0 0
    %1758 = vmatprep.subr.bf16.mxu0 0
    %1759 = vmatpush1.bf16.msra.mxu0 0
    %1760 = vmatprep.subr.bf16.mxu0 0
    %1761 = vmatpush1.bf16.msra.mxu0 0
    %1762 = vmatprep.subr.bf16.mxu0 0
    %1763 = vmatpush1.bf16.msra.mxu0 0
    %1764 = vmatprep.subr.bf16.mxu0 0
    %1765 = vmatpush1.bf16.msra.mxu0 0
    %1766 = vmatprep.subr.bf16.mxu0 0
    %1767 = vmatpush1.bf16.msra.mxu0 0
    %1768 = vmatprep.subr.bf16.mxu0 0
    %1769 = vmatpush1.bf16.msra.mxu0 0
    %1770 = vmatprep.subr.bf16.mxu0 0
    %1771 = vmatpush1.bf16.msra.mxu0 %v1754
    %1772 = vmatprep.subr.bf16.mxu0 0
    %1773 = vmatpush2.bf16.msra.mxu0 0
    %1774 = vmatprep.subr.bf16.mxu0 0
    %1775 = vmatpush2.bf16.msra.mxu0 0
    %1776 = vmatprep.subr.bf16.mxu0 0
    %1777 = vmatpush2.bf16.msra.mxu0 0
    %1778 = vmatprep.subr.bf16.mxu0 0
    %1779 = vmatpush2.bf16.msra.mxu0 0
    %1780 = vmatprep.subr.bf16.mxu0 0
    %1781 = vmatpush2.bf16.msra.mxu0 0
    %1782 = vmatprep.subr.bf16.mxu0 0
    %1783 = vmatpush2.bf16.msra.mxu0 0
    %1784 = vmatprep.subr.bf16.mxu0 0
    %1785 = vmatpush2.bf16.msra.mxu0 0
    %1786 = vmatprep.subr.bf16.mxu0 0
    %1787 = vmatpush2.bf16.msra.mxu0 0
    %1788 = vmatprep.mubr.bf16.mxu0 0
    %1789 = vmatmul.mubr.bf16.gmra.mxu0 %v1751
    %v1790 = vpop.f32.mrf.mxu0
    %v1791 = vadd.f32 0.0, %v1790
    %v1792 = vpop.f32.mrf.mxu0
    %v1793 = vpop.f32.mrf.mxu0
    %v1794 = vpop.f32.mrf.mxu0
    %1795 = vdwg.mxu0
    %1796 = vrot.lane.b32.xlu0 %v164, 44
    %v1797 = vpop.permute.xlu0 %1796
    %v1799 = vsel %vm264, %v1747, 0
    %v1802 = vsel %vm310, %v1797, 0
    %1804 = vmatprep.subr.bf16.mxu0 0
    %1805 = vmatpush1.bf16.msra.mxu0 0
    %1806 = vmatprep.subr.bf16.mxu0 0
    %1807 = vmatpush1.bf16.msra.mxu0 0
    %1808 = vmatprep.subr.bf16.mxu0 0
    %1809 = vmatpush1.bf16.msra.mxu0 0
    %1810 = vmatprep.subr.bf16.mxu0 0
    %1811 = vmatpush1.bf16.msra.mxu0 0
    %1812 = vmatprep.subr.bf16.mxu0 0
    %1813 = vmatpush1.bf16.msra.mxu0 0
    %1814 = vmatprep.subr.bf16.mxu0 0
    %1815 = vmatpush1.bf16.msra.mxu0 0
    %1816 = vmatprep.subr.bf16.mxu0 0
    %1817 = vmatpush1.bf16.msra.mxu0 0
    %1818 = vmatprep.subr.bf16.mxu0 0
    %1819 = vmatpush1.bf16.msra.mxu0 %v1802
    %1820 = vmatprep.subr.bf16.mxu0 0
    %1821 = vmatpush2.bf16.msra.mxu0 0
    %1822 = vmatprep.subr.bf16.mxu0 0
    %1823 = vmatpush2.bf16.msra.mxu0 0
    %1824 = vmatprep.subr.bf16.mxu0 0
    %1825 = vmatpush2.bf16.msra.mxu0 0
    %1826 = vmatprep.subr.bf16.mxu0 0
    %1827 = vmatpush2.bf16.msra.mxu0 0
    %1828 = vmatprep.subr.bf16.mxu0 0
    %1829 = vmatpush2.bf16.msra.mxu0 0
    %1830 = vmatprep.subr.bf16.mxu0 0
    %1831 = vmatpush2.bf16.msra.mxu0 0
    %1832 = vmatprep.subr.bf16.mxu0 0
    %1833 = vmatpush2.bf16.msra.mxu0 0
    %1834 = vmatprep.subr.bf16.mxu0 0
    %1835 = vmatpush2.bf16.msra.mxu0 0
    %1836 = vmatprep.mubr.bf16.mxu0 0
    %1837 = vmatmul.mubr.bf16.gmra.mxu0 %v1799
    %v1838 = vpop.f32.mrf.mxu0
    %v1839 = vadd.f32 0.0, %v1838
    %v1840 = vpop.f32.mrf.mxu0
    %v1841 = vpop.f32.mrf.mxu0
    %v1842 = vpop.f32.mrf.mxu0
    %1843 = vdwg.mxu0
    %v1844 = vpack.c.bf16 %v1839, %v1791
    %v1845 = vld [vmem:[#allocation11 + $0x8] sm:$0xc]
    %v1847 = vunpack.c.l.b16 %v1845
    %v1848 = vpack.c.b16 %v1847, %v1847
    %v1849 = vrot.slane %v1848, 2
    %v1851 = vsel %vm168, %v1844, 0
    %v1854 = vsel %vm651, %v1849, 0
    %1856 = vmatprep.subr.bf16.mxu0 0
    %1857 = vmatpush1.bf16.msra.mxu0 0
    %1858 = vmatprep.subr.bf16.mxu0 0
    %1859 = vmatpush1.bf16.msra.mxu0 0
    %1860 = vmatprep.subr.bf16.mxu0 0
    %1861 = vmatpush1.bf16.msra.mxu0 0
    %1862 = vmatprep.subr.bf16.mxu0 0
    %1863 = vmatpush1.bf16.msra.mxu0 0
    %1864 = vmatprep.subr.bf16.mxu0 0
    %1865 = vmatpush1.bf16.msra.mxu0 0
    %1866 = vmatprep.subr.bf16.mxu0 0
    %1867 = vmatpush1.bf16.msra.mxu0 0
    %1868 = vmatprep.subr.bf16.mxu0 0
    %1869 = vmatpush1.bf16.msra.mxu0 0
    %1870 = vmatprep.subr.bf16.mxu0 0
    %1871 = vmatpush1.bf16.msra.mxu0 %v1854
    %1872 = vmatprep.subr.bf16.mxu0 0
    %1873 = vmatpush2.bf16.msra.mxu0 0
    %1874 = vmatprep.subr.bf16.mxu0 0
    %1875 = vmatpush2.bf16.msra.mxu0 0
    %1876 = vmatprep.subr.bf16.mxu0 0
    %1877 = vmatpush2.bf16.msra.mxu0 0
    %1878 = vmatprep.subr.bf16.mxu0 0
    %1879 = vmatpush2.bf16.msra.mxu0 0
    %1880 = vmatprep.subr.bf16.mxu0 0
    %1881 = vmatpush2.bf16.msra.mxu0 0
    %1882 = vmatprep.subr.bf16.mxu0 0
    %1883 = vmatpush2.bf16.msra.mxu0 0
    %1884 = vmatprep.subr.bf16.mxu0 0
    %1885 = vmatpush2.bf16.msra.mxu0 0
    %1886 = vmatprep.subr.bf16.mxu0 0
    %1887 = vmatpush2.bf16.msra.mxu0 0
    %1888 = vmatprep.mubr.bf16.mxu0 0
    %1889 = vmatmul.mubr.bf16.gmra.mxu0 %v1851
    %v1890 = vpop.f32.mrf.mxu0
    %v1891 = vadd.f32 0.0, %v1890
    %v1892 = vpop.f32.mrf.mxu0
    %v1893 = vpop.f32.mrf.mxu0
    %v1894 = vadd.f32 0.0, %v1893
    %v1895 = vpop.f32.mrf.mxu0
    %1896 = vdwg.mxu0
    %v1897 = vadd.f32 %v1606, %v1891
    %v1898 = vadd.f32 %v1607, %v1894
    %1899 = vrot.lane.b32.xlu0 %v161, 104
    %v1900 = vpop.permute.xlu0 %1899
    %1901 = vrot.lane.b32.xlu0 %v163, 72
    %v1902 = vpop.permute.xlu0 %1901
    %v1904 = vsel %vm168, %v1900, 0
    %v1907 = vsel %vm168, %v1902, 0
    %1909 = vmatprep.subr.bf16.mxu0 0
    %1910 = vmatpush1.bf16.xpose.msra.mxu0 0
    %1911 = vmatprep.subr.bf16.mxu0 0
    %1912 = vmatpush1.bf16.xpose.msra.mxu0 0
    %1913 = vmatprep.subr.bf16.mxu0 0
    %1914 = vmatpush1.bf16.xpose.msra.mxu0 0
    %1915 = vmatprep.subr.bf16.mxu0 0
    %1916 = vmatpush1.bf16.xpose.msra.mxu0 0
    %1917 = vmatprep.subr.bf16.mxu0 0
    %1918 = vmatpush1.bf16.xpose.msra.mxu0 0
    %1919 = vmatprep.subr.bf16.mxu0 0
    %1920 = vmatpush1.bf16.xpose.msra.mxu0 0
    %1921 = vmatprep.subr.bf16.mxu0 0
    %1922 = vmatpush1.bf16.xpose.msra.mxu0 0
    %1923 = vmatprep.subr.bf16.mxu0 0
    %1924 = vmatpush1.bf16.xpose.msra.mxu0 %v1907
    %1925 = vmatprep.subr.bf16.mxu0 0
    %1926 = vmatpush2.bf16.xpose.msra.mxu0 0
    %1927 = vmatprep.subr.bf16.mxu0 0
    %1928 = vmatpush2.bf16.xpose.msra.mxu0 0
    %1929 = vmatprep.subr.bf16.mxu0 0
    %1930 = vmatpush2.bf16.xpose.msra.mxu0 0
    %1931 = vmatprep.subr.bf16.mxu0 0
    %1932 = vmatpush2.bf16.xpose.msra.mxu0 0
    %1933 = vmatprep.subr.bf16.mxu0 0
    %1934 = vmatpush2.bf16.xpose.msra.mxu0 0
    %1935 = vmatprep.subr.bf16.mxu0 0
    %1936 = vmatpush2.bf16.xpose.msra.mxu0 0
    %1937 = vmatprep.subr.bf16.mxu0 0
    %1938 = vmatpush2.bf16.xpose.msra.mxu0 0
    %1939 = vmatprep.subr.bf16.mxu0 0
    %1940 = vmatpush2.bf16.xpose.msra.mxu0 0
    %1941 = vmatprep.mubr.bf16.mxu0 0
    %1942 = vmatmul.mubr.bf16.gmra.mxu0 %v1904
    %v1943 = vpop.f32.mrf.mxu0
    %v1944 = vadd.f32 0.0, %v1943
    %v1945 = vpop.f32.mrf.mxu0
    %v1946 = vpop.f32.mrf.mxu0
    %v1947 = vpop.f32.mrf.mxu0
    %1948 = vdwg.mxu0
    %1949 = vrot.lane.b32.xlu0 %v162, 104
    %v1950 = vpop.permute.xlu0 %1949
    %1951 = vrot.lane.b32.xlu0 %v164, 72
    %v1952 = vpop.permute.xlu0 %1951
    %v1954 = vsel %vm168, %v1950, 0
    %v1957 = vsel %vm168, %v1952, 0
    %1959 = vmatprep.subr.bf16.mxu0 0
    %1960 = vmatpush1.bf16.xpose.msra.mxu0 0
    %1961 = vmatprep.subr.bf16.mxu0 0
    %1962 = vmatpush1.bf16.xpose.msra.mxu0 0
    %1963 = vmatprep.subr.bf16.mxu0 0
    %1964 = vmatpush1.bf16.xpose.msra.mxu0 0
    %1965 = vmatprep.subr.bf16.mxu0 0
    %1966 = vmatpush1.bf16.xpose.msra.mxu0 0
    %1967 = vmatprep.subr.bf16.mxu0 0
    %1968 = vmatpush1.bf16.xpose.msra.mxu0 0
    %1969 = vmatprep.subr.bf16.mxu0 0
    %1970 = vmatpush1.bf16.xpose.msra.mxu0 0
    %1971 = vmatprep.subr.bf16.mxu0 0
    %1972 = vmatpush1.bf16.xpose.msra.mxu0 0
    %1973 = vmatprep.subr.bf16.mxu0 0
    %1974 = vmatpush1.bf16.xpose.msra.mxu0 %v1957
    %1975 = vmatprep.subr.bf16.mxu0 0
    %1976 = vmatpush2.bf16.xpose.msra.mxu0 0
    %1977 = vmatprep.subr.bf16.mxu0 0
    %1978 = vmatpush2.bf16.xpose.msra.mxu0 0
    %1979 = vmatprep.subr.bf16.mxu0 0
    %1980 = vmatpush2.bf16.xpose.msra.mxu0 0
    %1981 = vmatprep.subr.bf16.mxu0 0
    %1982 = vmatpush2.bf16.xpose.msra.mxu0 0
    %1983 = vmatprep.subr.bf16.mxu0 0
    %1984 = vmatpush2.bf16.xpose.msra.mxu0 0
    %1985 = vmatprep.subr.bf16.mxu0 0
    %1986 = vmatpush2.bf16.xpose.msra.mxu0 0
    %1987 = vmatprep.subr.bf16.mxu0 0
    %1988 = vmatpush2.bf16.xpose.msra.mxu0 0
    %1989 = vmatprep.subr.bf16.mxu0 0
    %1990 = vmatpush2.bf16.xpose.msra.mxu0 0
    %1991 = vmatprep.mubr.bf16.mxu0 0
    %1992 = vmatmul.mubr.bf16.gmra.mxu0 %v1954
    %v1993 = vpop.f32.mrf.mxu0
    %v1994 = vadd.f32 0.0, %v1993
    %v1995 = vpop.f32.mrf.mxu0
    %v1996 = vpop.f32.mrf.mxu0
    %v1997 = vpop.f32.mrf.mxu0
    %1998 = vdwg.mxu0
    %v1999 = vsel %vm264, %v1944, -inf
    %2000 = vmax.xlane.f32.xlu0 %v1999
    %v2001 = vpop.xlane.xlu0 %2000
    %v2002 = vsel %vm264, %v1994, -inf
    %2003 = vmax.xlane.f32.xlu0 %v2002
    %v2004 = vpop.xlane.xlu0 %2003
    %v2005 = vsub.f32 %v1944, %v2001
    %v2006 = vsub.f32 %v1994, %v2004
    %v2007 = vmul.f32 %v2005, 1.442695
    %v2008 = vpow.pop %v2007
    %v2009 = vmul.f32 %v2006, 1.442695
    %v2010 = vpow.pop %v2009
    %v2011 = vsel %vm264, %v2008, 0.0
    %2012 = vadd.xlane.f32.xlu0 %v2011
    %v2013 = vpop.xlane.xlu0 %2012
    %v2014 = vsel %vm264, %v2010, 0.0
    %2015 = vadd.xlane.f32.xlu0 %v2014
    %v2016 = vpop.xlane.xlu0 %2015
    %v2017 = vrcp.pop %v2013
    %v2018 = vmul.f32 %v2008, %v2017
    %v2019 = vrcp.pop %v2016
    %v2020 = vmul.f32 %v2010, %v2019
    %vm2021 = vcmp.ge.f32.partialorder %v1944, 0.0
    %vm2022 = vcmp.ge.f32.partialorder %v1994, 0.0
    %v2023 = vmul.f32 %v1944, 0.01
    %v2024 = vmul.f32 %v1994, 0.01
    %v2025 = vsel %vm2021, %v1944, %v2023
    %v2026 = vsel %vm2022, %v1994, %v2024
    %s2027 = sld [smem:[#allocation8 + $0x6]]
    %v2028 = vstv %s2027
    %v2029 = vmul.f32 %v2028, %v2018
    %v2030 = vmul.f32 %v2028, %v2020
    %s2031 = sld [smem:[#allocation9 + $0x6]]
    %v2032 = vstv %s2031
    %v2033 = vmul.f32 %v2032, %v2025
    %v2034 = vmul.f32 %v2032, %v2026
    %v2035 = vadd.f32 %v2029, %v2033
    %v2036 = vadd.f32 %v2030, %v2034
    %v2037 = vpack.c.bf16 %v2035, %v2035
    %v2038 = vpack.c.bf16 %v2036, %v2036
    %2039 = vrot.lane.b32.xlu0 %v163, 40
    %v2040 = vpop.permute.xlu0 %2039
    %v2042 = vsel %vm264, %v2037, 0
    %v2045 = vsel %vm310, %v2040, 0
    %2047 = vmatprep.subr.bf16.mxu0 0
    %2048 = vmatpush1.bf16.msra.mxu0 0
    %2049 = vmatprep.subr.bf16.mxu0 0
    %2050 = vmatpush1.bf16.msra.mxu0 0
    %2051 = vmatprep.subr.bf16.mxu0 0
    %2052 = vmatpush1.bf16.msra.mxu0 0
    %2053 = vmatprep.subr.bf16.mxu0 0
    %2054 = vmatpush1.bf16.msra.mxu0 0
    %2055 = vmatprep.subr.bf16.mxu0 0
    %2056 = vmatpush1.bf16.msra.mxu0 0
    %2057 = vmatprep.subr.bf16.mxu0 0
    %2058 = vmatpush1.bf16.msra.mxu0 0
    %2059 = vmatprep.subr.bf16.mxu0 0
    %2060 = vmatpush1.bf16.msra.mxu0 0
    %2061 = vmatprep.subr.bf16.mxu0 0
    %2062 = vmatpush1.bf16.msra.mxu0 %v2045
    %2063 = vmatprep.subr.bf16.mxu0 0
    %2064 = vmatpush2.bf16.msra.mxu0 0
    %2065 = vmatprep.subr.bf16.mxu0 0
    %2066 = vmatpush2.bf16.msra.mxu0 0
    %2067 = vmatprep.subr.bf16.mxu0 0
    %2068 = vmatpush2.bf16.msra.mxu0 0
    %2069 = vmatprep.subr.bf16.mxu0 0
    %2070 = vmatpush2.bf16.msra.mxu0 0
    %2071 = vmatprep.subr.bf16.mxu0 0
    %2072 = vmatpush2.bf16.msra.mxu0 0
    %2073 = vmatprep.subr.bf16.mxu0 0
    %2074 = vmatpush2.bf16.msra.mxu0 0
    %2075 = vmatprep.subr.bf16.mxu0 0
    %2076 = vmatpush2.bf16.msra.mxu0 0
    %2077 = vmatprep.subr.bf16.mxu0 0
    %2078 = vmatpush2.bf16.msra.mxu0 0
    %2079 = vmatprep.mubr.bf16.mxu0 0
    %2080 = vmatmul.mubr.bf16.gmra.mxu0 %v2042
    %v2081 = vpop.f32.mrf.mxu0
    %v2082 = vadd.f32 0.0, %v2081
    %v2083 = vpop.f32.mrf.mxu0
    %v2084 = vpop.f32.mrf.mxu0
    %v2085 = vpop.f32.mrf.mxu0
    %2086 = vdwg.mxu0
    %2087 = vrot.lane.b32.xlu0 %v164, 40
    %v2088 = vpop.permute.xlu0 %2087
    %v2090 = vsel %vm264, %v2038, 0
    %v2093 = vsel %vm310, %v2088, 0
    %2095 = vmatprep.subr.bf16.mxu0 0
    %2096 = vmatpush1.bf16.msra.mxu0 0
    %2097 = vmatprep.subr.bf16.mxu0 0
    %2098 = vmatpush1.bf16.msra.mxu0 0
    %2099 = vmatprep.subr.bf16.mxu0 0
    %2100 = vmatpush1.bf16.msra.mxu0 0
    %2101 = vmatprep.subr.bf16.mxu0 0
    %2102 = vmatpush1.bf16.msra.mxu0 0
    %2103 = vmatprep.subr.bf16.mxu0 0
    %2104 = vmatpush1.bf16.msra.mxu0 0
    %2105 = vmatprep.subr.bf16.mxu0 0
    %2106 = vmatpush1.bf16.msra.mxu0 0
    %2107 = vmatprep.subr.bf16.mxu0 0
    %2108 = vmatpush1.bf16.msra.mxu0 0
    %2109 = vmatprep.subr.bf16.mxu0 0
    %2110 = vmatpush1.bf16.msra.mxu0 %v2093
    %2111 = vmatprep.subr.bf16.mxu0 0
    %2112 = vmatpush2.bf16.msra.mxu0 0
    %2113 = vmatprep.subr.bf16.mxu0 0
    %2114 = vmatpush2.bf16.msra.mxu0 0
    %2115 = vmatprep.subr.bf16.mxu0 0
    %2116 = vmatpush2.bf16.msra.mxu0 0
    %2117 = vmatprep.subr.bf16.mxu0 0
    %2118 = vmatpush2.bf16.msra.mxu0 0
    %2119 = vmatprep.subr.bf16.mxu0 0
    %2120 = vmatpush2.bf16.msra.mxu0 0
    %2121 = vmatprep.subr.bf16.mxu0 0
    %2122 = vmatpush2.bf16.msra.mxu0 0
    %2123 = vmatprep.subr.bf16.mxu0 0
    %2124 = vmatpush2.bf16.msra.mxu0 0
    %2125 = vmatprep.subr.bf16.mxu0 0
    %2126 = vmatpush2.bf16.msra.mxu0 0
    %2127 = vmatprep.mubr.bf16.mxu0 0
    %2128 = vmatmul.mubr.bf16.gmra.mxu0 %v2090
    %v2129 = vpop.f32.mrf.mxu0
    %v2130 = vadd.f32 0.0, %v2129
    %v2131 = vpop.f32.mrf.mxu0
    %v2132 = vpop.f32.mrf.mxu0
    %v2133 = vpop.f32.mrf.mxu0
    %2134 = vdwg.mxu0
    %v2135 = vpack.c.bf16 %v2130, %v2082
    %v2136 = vld [vmem:[#allocation11 + $0xc] sm:$0x3]
    %v2138 = vsel %vm168, %v2135, 0
    %v2141 = vsel %vm651, %v2136, 0
    %2143 = vmatprep.subr.bf16.mxu0 0
    %2144 = vmatpush1.bf16.msra.mxu0 0
    %2145 = vmatprep.subr.bf16.mxu0 0
    %2146 = vmatpush1.bf16.msra.mxu0 0
    %2147 = vmatprep.subr.bf16.mxu0 0
    %2148 = vmatpush1.bf16.msra.mxu0 0
    %2149 = vmatprep.subr.bf16.mxu0 0
    %2150 = vmatpush1.bf16.msra.mxu0 0
    %2151 = vmatprep.subr.bf16.mxu0 0
    %2152 = vmatpush1.bf16.msra.mxu0 0
    %2153 = vmatprep.subr.bf16.mxu0 0
    %2154 = vmatpush1.bf16.msra.mxu0 0
    %2155 = vmatprep.subr.bf16.mxu0 0
    %2156 = vmatpush1.bf16.msra.mxu0 0
    %2157 = vmatprep.subr.bf16.mxu0 0
    %2158 = vmatpush1.bf16.msra.mxu0 %v2141
    %2159 = vmatprep.subr.bf16.mxu0 0
    %2160 = vmatpush2.bf16.msra.mxu0 0
    %2161 = vmatprep.subr.bf16.mxu0 0
    %2162 = vmatpush2.bf16.msra.mxu0 0
    %2163 = vmatprep.subr.bf16.mxu0 0
    %2164 = vmatpush2.bf16.msra.mxu0 0
    %2165 = vmatprep.subr.bf16.mxu0 0
    %2166 = vmatpush2.bf16.msra.mxu0 0
    %2167 = vmatprep.subr.bf16.mxu0 0
    %2168 = vmatpush2.bf16.msra.mxu0 0
    %2169 = vmatprep.subr.bf16.mxu0 0
    %2170 = vmatpush2.bf16.msra.mxu0 0
    %2171 = vmatprep.subr.bf16.mxu0 0
    %2172 = vmatpush2.bf16.msra.mxu0 0
    %2173 = vmatprep.subr.bf16.mxu0 0
    %2174 = vmatpush2.bf16.msra.mxu0 0
    %2175 = vmatprep.mubr.bf16.mxu0 0
    %2176 = vmatmul.mubr.bf16.gmra.mxu0 %v2138
    %v2177 = vpop.f32.mrf.mxu0
    %v2178 = vadd.f32 0.0, %v2177
    %v2179 = vpop.f32.mrf.mxu0
    %v2180 = vpop.f32.mrf.mxu0
    %v2181 = vadd.f32 0.0, %v2180
    %v2182 = vpop.f32.mrf.mxu0
    %2183 = vdwg.mxu0
    %v2184 = vadd.f32 %v1897, %v2178
    %v2185 = vadd.f32 %v1898, %v2181
    %2186 = vrot.lane.b32.xlu0 %v161, 100
    %v2187 = vpop.permute.xlu0 %2186
    %2188 = vrot.lane.b32.xlu0 %v163, 68
    %v2189 = vpop.permute.xlu0 %2188
    %v2191 = vsel %vm168, %v2187, 0
    %v2194 = vsel %vm168, %v2189, 0
    %2196 = vmatprep.subr.bf16.mxu0 0
    %2197 = vmatpush1.bf16.xpose.msra.mxu0 0
    %2198 = vmatprep.subr.bf16.mxu0 0
    %2199 = vmatpush1.bf16.xpose.msra.mxu0 0
    %2200 = vmatprep.subr.bf16.mxu0 0
    %2201 = vmatpush1.bf16.xpose.msra.mxu0 0
    %2202 = vmatprep.subr.bf16.mxu0 0
    %2203 = vmatpush1.bf16.xpose.msra.mxu0 0
    %2204 = vmatprep.subr.bf16.mxu0 0
    %2205 = vmatpush1.bf16.xpose.msra.mxu0 0
    %2206 = vmatprep.subr.bf16.mxu0 0
    %2207 = vmatpush1.bf16.xpose.msra.mxu0 0
    %2208 = vmatprep.subr.bf16.mxu0 0
    %2209 = vmatpush1.bf16.xpose.msra.mxu0 0
    %2210 = vmatprep.subr.bf16.mxu0 0
    %2211 = vmatpush1.bf16.xpose.msra.mxu0 %v2194
    %2212 = vmatprep.subr.bf16.mxu0 0
    %2213 = vmatpush2.bf16.xpose.msra.mxu0 0
    %2214 = vmatprep.subr.bf16.mxu0 0
    %2215 = vmatpush2.bf16.xpose.msra.mxu0 0
    %2216 = vmatprep.subr.bf16.mxu0 0
    %2217 = vmatpush2.bf16.xpose.msra.mxu0 0
    %2218 = vmatprep.subr.bf16.mxu0 0
    %2219 = vmatpush2.bf16.xpose.msra.mxu0 0
    %2220 = vmatprep.subr.bf16.mxu0 0
    %2221 = vmatpush2.bf16.xpose.msra.mxu0 0
    %2222 = vmatprep.subr.bf16.mxu0 0
    %2223 = vmatpush2.bf16.xpose.msra.mxu0 0
    %2224 = vmatprep.subr.bf16.mxu0 0
    %2225 = vmatpush2.bf16.xpose.msra.mxu0 0
    %2226 = vmatprep.subr.bf16.mxu0 0
    %2227 = vmatpush2.bf16.xpose.msra.mxu0 0
    %2228 = vmatprep.mubr.bf16.mxu0 0
    %2229 = vmatmul.mubr.bf16.gmra.mxu0 %v2191
    %v2230 = vpop.f32.mrf.mxu0
    %v2231 = vadd.f32 0.0, %v2230
    %v2232 = vpop.f32.mrf.mxu0
    %v2233 = vpop.f32.mrf.mxu0
    %v2234 = vpop.f32.mrf.mxu0
    %2235 = vdwg.mxu0
    %2236 = vrot.lane.b32.xlu0 %v162, 100
    %v2237 = vpop.permute.xlu0 %2236
    %2238 = vrot.lane.b32.xlu0 %v164, 68
    %v2239 = vpop.permute.xlu0 %2238
    %v2241 = vsel %vm168, %v2237, 0
    %v2244 = vsel %vm168, %v2239, 0
    %2246 = vmatprep.subr.bf16.mxu0 0
    %2247 = vmatpush1.bf16.xpose.msra.mxu0 0
    %2248 = vmatprep.subr.bf16.mxu0 0
    %2249 = vmatpush1.bf16.xpose.msra.mxu0 0
    %2250 = vmatprep.subr.bf16.mxu0 0
    %2251 = vmatpush1.bf16.xpose.msra.mxu0 0
    %2252 = vmatprep.subr.bf16.mxu0 0
    %2253 = vmatpush1.bf16.xpose.msra.mxu0 0
    %2254 = vmatprep.subr.bf16.mxu0 0
    %2255 = vmatpush1.bf16.xpose.msra.mxu0 0
    %2256 = vmatprep.subr.bf16.mxu0 0
    %2257 = vmatpush1.bf16.xpose.msra.mxu0 0
    %2258 = vmatprep.subr.bf16.mxu0 0
    %2259 = vmatpush1.bf16.xpose.msra.mxu0 0
    %2260 = vmatprep.subr.bf16.mxu0 0
    %2261 = vmatpush1.bf16.xpose.msra.mxu0 %v2244
    %2262 = vmatprep.subr.bf16.mxu0 0
    %2263 = vmatpush2.bf16.xpose.msra.mxu0 0
    %2264 = vmatprep.subr.bf16.mxu0 0
    %2265 = vmatpush2.bf16.xpose.msra.mxu0 0
    %2266 = vmatprep.subr.bf16.mxu0 0
    %2267 = vmatpush2.bf16.xpose.msra.mxu0 0
    %2268 = vmatprep.subr.bf16.mxu0 0
    %2269 = vmatpush2.bf16.xpose.msra.mxu0 0
    %2270 = vmatprep.subr.bf16.mxu0 0
    %2271 = vmatpush2.bf16.xpose.msra.mxu0 0
    %2272 = vmatprep.subr.bf16.mxu0 0
    %2273 = vmatpush2.bf16.xpose.msra.mxu0 0
    %2274 = vmatprep.subr.bf16.mxu0 0
    %2275 = vmatpush2.bf16.xpose.msra.mxu0 0
    %2276 = vmatprep.subr.bf16.mxu0 0
    %2277 = vmatpush2.bf16.xpose.msra.mxu0 0
    %2278 = vmatprep.mubr.bf16.mxu0 0
    %2279 = vmatmul.mubr.bf16.gmra.mxu0 %v2241
    %v2280 = vpop.f32.mrf.mxu0
    %v2281 = vadd.f32 0.0, %v2280
    %v2282 = vpop.f32.mrf.mxu0
    %v2283 = vpop.f32.mrf.mxu0
    %v2284 = vpop.f32.mrf.mxu0
    %2285 = vdwg.mxu0
    %v2286 = vsel %vm264, %v2231, -inf
    %2287 = vmax.xlane.f32.xlu0 %v2286
    %v2288 = vpop.xlane.xlu0 %2287
    %v2289 = vsel %vm264, %v2281, -inf
    %2290 = vmax.xlane.f32.xlu0 %v2289
    %v2291 = vpop.xlane.xlu0 %2290
    %v2292 = vsub.f32 %v2231, %v2288
    %v2293 = vsub.f32 %v2281, %v2291
    %v2294 = vmul.f32 %v2292, 1.442695
    %v2295 = vpow.pop %v2294
    %v2296 = vmul.f32 %v2293, 1.442695
    %v2297 = vpow.pop %v2296
    %v2298 = vsel %vm264, %v2295, 0.0
    %2299 = vadd.xlane.f32.xlu0 %v2298
    %v2300 = vpop.xlane.xlu0 %2299
    %v2301 = vsel %vm264, %v2297, 0.0
    %2302 = vadd.xlane.f32.xlu0 %v2301
    %v2303 = vpop.xlane.xlu0 %2302
    %v2304 = vrcp.pop %v2300
    %v2305 = vmul.f32 %v2295, %v2304
    %v2306 = vrcp.pop %v2303
    %v2307 = vmul.f32 %v2297, %v2306
    %vm2308 = vcmp.ge.f32.partialorder %v2231, 0.0
    %vm2309 = vcmp.ge.f32.partialorder %v2281, 0.0
    %v2310 = vmul.f32 %v2231, 0.01
    %v2311 = vmul.f32 %v2281, 0.01
    %v2312 = vsel %vm2308, %v2231, %v2310
    %v2313 = vsel %vm2309, %v2281, %v2311
    %s2314 = sld [smem:[#allocation8 + $0x7]]
    %v2315 = vstv %s2314
    %v2316 = vmul.f32 %v2315, %v2305
    %v2317 = vmul.f32 %v2315, %v2307
    %s2318 = sld [smem:[#allocation9 + $0x7]]
    %v2319 = vstv %s2318
    %v2320 = vmul.f32 %v2319, %v2312
    %v2321 = vmul.f32 %v2319, %v2313
    %v2322 = vadd.f32 %v2316, %v2320
    %v2323 = vadd.f32 %v2317, %v2321
    %v2324 = vpack.c.bf16 %v2322, %v2322
    %v2325 = vpack.c.bf16 %v2323, %v2323
    %2326 = vrot.lane.b32.xlu0 %v163, 36
    %v2327 = vpop.permute.xlu0 %2326
    %v2329 = vsel %vm264, %v2324, 0
    %v2332 = vsel %vm310, %v2327, 0
    %2334 = vmatprep.subr.bf16.mxu0 0
    %2335 = vmatpush1.bf16.msra.mxu0 0
    %2336 = vmatprep.subr.bf16.mxu0 0
    %2337 = vmatpush1.bf16.msra.mxu0 0
    %2338 = vmatprep.subr.bf16.mxu0 0
    %2339 = vmatpush1.bf16.msra.mxu0 0
    %2340 = vmatprep.subr.bf16.mxu0 0
    %2341 = vmatpush1.bf16.msra.mxu0 0
    %2342 = vmatprep.subr.bf16.mxu0 0
    %2343 = vmatpush1.bf16.msra.mxu0 0
    %2344 = vmatprep.subr.bf16.mxu0 0
    %2345 = vmatpush1.bf16.msra.mxu0 0
    %2346 = vmatprep.subr.bf16.mxu0 0
    %2347 = vmatpush1.bf16.msra.mxu0 0
    %2348 = vmatprep.subr.bf16.mxu0 0
    %2349 = vmatpush1.bf16.msra.mxu0 %v2332
    %2350 = vmatprep.subr.bf16.mxu0 0
    %2351 = vmatpush2.bf16.msra.mxu0 0
    %2352 = vmatprep.subr.bf16.mxu0 0
    %2353 = vmatpush2.bf16.msra.mxu0 0
    %2354 = vmatprep.subr.bf16.mxu0 0
    %2355 = vmatpush2.bf16.msra.mxu0 0
    %2356 = vmatprep.subr.bf16.mxu0 0
    %2357 = vmatpush2.bf16.msra.mxu0 0
    %2358 = vmatprep.subr.bf16.mxu0 0
    %2359 = vmatpush2.bf16.msra.mxu0 0
    %2360 = vmatprep.subr.bf16.mxu0 0
    %2361 = vmatpush2.bf16.msra.mxu0 0
    %2362 = vmatprep.subr.bf16.mxu0 0
    %2363 = vmatpush2.bf16.msra.mxu0 0
    %2364 = vmatprep.subr.bf16.mxu0 0
    %2365 = vmatpush2.bf16.msra.mxu0 0
    %2366 = vmatprep.mubr.bf16.mxu0 0
    %2367 = vmatmul.mubr.bf16.gmra.mxu0 %v2329
    %v2368 = vpop.f32.mrf.mxu0
    %v2369 = vadd.f32 0.0, %v2368
    %v2370 = vpop.f32.mrf.mxu0
    %v2371 = vpop.f32.mrf.mxu0
    %v2372 = vpop.f32.mrf.mxu0
    %2373 = vdwg.mxu0
    %2374 = vrot.lane.b32.xlu0 %v164, 36
    %v2375 = vpop.permute.xlu0 %2374
    %v2377 = vsel %vm264, %v2325, 0
    %v2380 = vsel %vm310, %v2375, 0
    %2382 = vmatprep.subr.bf16.mxu0 0
    %2383 = vmatpush1.bf16.msra.mxu0 0
    %2384 = vmatprep.subr.bf16.mxu0 0
    %2385 = vmatpush1.bf16.msra.mxu0 0
    %2386 = vmatprep.subr.bf16.mxu0 0
    %2387 = vmatpush1.bf16.msra.mxu0 0
    %2388 = vmatprep.subr.bf16.mxu0 0
    %2389 = vmatpush1.bf16.msra.mxu0 0
    %2390 = vmatprep.subr.bf16.mxu0 0
    %2391 = vmatpush1.bf16.msra.mxu0 0
    %2392 = vmatprep.subr.bf16.mxu0 0
    %2393 = vmatpush1.bf16.msra.mxu0 0
    %2394 = vmatprep.subr.bf16.mxu0 0
    %2395 = vmatpush1.bf16.msra.mxu0 0
    %2396 = vmatprep.subr.bf16.mxu0 0
    %2397 = vmatpush1.bf16.msra.mxu0 %v2380
    %2398 = vmatprep.subr.bf16.mxu0 0
    %2399 = vmatpush2.bf16.msra.mxu0 0
    %2400 = vmatprep.subr.bf16.mxu0 0
    %2401 = vmatpush2.bf16.msra.mxu0 0
    %2402 = vmatprep.subr.bf16.mxu0 0
    %2403 = vmatpush2.bf16.msra.mxu0 0
    %2404 = vmatprep.subr.bf16.mxu0 0
    %2405 = vmatpush2.bf16.msra.mxu0 0
    %2406 = vmatprep.subr.bf16.mxu0 0
    %2407 = vmatpush2.bf16.msra.mxu0 0
    %2408 = vmatprep.subr.bf16.mxu0 0
    %2409 = vmatpush2.bf16.msra.mxu0 0
    %2410 = vmatprep.subr.bf16.mxu0 0
    %2411 = vmatpush2.bf16.msra.mxu0 0
    %2412 = vmatprep.subr.bf16.mxu0 0
    %2413 = vmatpush2.bf16.msra.mxu0 0
    %2414 = vmatprep.mubr.bf16.mxu0 0
    %2415 = vmatmul.mubr.bf16.gmra.mxu0 %v2377
    %v2416 = vpop.f32.mrf.mxu0
    %v2417 = vadd.f32 0.0, %v2416
    %v2418 = vpop.f32.mrf.mxu0
    %v2419 = vpop.f32.mrf.mxu0
    %v2420 = vpop.f32.mrf.mxu0
    %2421 = vdwg.mxu0
    %v2422 = vpack.c.bf16 %v2417, %v2369
    %v2423 = vld [vmem:[#allocation11 + $0xc] sm:$0xc]
    %v2425 = vunpack.c.l.b16 %v2423
    %v2426 = vpack.c.b16 %v2425, %v2425
    %v2427 = vrot.slane %v2426, 2
    %v2429 = vsel %vm168, %v2422, 0
    %v2432 = vsel %vm651, %v2427, 0
    %2434 = vmatprep.subr.bf16.mxu0 0
    %2435 = vmatpush1.bf16.msra.mxu0 0
    %2436 = vmatprep.subr.bf16.mxu0 0
    %2437 = vmatpush1.bf16.msra.mxu0 0
    %2438 = vmatprep.subr.bf16.mxu0 0
    %2439 = vmatpush1.bf16.msra.mxu0 0
    %2440 = vmatprep.subr.bf16.mxu0 0
    %2441 = vmatpush1.bf16.msra.mxu0 0
    %2442 = vmatprep.subr.bf16.mxu0 0
    %2443 = vmatpush1.bf16.msra.mxu0 0
    %2444 = vmatprep.subr.bf16.mxu0 0
    %2445 = vmatpush1.bf16.msra.mxu0 0
    %2446 = vmatprep.subr.bf16.mxu0 0
    %2447 = vmatpush1.bf16.msra.mxu0 0
    %2448 = vmatprep.subr.bf16.mxu0 0
    %2449 = vmatpush1.bf16.msra.mxu0 %v2432
    %2450 = vmatprep.subr.bf16.mxu0 0
    %2451 = vmatpush2.bf16.msra.mxu0 0
    %2452 = vmatprep.subr.bf16.mxu0 0
    %2453 = vmatpush2.bf16.msra.mxu0 0
    %2454 = vmatprep.subr.bf16.mxu0 0
    %2455 = vmatpush2.bf16.msra.mxu0 0
    %2456 = vmatprep.subr.bf16.mxu0 0
    %2457 = vmatpush2.bf16.msra.mxu0 0
    %2458 = vmatprep.subr.bf16.mxu0 0
    %2459 = vmatpush2.bf16.msra.mxu0 0
    %2460 = vmatprep.subr.bf16.mxu0 0
    %2461 = vmatpush2.bf16.msra.mxu0 0
    %2462 = vmatprep.subr.bf16.mxu0 0
    %2463 = vmatpush2.bf16.msra.mxu0 0
    %2464 = vmatprep.subr.bf16.mxu0 0
    %2465 = vmatpush2.bf16.msra.mxu0 0
    %2466 = vmatprep.mubr.bf16.mxu0 0
    %2467 = vmatmul.mubr.bf16.gmra.mxu0 %v2429
    %v2468 = vpop.f32.mrf.mxu0
    %v2469 = vadd.f32 0.0, %v2468
    %v2470 = vpop.f32.mrf.mxu0
    %v2471 = vpop.f32.mrf.mxu0
    %v2472 = vadd.f32 0.0, %v2471
    %v2473 = vpop.f32.mrf.mxu0
    %2474 = vdwg.mxu0
    %v2475 = vadd.f32 %v2184, %v2469
    %v2476 = vadd.f32 %v2185, %v2472
    %v2477 = vld [vmem:[%s5] sm:$0x1]
    %v2479 = vlaneseq
    %v2480 = vshrl.u32 %v2479, 7
    %v2481 = vsub.s32 0, %v2480
    %v2482 = vrot.slane %v2477, %v2481
    %v2484 = vadd.f32 %v2475, %v2482
    %v2485 = vadd.f32 %v2476, %v2482
    %2486 = vst.msk [vmem:[#allocation12] sm:$0xff] %vm114, %v2484
    %2487 = vst.msk [vmem:[#allocation12 + $0x8] sm:$0xff] %vm114, %v2485
    // Predicated region
    $region46: #{tpu_custom_call.1} parent=1 // pred_check
      _
    $region47: #{tpu_custom_call.1} parent=1 // pred_check_branch
      %2489 = sbr.rel (0) target = $region49
    $region48: #{tpu_custom_call.1} parent=1 // pred_region
      %s2491 = ssub.s32 256, 256
      %2492 = vsyncadd [#allocation4], %s2491
      %s2493 = sshll.u32 [#allocation12], 4
      %s2494 = int_to_ptr.vmem [resolvable:$true] %s2493
      %2499 = dma.vmem_to_hbm [thread:$0]  %s2494, 256, %s6, [#allocation4], 128, 128, 8
    $region49: #{tpu_custom_call.1} parent=1 // pred_fallthru
      _
    // Predicated region
    $region50: #{tpu_custom_call.1} parent=1 // pred_check
      _
    $region51: #{tpu_custom_call.1} parent=1 // pred_check_branch
      %2501 = sbr.rel (0) target = $region53
    $region52: #{tpu_custom_call.1} parent=1 // pred_region
      %2502 = dma.done [#allocation4], 256
    $region53: #{tpu_custom_call.1} parent=1 // pred_fallthru
      _
    %2503 = vsyncpa [#allocation3], 1
    %2504 = vsyncpa [#allocation7], 1
    %2505 = vsyncpa [#allocation4], 1
    %2506 = vsyncpa [#allocation5], 1
    %2507 = vsyncpa [#allocation10], 1

</llo_original>
